<compile_context>
chip_gen: v6e
topology: v6e:2x2x1
jax: 0.10.0
libtpu: 0.0.40
codegen_flags: <defaults>
</compile_context>

<pallas_src>
import math

import numpy as np

import jax
import jax.numpy as jnp
from jax.experimental import pallas as pl
from jax.experimental.pallas import tpu as pltpu


_VMEM_LIMIT = 48 * 1024 * 1024   # explicit scoped-VMEM budget (safe on v5e/v6e/v7x)


# ----------------------------------------------------------------------------
# Generic matmul + bias (KernelPredictor heads).  Small M (B or B*9), huge N.
# The N grid tile is large (DMA amortization) while the kernel processes it in
# small lane chunks sliced from the VMEM ref (small vreg footprint).
# ----------------------------------------------------------------------------
def _make_matmul_bias_kernel(nc):
    def kernel(a_ref, b_ref, bias_ref, o_ref):
        a = a_ref[...]                                    # (M, K) bf16, tiny
        tn = o_ref.shape[1]
        for c0 in range(0, tn, nc):
            acc = jnp.dot(a, b_ref[:, c0:c0 + nc],
                          preferred_element_type=jnp.float32)
            acc = acc + bias_ref[:, c0:c0 + nc]
            o_ref[:, c0:c0 + nc] = acc.astype(o_ref.dtype)
    return kernel


def matmul_bias(a, b, bias, *, tile_n=None, out_dtype=jnp.bfloat16):
    """(M, K) @ (K, N) + bias[N]; bf16 operands, f32 accumulation, `out_dtype` output."""
    M, K = a.shape
    _, N = b.shape
    tn = N if tile_n is None else min(tile_n, N)
    assert N % tn == 0, (N, tn)
    nc = math.gcd(tn, 512)
    bias2 = bias.reshape(1, N).astype(jnp.float32)
    return pl.pallas_call(
        _make_matmul_bias_kernel(nc),
        out_shape=jax.ShapeDtypeStruct((M, N), out_dtype),
        grid=(N // tn,),
        in_specs=[
            pl.BlockSpec((M, K), lambda j: (0, 0)),
            pl.BlockSpec((K, tn), lambda j: (0, j)),
            pl.BlockSpec((1, tn), lambda j: (0, j)),
        ],
        out_specs=pl.BlockSpec((M, tn), lambda j: (0, j)),
        compiler_params=pltpu.CompilerParams(dimension_semantics=("parallel",)),
    )(a.astype(jnp.bfloat16), b.astype(jnp.bfloat16), bias2)


# ----------------------------------------------------------------------------
# Row-tile sizing: keep a (TH*W, lanes) f32 accumulator around <= 32 vregs.
# ----------------------------------------------------------------------------
def _pick_rows(H, W, lanes_f32):
    per_row = W * ((lanes_f32 + 127) // 128)
    th = H
    while th > 1 and th % 2 == 0 and th * per_row > 256:
        th //= 2
    return th


# ----------------------------------------------------------------------------
# AdaConv2D: instance-norm -> grouped 3x3 conv (predicted) -> grouped 1x1 conv
# (predicted) + predicted bias.  Grid = (B, SG): one "super group" of GP lane-packed
# groups (L = GP*Cg lanes) per step; block-diagonal packed (L, L) weights keep every
# matmul lane-dense; the spatial dim is processed in TH-row chunks.
# ----------------------------------------------------------------------------
def _make_adaconv_kernel(H, W, L, TH):
    Hp, Wp = H + 2, W + 2
    inv_hw = 1.0 / float(H * W)

    def kernel(x_ref, dw_ref, pw_ref, b_ref, o_ref, pad_ref):
        # zero only the 1-pixel halo of the bf16 padded scratch (interior overwritten below)
        pad_ref[0:1, :, :] = jnp.zeros((1, Wp, L), pad_ref.dtype)
        pad_ref[Hp - 1:Hp, :, :] = jnp.zeros((1, Wp, L), pad_ref.dtype)
        pad_ref[:, 0:1, :] = jnp.zeros((Hp, 1, L), pad_ref.dtype)
        pad_ref[:, Wp - 1:Wp, :] = jnp.zeros((Hp, 1, L), pad_ref.dtype)

        # ---- instance-norm statistics (per channel, biased variance, eps=1e-5), f32 ----
        s1 = jnp.zeros((1, L), jnp.float32)
        s2 = jnp.zeros((1, L), jnp.float32)
        for r0 in range(0, H, TH):
            xc = x_ref[0, r0:r0 + TH].reshape(TH * W, L).astype(jnp.float32)
            s1 = s1 + jnp.sum(xc, axis=0, keepdims=True)
            s2 = s2 + jnp.sum(xc * xc, axis=0, keepdims=True)
        mean = s1 * inv_hw
        var = jnp.maximum(s2 * inv_hw - mean * mean, 0.0)
        rstd = jax.lax.rsqrt(var + 1e-5)

        # ---- normalize into the bf16 padded scratch ----
        for r0 in range(0, H, TH):
            xc = x_ref[0, r0:r0 + TH].reshape(TH * W, L).astype(jnp.float32)
            xn = (xc - mean) * rstd
            pad_ref[1 + r0:1 + r0 + TH, 1:W + 1, :] = \
                xn.reshape(TH, W, L).astype(pad_ref.dtype)

        # ---- grouped 3x3 conv (block-diag packed) -> grouped 1x1 conv + bias ----
        bias = b_ref[...].astype(jnp.float32)                 # (1, L)
        for r0 in range(0, H, TH):
            acc = jnp.zeros((TH * W, L), jnp.float32)
            for ky in range(3):
                for kx in range(3):
                    win = pad_ref[r0 + ky:r0 + ky + TH, kx:kx + W, :]
                    win = win.reshape(TH * W, L)               # bf16, no per-tap cast
                    acc = acc + jnp.dot(win, dw_ref[0, ky * 3 + kx],
                                        preferred_element_type=jnp.float32)
            out = jnp.dot(acc.astype(jnp.bfloat16), pw_ref[0],
                          preferred_element_type=jnp.float32) + bias
            o_ref[0, r0:r0 + TH] = out.reshape(TH, W, L).astype(o_ref.dtype)

    return kernel


def ada_conv(x, dwp, pwp, bias, L):
    """x: (B,H,W,C) bf16; dwp: (B,9,SG*L,L) bf16 block-diag [in,out]; pwp: (B,SG*L,L) bf16;
    bias: (B,C) f32.  Returns (B,H,W,C) bf16."""
    B, H, W, C = x.shape
    SG = C // L
    TH = _pick_rows(H, W, L)
    return pl.pallas_call(
        _make_adaconv_kernel(H, W, L, TH),
        out_shape=jax.ShapeDtypeStruct((B, H, W, C), jnp.bfloat16),
        grid=(B, SG),
        in_specs=[
            pl.BlockSpec((1, H, W, L), lambda b, s: (b, 0, 0, s)),
            pl.BlockSpec((1, 9, L, L), lambda b, s: (b, 0, s, 0)),
            pl.BlockSpec((1, L, L), lambda b, s: (b, s, 0)),
            pl.BlockSpec((1, L), lambda b, s: (b, s)),
        ],
        out_specs=pl.BlockSpec((1, H, W, L), lambda b, s: (b, 0, 0, s)),
        scratch_shapes=[pltpu.VMEM((H + 2, W + 2, L), jnp.bfloat16)],
        compiler_params=pltpu.CompilerParams(
            dimension_semantics=("parallel", "parallel"),
            vmem_limit_bytes=_VMEM_LIMIT),
    )(x.astype(jnp.bfloat16), dwp, pwp, bias)


# ----------------------------------------------------------------------------
# Standard Conv2d(k=3, pad=1) + activation (decoder_layers).
# Grid = (B, H // TH): un-padded bf16 input stays resident per sample; zero padding is
# done once per sample into a bf16 VMEM halo scratch; windows are sliced per 3x3 tap,
# K chunked at 256, Cout chunked at 256.
# ----------------------------------------------------------------------------
def _make_conv3x3_kernel(H, W, Cin, Cout, TH, KC, NC, act):
    def kernel(x_ref, w_ref, b_ref, o_ref, pad_ref):
        tt = pl.program_id(1)

        # Fill the zero-padded bf16 scratch once per sample (tt iterates innermost and is
        # marked "arbitrary", so it runs 0..T-1 sequentially on one core for each sample).
        @pl.when(tt == 0)
        def _():
            pad_ref[0:1, :, :] = jnp.zeros((1, W + 2, Cin), pad_ref.dtype)
            pad_ref[H + 1:H + 2, :, :] = jnp.zeros((1, W + 2, Cin), pad_ref.dtype)
            pad_ref[:, 0:1, :] = jnp.zeros((H + 2, 1, Cin), pad_ref.dtype)
            pad_ref[:, W + 1:W + 2, :] = jnp.zeros((H + 2, 1, Cin), pad_ref.dtype)
            for r0 in range(0, H, TH):
                pad_ref[1 + r0:1 + r0 + TH, 1:W + 1, :] = x_ref[0, r0:r0 + TH]

        r0 = pl.multiple_of(tt * TH, TH)
        bias = b_ref[...]                                       # (1, Cout) f32
        for n0 in range(0, Cout, NC):
            acc = jnp.zeros((TH * W, NC), jnp.float32)
            for ky in range(3):
                for kx in range(3):
                    for c0 in range(0, Cin, KC):
                        win = pad_ref[pl.ds(r0 + ky, TH), kx:kx + W, c0:c0 + KC]
                        win = win.reshape(TH * W, KC)           # bf16
                        acc = acc + jnp.dot(
                            win, w_ref[ky, kx, c0:c0 + KC, n0:n0 + NC],
                            preferred_element_type=jnp.float32)
            acc = acc + bias[:, n0:n0 + NC]
            if act == "relu":
                acc = jnp.maximum(acc, 0.0)
            elif act == "sigmoid":
                acc = jax.nn.sigmoid(acc)
            o_ref[0, :, :, n0:n0 + NC] = acc.reshape(TH, W, NC).astype(o_ref.dtype)

    return kernel


def conv3x3(x, w, b, act, out_dtype=jnp.bfloat16):
    """x: (B,H,W,Cin) bf16 (un-padded); w: (3,3,Cin,Cout) bf16; b: (1,Cout) f32.
    Zero pad=1, stride 1."""
    B, H, W, Cin = x.shape
    Cout = w.shape[-1]
    KC = 256 if Cin % 256 == 0 else (128 if Cin % 128 == 0 else Cin)
    NC = 256 if Cout % 256 == 0 else Cout
    TH = _pick_rows(H, W, max(NC, KC // 2))
    T = H // TH
    return pl.pallas_call(
        _make_conv3x3_kernel(H, W, Cin, Cout, TH, KC, NC, act),
        out_shape=jax.ShapeDtypeStruct((B, H, W, Cout), out_dtype),
        grid=(B, T),
        in_specs=[
            pl.BlockSpec((1, H, W, Cin), lambda bb, tt: (bb, 0, 0, 0)),
            pl.BlockSpec((3, 3, Cin, Cout), lambda bb, tt: (0, 0, 0, 0)),
            pl.BlockSpec((1, Cout), lambda bb, tt: (0, 0)),
        ],
        out_specs=pl.BlockSpec((1, TH, W, Cout), lambda bb, tt: (bb, tt, 0, 0)),
        scratch_shapes=[pltpu.VMEM((H + 2, W + 2, Cin), jnp.bfloat16)],
        compiler_params=pltpu.CompilerParams(
            dimension_semantics=("parallel", "arbitrary"),
            vmem_limit_bytes=_VMEM_LIMIT),
    )(x.astype(jnp.bfloat16), w, b)


# ----------------------------------------------------------------------------
# Glue: KernelPredictor (im2col + Pallas matmuls), block-diag group packing, upsample
# ----------------------------------------------------------------------------
def kernel_predictor(blk, w_style):
    """w_style: (B, style_dim, 3, 3) f32.  Returns dwg (B,9,G,Cg,Cg) bf16 [in,out],
    pwg (B,G,Cg,Cg) bf16 [in,out], bias (B,Cin) f32 (natural channel order)."""
    B, S, _, _ = w_style.shape
    Cin, G = blk["Cin"], blk["G"]
    Cg = Cin // G
    O_sp = Cin * Cg

    # spatial head: Conv2d(S, Cin*Cg, k=3, pad=1) on the 3x3 style map -> im2col + matmul.
    wp = jnp.pad(w_style, ((0, 0), (0, 0), (1, 1), (1, 1)))
    cols = [wp[:, :, ky:ky + 3, kx:kx + 3] for ky in range(3) for kx in range(3)]
    patches = jnp.stack(cols, axis=2)                       # (B, S, 9, 3, 3)
    patches = patches.transpose(0, 3, 4, 1, 2).reshape(B * 9, S * 9)
    sp = matmul_bias(patches, blk["W_spatial"], blk["b_spatial"],
                     tile_n=8192, out_dtype=jnp.bfloat16)   # (B*9, O_sp)
    dwg = sp.reshape(B, 9, G, Cg, Cg)                       # columns pre-permuted at init

    # pointwise + bias heads share the pooled style: one fused matmul.
    wpool = jnp.mean(w_style, axis=(2, 3))                  # (B, S)
    pb = matmul_bias(wpool, blk["W_pwbias"], blk["b_pwbias"],
                     out_dtype=jnp.bfloat16)                # (B, O_sp + Cin)
    pwg = pb[:, :O_sp].reshape(B, G, Cg, Cg)
    bias = pb[:, O_sp:].astype(jnp.float32)                 # (B, Cin)
    return dwg, pwg, bias


def _pack_block_diag(dwg, pwg, GP):
    """Pack GP groups per lane-dense super group into block-diagonal (L, L) kernels."""
    B, T, G, Cg, _ = dwg.shape
    SG = G // GP
    L = GP * Cg
    if GP == 1:
        return dwg.reshape(B, T, G * Cg, Cg), pwg.reshape(B, G * Cg, Cg)
    eye = jnp.eye(GP, dtype=dwg.dtype)
    d = jnp.einsum("btsgio,gh->btsgiho", dwg.reshape(B, T, SG, GP, Cg, Cg), eye)
    p = jnp.einsum("bsgio,gh->bsgiho", pwg.reshape(B, SG, GP, Cg, Cg), eye)
    return d.reshape(B, T, SG * L, L), p.reshape(B, SG * L, L)


def upsample_bilinear_x2(x):
    """F.interpolate(scale_factor=2, mode='bilinear', align_corners=False) on NHWC bf16.
    Constant 0.25/0.75 shift/add (no gather)."""
    B, H, W, C = x.shape
    xp = jnp.concatenate([x[:, :1], x[:, :-1]], axis=1)
    xn = jnp.concatenate([x[:, 1:], x[:, -1:]], axis=1)
    even = 0.25 * xp + 0.75 * x
    odd = 0.75 * x + 0.25 * xn
    xr = jnp.stack([even, odd], axis=2).reshape(B, 2 * H, W, C)
    xpw = jnp.concatenate([xr[:, :, :1], xr[:, :, :-1]], axis=2)
    xnw = jnp.concatenate([xr[:, :, 1:], xr[:, :, -1:]], axis=2)
    evenw = 0.25 * xpw + 0.75 * xr
    oddw = 0.75 * xr + 0.25 * xnw
    return jnp.stack([evenw, oddw], axis=3).reshape(B, 2 * H, 2 * W, C)


# ----------------------------------------------------------------------------
# Decoder (parameters + forward)
# ----------------------------------------------------------------------------
def _init_w(key, shape, fan_in):
    return jax.random.normal(key, shape, jnp.float32) * (1.0 / math.sqrt(fan_in))


def _predictor_perm(Cin, G):
    """Output-channel permutation: new column (g, in_per, out_per) <- PyTorch channel
    (out_ch=g*Cg+out_per)*Cg + in_per, so the predictor matmul output reshapes straight
    into the [group, in, out] layout ada_conv consumes (no runtime transposes)."""
    Cg = Cin // G
    g = np.arange(G)[:, None, None]
    i = np.arange(Cg)[None, :, None]
    o = np.arange(Cg)[None, None, :]
    return ((g * Cg + o) * Cg + i).reshape(-1)


def init_decoder(key, style_dim=8, style_kernel=3, groups=4):
    assert style_kernel == 3, "this implementation fixes style_kernel=3"
    input_channels = [512, 256, 128, 64]
    output_channels = [256, 128, 64, 3]
    n_convs = [1, 2, 2, 4]
    blocks = []
    for i, Cin in enumerate(input_channels):
        Cout = output_channels[i]
        Nc = n_convs[i]
        final = (i == len(input_channels) - 1)
        G = groups
        Cg = Cin // G
        O_sp = Cin * Cg
        GP = max(1, min(G, 128 // Cg))              # groups packed per lane-dense super group
        while G % GP:
            GP -= 1
        perm = _predictor_perm(Cin, G)

        key, k_sp, k_pw, k_b = jax.random.split(key, 4)
        # KernelPredictor weights generated in PyTorch layout, then pre-permuted /
        # pre-transposed once at init (stored bf16; f32 accumulation in the kernels).
        w_sp = _init_w(k_sp, (O_sp, style_dim, 3, 3), style_dim * 9)
        w_sp = w_sp[perm].reshape(O_sp, style_dim * 9).T            # (S*9, O_sp)
        b_sp = jnp.zeros((O_sp,), jnp.float32)[perm]
        w_pw = _init_w(k_pw, (O_sp, style_dim), style_dim)[perm].T  # (S, O_sp)
        b_pw = jnp.zeros((O_sp,), jnp.float32)[perm]
        w_bias = _init_w(k_b, (Cin, style_dim), style_dim).T        # (S, Cin)
        b_bias = jnp.zeros((Cin,), jnp.float32)

        blk = {
            "Cin": Cin, "Cout": Cout, "G": G, "GP": GP, "final": final,
            "W_spatial": w_sp.astype(jnp.bfloat16),
            "b_spatial": b_sp,
            "W_pwbias": jnp.concatenate([w_pw, w_bias], axis=1).astype(jnp.bfloat16),
            "b_pwbias": jnp.concatenate([b_pw, b_bias], axis=0),
            "convs": [],
        }
        for j in range(Nc):
            outc = Cout if j == Nc - 1 else Cin
            key, kc = jax.random.split(key)
            wj = _init_w(kc, (3, 3, Cin, outc), Cin * 9).astype(jnp.bfloat16)
            bj = jnp.zeros((1, outc), jnp.float32)
            blk["convs"].append((wj, bj))
        blocks.append(blk)
    return {"style_dim": style_dim, "blocks": blocks}


def decoder_block_forward(blk, x, w_style):
    dwg, pwg, bias = kernel_predictor(blk, w_style)
    dwp, pwp = _pack_block_diag(dwg, pwg, blk["GP"])
    L = blk["GP"] * (blk["Cin"] // blk["G"])
    x = ada_conv(x, dwp, pwp, bias, L)
    n = len(blk["convs"])
    for j, (wj, bj) in enumerate(blk["convs"]):
        last = (j == n - 1)
        act = "sigmoid" if (blk["final"] and last) else "relu"
        out_dtype = jnp.float32 if (blk["final"] and last) else jnp.bfloat16
        x = conv3x3(x, wj, bj, act, out_dtype=out_dtype)
    if not blk["final"]:
        x = upsample_bilinear_x2(x)
    return x


def decoder_forward(params, x_nchw, w_style):
    x = jnp.transpose(x_nchw, (0, 2, 3, 1)).astype(jnp.bfloat16)    # NCHW -> NHWC bf16
    for blk in params["blocks"]:
        x = decoder_block_forward(blk, x, w_style)
    # final layer is f32 with only 3 channels -> this transpose is tiny
    return jnp.transpose(x, (0, 3, 1, 2))                           # back to NCHW


if __name__ == "__main__":
    key = jax.random.PRNGKey(0)
    k_params, k_x, k_w = jax.random.split(key, 3)

    style_dim = 8
    params = init_decoder(k_params, style_dim=style_dim, style_kernel=3, groups=4)

    B, H0, W0 = 2, 4, 4
    x = jax.random.normal(k_x, (B, 512, H0, W0), jnp.float32)       # NCHW, 512 = block-1 Cin
    w = jax.random.normal(k_w, (B, style_dim, 3, 3), jnp.float32)   # style descriptor

    out = jax.block_until_ready(decoder_forward(params, x, w))

    assert out.shape == (B, 3, H0 * 8, W0 * 8), out.shape           # 3 upsampling blocks -> 32x32
    assert bool(jnp.all(jnp.isfinite(out)))
    assert bool(jnp.all((out >= 0.0) & (out <= 1.0)))               # final sigmoid
    print("KERNEL_OK")
</pallas_src>

<mosaic_0001>
module attributes {stable_mosaic.version = 11 : i64} {
  func.func @kernel(%arg0: i32, %arg1: memref<18x72xbf16, #tpu.memory_space<vmem>>, %arg2: memref<72x8192xbf16, #tpu.memory_space<vmem>>, %arg3: memref<1x8192xf32, #tpu.memory_space<vmem>>, %arg4: memref<18x8192xbf16, #tpu.memory_space<vmem>>) attributes {dimension_semantics = [#tpu.dimension_semantics<parallel>], iteration_bounds = array<i64: 8>, scalar_prefetch = 0 : i64, scratch_operands = 0 : i64, tpu.core_type = #tpu.core_type<tc>, window_params = [{pipeline_mode = #tpu.pipeline_mode<synchronous>, transform_indices = @transform_0, window_bounds = array<i64: 18, 72>}, {transform_indices = @transform_1, window_bounds = array<i64: 72, 8192>}, {transform_indices = @transform_2, window_bounds = array<i64: 1, 8192>}, {transform_indices = @transform_3, window_bounds = array<i64: 18, 8192>}]} {
    %c0 = arith.constant 0 : index
    %c0_0 = arith.constant 0 : index
    %0 = vector.load %arg1[%c0, %c0_0] : memref<18x72xbf16, #tpu.memory_space<vmem>>, vector<18x72xbf16>
    %c0_1 = arith.constant 0 : index
    %c0_2 = arith.constant 0 : index
    %1 = vector.load %arg2[%c0_1, %c0_2] : memref<72x8192xbf16, #tpu.memory_space<vmem>>, vector<72x512xbf16>
    %cst = arith.constant dense<0.000000e+00> : vector<18x512xf32>
    %2 = tpu.matmul %0, %1, %cst {dimension_numbers = #tpu.dot_dimension_numbers<[1], [0], [0], [1], [0, 0, 1, 1], [], []>} : vector<18x72xbf16>, vector<72x512xbf16>, vector<18x512xf32> -> vector<18x512xf32>
    %c0_3 = arith.constant 0 : index
    %c0_4 = arith.constant 0 : index
    %3 = vector.load %arg3[%c0_3, %c0_4] : memref<1x8192xf32, #tpu.memory_space<vmem>>, vector<1x512xf32>
    %4 = vector.broadcast %3 : vector<1x512xf32> to vector<18x512xf32>
    %5 = arith.addf %2, %4 : vector<18x512xf32>
    %6 = arith.truncf %5 : vector<18x512xf32> to vector<18x512xbf16>
    %c0_5 = arith.constant 0 : index
    %c0_6 = arith.constant 0 : index
    %7 = vector.load %arg4[%c0_5, %c0_6] : memref<18x8192xbf16, #tpu.memory_space<vmem>>, vector<18x512xbf16>
    tpu.vector_store %arg4[%c0_5, %c0_6], %6 {strides = array<i32>} : memref<18x8192xbf16, #tpu.memory_space<vmem>>, vector<18x512xbf16>,
    %c0_7 = arith.constant 0 : index
    %c512 = arith.constant 512 : index
    %8 = vector.load %arg2[%c0_7, %c512] : memref<72x8192xbf16, #tpu.memory_space<vmem>>, vector<72x512xbf16>
    %cst_8 = arith.constant dense<0.000000e+00> : vector<18x512xf32>
    %9 = tpu.matmul %0, %8, %cst_8 {dimension_numbers = #tpu.dot_dimension_numbers<[1], [0], [0], [1], [0, 0, 1, 1], [], []>} : vector<18x72xbf16>, vector<72x512xbf16>, vector<18x512xf32> -> vector<18x512xf32>
    %c0_9 = arith.constant 0 : index
    %c512_10 = arith.constant 512 : index
    %10 = vector.load %arg3[%c0_9, %c512_10] : memref<1x8192xf32, #tpu.memory_space<vmem>>, vector<1x512xf32>
    %11 = vector.broadcast %10 : vector<1x512xf32> to vector<18x512xf32>
    %12 = arith.addf %9, %11 : vector<18x512xf32>
    %13 = arith.truncf %12 : vector<18x512xf32> to vector<18x512xbf16>
    %c0_11 = arith.constant 0 : index
    %c512_12 = arith.constant 512 : index
    %14 = vector.load %arg4[%c0_11, %c512_12] : memref<18x8192xbf16, #tpu.memory_space<vmem>>, vector<18x512xbf16>
    tpu.vector_store %arg4[%c0_11, %c512_12], %13 {strides = array<i32>} : memref<18x8192xbf16, #tpu.memory_space<vmem>>, vector<18x512xbf16>,
    %c0_13 = arith.constant 0 : index
    %c1024 = arith.constant 1024 : index
    %15 = vector.load %arg2[%c0_13, %c1024] : memref<72x8192xbf16, #tpu.memory_space<vmem>>, vector<72x512xbf16>
    %cst_14 = arith.constant dense<0.000000e+00> : vector<18x512xf32>
    %16 = tpu.matmul %0, %15, %cst_14 {dimension_numbers = #tpu.dot_dimension_numbers<[1], [0], [0], [1], [0, 0, 1, 1], [], []>} : vector<18x72xbf16>, vector<72x512xbf16>, vector<18x512xf32> -> vector<18x512xf32>
    %c0_15 = arith.constant 0 : index
    %c1024_16 = arith.constant 1024 : index
    %17 = vector.load %arg3[%c0_15, %c1024_16] : memref<1x8192xf32, #tpu.memory_space<vmem>>, vector<1x512xf32>
    %18 = vector.broadcast %17 : vector<1x512xf32> to vector<18x512xf32>
    %19 = arith.addf %16, %18 : vector<18x512xf32>
    %20 = arith.truncf %19 : vector<18x512xf32> to vector<18x512xbf16>
    %c0_17 = arith.constant 0 : index
    %c1024_18 = arith.constant 1024 : index
    %21 = vector.load %arg4[%c0_17, %c1024_18] : memref<18x8192xbf16, #tpu.memory_space<vmem>>, vector<18x512xbf16>
    tpu.vector_store %arg4[%c0_17, %c1024_18], %20 {strides = array<i32>} : memref<18x8192xbf16, #tpu.memory_space<vmem>>, vector<18x512xbf16>,
    %c0_19 = arith.constant 0 : index
    %c1536 = arith.constant 1536 : index
    %22 = vector.load %arg2[%c0_19, %c1536] : memref<72x8192xbf16, #tpu.memory_space<vmem>>, vector<72x512xbf16>
    %cst_20 = arith.constant dense<0.000000e+00> : vector<18x512xf32>
    %23 = tpu.matmul %0, %22, %cst_20 {dimension_numbers = #tpu.dot_dimension_numbers<[1], [0], [0], [1], [0, 0, 1, 1], [], []>} : vector<18x72xbf16>, vector<72x512xbf16>, vector<18x512xf32> -> vector<18x512xf32>
    %c0_21 = arith.constant 0 : index
    %c1536_22 = arith.constant 1536 : index
    %24 = vector.load %arg3[%c0_21, %c1536_22] : memref<1x8192xf32, #tpu.memory_space<vmem>>, vector<1x512xf32>
    %25 = vector.broadcast %24 : vector<1x512xf32> to vector<18x512xf32>
    %26 = arith.addf %23, %25 : vector<18x512xf32>
    %27 = arith.truncf %26 : vector<18x512xf32> to vector<18x512xbf16>
    %c0_23 = arith.constant 0 : index
    %c1536_24 = arith.constant 1536 : index
    %28 = vector.load %arg4[%c0_23, %c1536_24] : memref<18x8192xbf16, #tpu.memory_space<vmem>>, vector<18x512xbf16>
    tpu.vector_store %arg4[%c0_23, %c1536_24], %27 {strides = array<i32>} : memref<18x8192xbf16, #tpu.memory_space<vmem>>, vector<18x512xbf16>,
    %c0_25 = arith.constant 0 : index
    %c2048 = arith.constant 2048 : index
    %29 = vector.load %arg2[%c0_25, %c2048] : memref<72x8192xbf16, #tpu.memory_space<vmem>>, vector<72x512xbf16>
    %cst_26 = arith.constant dense<0.000000e+00> : vector<18x512xf32>
    %30 = tpu.matmul %0, %29, %cst_26 {dimension_numbers = #tpu.dot_dimension_numbers<[1], [0], [0], [1], [0, 0, 1, 1], [], []>} : vector<18x72xbf16>, vector<72x512xbf16>, vector<18x512xf32> -> vector<18x512xf32>
    %c0_27 = arith.constant 0 : index
    %c2048_28 = arith.constant 2048 : index
    %31 = vector.load %arg3[%c0_27, %c2048_28] : memref<1x8192xf32, #tpu.memory_space<vmem>>, vector<1x512xf32>
    %32 = vector.broadcast %31 : vector<1x512xf32> to vector<18x512xf32>
    %33 = arith.addf %30, %32 : vector<18x512xf32>
    %34 = arith.truncf %33 : vector<18x512xf32> to vector<18x512xbf16>
    %c0_29 = arith.constant 0 : index
    %c2048_30 = arith.constant 2048 : index
    %35 = vector.load %arg4[%c0_29, %c2048_30] : memref<18x8192xbf16, #tpu.memory_space<vmem>>, vector<18x512xbf16>
    tpu.vector_store %arg4[%c0_29, %c2048_30], %34 {strides = array<i32>} : memref<18x8192xbf16, #tpu.memory_space<vmem>>, vector<18x512xbf16>,
    %c0_31 = arith.constant 0 : index
    %c2560 = arith.constant 2560 : index
    %36 = vector.load %arg2[%c0_31, %c2560] : memref<72x8192xbf16, #tpu.memory_space<vmem>>, vector<72x512xbf16>
    %cst_32 = arith.constant dense<0.000000e+00> : vector<18x512xf32>
    %37 = tpu.matmul %0, %36, %cst_32 {dimension_numbers = #tpu.dot_dimension_numbers<[1], [0], [0], [1], [0, 0, 1, 1], [], []>} : vector<18x72xbf16>, vector<72x512xbf16>, vector<18x512xf32> -> vector<18x512xf32>
    %c0_33 = arith.constant 0 : index
    %c2560_34 = arith.constant 2560 : index
    %38 = vector.load %arg3[%c0_33, %c2560_34] : memref<1x8192xf32, #tpu.memory_space<vmem>>, vector<1x512xf32>
    %39 = vector.broadcast %38 : vector<1x512xf32> to vector<18x512xf32>
    %40 = arith.addf %37, %39 : vector<18x512xf32>
    %41 = arith.truncf %40 : vector<18x512xf32> to vector<18x512xbf16>
    %c0_35 = arith.constant 0 : index
    %c2560_36 = arith.constant 2560 : index
    %42 = vector.load %arg4[%c0_35, %c2560_36] : memref<18x8192xbf16, #tpu.memory_space<vmem>>, vector<18x512xbf16>
    tpu.vector_store %arg4[%c0_35, %c2560_36], %41 {strides = array<i32>} : memref<18x8192xbf16, #tpu.memory_space<vmem>>, vector<18x512xbf16>,
    %c0_37 = arith.constant 0 : index
    %c3072 = arith.constant 3072 : index
    %43 = vector.load %arg2[%c0_37, %c3072] : memref<72x8192xbf16, #tpu.memory_space<vmem>>, vector<72x512xbf16>
    %cst_38 = arith.constant dense<0.000000e+00> : vector<18x512xf32>
    %44 = tpu.matmul %0, %43, %cst_38 {dimension_numbers = #tpu.dot_dimension_numbers<[1], [0], [0], [1], [0, 0, 1, 1], [], []>} : vector<18x72xbf16>, vector<72x512xbf16>, vector<18x512xf32> -> vector<18x512xf32>
    %c0_39 = arith.constant 0 : index
    %c3072_40 = arith.constant 3072 : index
    %45 = vector.load %arg3[%c0_39, %c3072_40] : memref<1x8192xf32, #tpu.memory_space<vmem>>, vector<1x512xf32>
    %46 = vector.broadcast %45 : vector<1x512xf32> to vector<18x512xf32>
    %47 = arith.addf %44, %46 : vector<18x512xf32>
    %48 = arith.truncf %47 : vector<18x512xf32> to vector<18x512xbf16>
    %c0_41 = arith.constant 0 : index
    %c3072_42 = arith.constant 3072 : index
    %49 = vector.load %arg4[%c0_41, %c3072_42] : memref<18x8192xbf16, #tpu.memory_space<vmem>>, vector<18x512xbf16>
    tpu.vector_store %arg4[%c0_41, %c3072_42], %48 {strides = array<i32>} : memref<18x8192xbf16, #tpu.memory_space<vmem>>, vector<18x512xbf16>,
    %c0_43 = arith.constant 0 : index
    %c3584 = arith.constant 3584 : index
    %50 = vector.load %arg2[%c0_43, %c3584] : memref<72x8192xbf16, #tpu.memory_space<vmem>>, vector<72x512xbf16>
    %cst_44 = arith.constant dense<0.000000e+00> : vector<18x512xf32>
    %51 = tpu.matmul %0, %50, %cst_44 {dimension_numbers = #tpu.dot_dimension_numbers<[1], [0], [0], [1], [0, 0, 1, 1], [], []>} : vector<18x72xbf16>, vector<72x512xbf16>, vector<18x512xf32> -> vector<18x512xf32>
    %c0_45 = arith.constant 0 : index
    %c3584_46 = arith.constant 3584 : index
    %52 = vector.load %arg3[%c0_45, %c3584_46] : memref<1x8192xf32, #tpu.memory_space<vmem>>, vector<1x512xf32>
    %53 = vector.broadcast %52 : vector<1x512xf32> to vector<18x512xf32>
    %54 = arith.addf %51, %53 : vector<18x512xf32>
    %55 = arith.truncf %54 : vector<18x512xf32> to vector<18x512xbf16>
    %c0_47 = arith.constant 0 : index
    %c3584_48 = arith.constant 3584 : index
    %56 = vector.load %arg4[%c0_47, %c3584_48] : memref<18x8192xbf16, #tpu.memory_space<vmem>>, vector<18x512xbf16>
    tpu.vector_store %arg4[%c0_47, %c3584_48], %55 {strides = array<i32>} : memref<18x8192xbf16, #tpu.memory_space<vmem>>, vector<18x512xbf16>,
    %c0_49 = arith.constant 0 : index
    %c4096 = arith.constant 4096 : index
    %57 = vector.load %arg2[%c0_49, %c4096] : memref<72x8192xbf16, #tpu.memory_space<vmem>>, vector<72x512xbf16>
    %cst_50 = arith.constant dense<0.000000e+00> : vector<18x512xf32>
    %58 = tpu.matmul %0, %57, %cst_50 {dimension_numbers = #tpu.dot_dimension_numbers<[1], [0], [0], [1], [0, 0, 1, 1], [], []>} : vector<18x72xbf16>, vector<72x512xbf16>, vector<18x512xf32> -> vector<18x512xf32>
    %c0_51 = arith.constant 0 : index
    %c4096_52 = arith.constant 4096 : index
    %59 = vector.load %arg3[%c0_51, %c4096_52] : memref<1x8192xf32, #tpu.memory_space<vmem>>, vector<1x512xf32>
    %60 = vector.broadcast %59 : vector<1x512xf32> to vector<18x512xf32>
    %61 = arith.addf %58, %60 : vector<18x512xf32>
    %62 = arith.truncf %61 : vector<18x512xf32> to vector<18x512xbf16>
    %c0_53 = arith.constant 0 : index
    %c4096_54 = arith.constant 4096 : index
    %63 = vector.load %arg4[%c0_53, %c4096_54] : memref<18x8192xbf16, #tpu.memory_space<vmem>>, vector<18x512xbf16>
    tpu.vector_store %arg4[%c0_53, %c4096_54], %62 {strides = array<i32>} : memref<18x8192xbf16, #tpu.memory_space<vmem>>, vector<18x512xbf16>,
    %c0_55 = arith.constant 0 : index
    %c4608 = arith.constant 4608 : index
    %64 = vector.load %arg2[%c0_55, %c4608] : memref<72x8192xbf16, #tpu.memory_space<vmem>>, vector<72x512xbf16>
    %cst_56 = arith.constant dense<0.000000e+00> : vector<18x512xf32>
    %65 = tpu.matmul %0, %64, %cst_56 {dimension_numbers = #tpu.dot_dimension_numbers<[1], [0], [0], [1], [0, 0, 1, 1], [], []>} : vector<18x72xbf16>, vector<72x512xbf16>, vector<18x512xf32> -> vector<18x512xf32>
    %c0_57 = arith.constant 0 : index
    %c4608_58 = arith.constant 4608 : index
    %66 = vector.load %arg3[%c0_57, %c4608_58] : memref<1x8192xf32, #tpu.memory_space<vmem>>, vector<1x512xf32>
    %67 = vector.broadcast %66 : vector<1x512xf32> to vector<18x512xf32>
    %68 = arith.addf %65, %67 : vector<18x512xf32>
    %69 = arith.truncf %68 : vector<18x512xf32> to vector<18x512xbf16>
    %c0_59 = arith.constant 0 : index
    %c4608_60 = arith.constant 4608 : index
    %70 = vector.load %arg4[%c0_59, %c4608_60] : memref<18x8192xbf16, #tpu.memory_space<vmem>>, vector<18x512xbf16>
    tpu.vector_store %arg4[%c0_59, %c4608_60], %69 {strides = array<i32>} : memref<18x8192xbf16, #tpu.memory_space<vmem>>, vector<18x512xbf16>,
    %c0_61 = arith.constant 0 : index
    %c5120 = arith.constant 5120 : index
    %71 = vector.load %arg2[%c0_61, %c5120] : memref<72x8192xbf16, #tpu.memory_space<vmem>>, vector<72x512xbf16>
    %cst_62 = arith.constant dense<0.000000e+00> : vector<18x512xf32>
    %72 = tpu.matmul %0, %71, %cst_62 {dimension_numbers = #tpu.dot_dimension_numbers<[1], [0], [0], [1], [0, 0, 1, 1], [], []>} : vector<18x72xbf16>, vector<72x512xbf16>, vector<18x512xf32> -> vector<18x512xf32>
    %c0_63 = arith.constant 0 : index
    %c5120_64 = arith.constant 5120 : index
    %73 = vector.load %arg3[%c0_63, %c5120_64] : memref<1x8192xf32, #tpu.memory_space<vmem>>, vector<1x512xf32>
    %74 = vector.broadcast %73 : vector<1x512xf32> to vector<18x512xf32>
    %75 = arith.addf %72, %74 : vector<18x512xf32>
    %76 = arith.truncf %75 : vector<18x512xf32> to vector<18x512xbf16>
    %c0_65 = arith.constant 0 : index
    %c5120_66 = arith.constant 5120 : index
    %77 = vector.load %arg4[%c0_65, %c5120_66] : memref<18x8192xbf16, #tpu.memory_space<vmem>>, vector<18x512xbf16>
    tpu.vector_store %arg4[%c0_65, %c5120_66], %76 {strides = array<i32>} : memref<18x8192xbf16, #tpu.memory_space<vmem>>, vector<18x512xbf16>,
    %c0_67 = arith.constant 0 : index
    %c5632 = arith.constant 5632 : index
    %78 = vector.load %arg2[%c0_67, %c5632] : memref<72x8192xbf16, #tpu.memory_space<vmem>>, vector<72x512xbf16>
    %cst_68 = arith.constant dense<0.000000e+00> : vector<18x512xf32>
    %79 = tpu.matmul %0, %78, %cst_68 {dimension_numbers = #tpu.dot_dimension_numbers<[1], [0], [0], [1], [0, 0, 1, 1], [], []>} : vector<18x72xbf16>, vector<72x512xbf16>, vector<18x512xf32> -> vector<18x512xf32>
    %c0_69 = arith.constant 0 : index
    %c5632_70 = arith.constant 5632 : index
    %80 = vector.load %arg3[%c0_69, %c5632_70] : memref<1x8192xf32, #tpu.memory_space<vmem>>, vector<1x512xf32>
    %81 = vector.broadcast %80 : vector<1x512xf32> to vector<18x512xf32>
    %82 = arith.addf %79, %81 : vector<18x512xf32>
    %83 = arith.truncf %82 : vector<18x512xf32> to vector<18x512xbf16>
    %c0_71 = arith.constant 0 : index
    %c5632_72 = arith.constant 5632 : index
    %84 = vector.load %arg4[%c0_71, %c5632_72] : memref<18x8192xbf16, #tpu.memory_space<vmem>>, vector<18x512xbf16>
    tpu.vector_store %arg4[%c0_71, %c5632_72], %83 {strides = array<i32>} : memref<18x8192xbf16, #tpu.memory_space<vmem>>, vector<18x512xbf16>,
    %c0_73 = arith.constant 0 : index
    %c6144 = arith.constant 6144 : index
    %85 = vector.load %arg2[%c0_73, %c6144] : memref<72x8192xbf16, #tpu.memory_space<vmem>>, vector<72x512xbf16>
    %cst_74 = arith.constant dense<0.000000e+00> : vector<18x512xf32>
    %86 = tpu.matmul %0, %85, %cst_74 {dimension_numbers = #tpu.dot_dimension_numbers<[1], [0], [0], [1], [0, 0, 1, 1], [], []>} : vector<18x72xbf16>, vector<72x512xbf16>, vector<18x512xf32> -> vector<18x512xf32>
    %c0_75 = arith.constant 0 : index
    %c6144_76 = arith.constant 6144 : index
    %87 = vector.load %arg3[%c0_75, %c6144_76] : memref<1x8192xf32, #tpu.memory_space<vmem>>, vector<1x512xf32>
    %88 = vector.broadcast %87 : vector<1x512xf32> to vector<18x512xf32>
    %89 = arith.addf %86, %88 : vector<18x512xf32>
    %90 = arith.truncf %89 : vector<18x512xf32> to vector<18x512xbf16>
    %c0_77 = arith.constant 0 : index
    %c6144_78 = arith.constant 6144 : index
    %91 = vector.load %arg4[%c0_77, %c6144_78] : memref<18x8192xbf16, #tpu.memory_space<vmem>>, vector<18x512xbf16>
    tpu.vector_store %arg4[%c0_77, %c6144_78], %90 {strides = array<i32>} : memref<18x8192xbf16, #tpu.memory_space<vmem>>, vector<18x512xbf16>,
    %c0_79 = arith.constant 0 : index
    %c6656 = arith.constant 6656 : index
    %92 = vector.load %arg2[%c0_79, %c6656] : memref<72x8192xbf16, #tpu.memory_space<vmem>>, vector<72x512xbf16>
    %cst_80 = arith.constant dense<0.000000e+00> : vector<18x512xf32>
    %93 = tpu.matmul %0, %92, %cst_80 {dimension_numbers = #tpu.dot_dimension_numbers<[1], [0], [0], [1], [0, 0, 1, 1], [], []>} : vector<18x72xbf16>, vector<72x512xbf16>, vector<18x512xf32> -> vector<18x512xf32>
    %c0_81 = arith.constant 0 : index
    %c6656_82 = arith.constant 6656 : index
    %94 = vector.load %arg3[%c0_81, %c6656_82] : memref<1x8192xf32, #tpu.memory_space<vmem>>, vector<1x512xf32>
    %95 = vector.broadcast %94 : vector<1x512xf32> to vector<18x512xf32>
    %96 = arith.addf %93, %95 : vector<18x512xf32>
    %97 = arith.truncf %96 : vector<18x512xf32> to vector<18x512xbf16>
    %c0_83 = arith.constant 0 : index
    %c6656_84 = arith.constant 6656 : index
    %98 = vector.load %arg4[%c0_83, %c6656_84] : memref<18x8192xbf16, #tpu.memory_space<vmem>>, vector<18x512xbf16>
    tpu.vector_store %arg4[%c0_83, %c6656_84], %97 {strides = array<i32>} : memref<18x8192xbf16, #tpu.memory_space<vmem>>, vector<18x512xbf16>,
    %c0_85 = arith.constant 0 : index
    %c7168 = arith.constant 7168 : index
    %99 = vector.load %arg2[%c0_85, %c7168] : memref<72x8192xbf16, #tpu.memory_space<vmem>>, vector<72x512xbf16>
    %cst_86 = arith.constant dense<0.000000e+00> : vector<18x512xf32>
    %100 = tpu.matmul %0, %99, %cst_86 {dimension_numbers = #tpu.dot_dimension_numbers<[1], [0], [0], [1], [0, 0, 1, 1], [], []>} : vector<18x72xbf16>, vector<72x512xbf16>, vector<18x512xf32> -> vector<18x512xf32>
    %c0_87 = arith.constant 0 : index
    %c7168_88 = arith.constant 7168 : index
    %101 = vector.load %arg3[%c0_87, %c7168_88] : memref<1x8192xf32, #tpu.memory_space<vmem>>, vector<1x512xf32>
    %102 = vector.broadcast %101 : vector<1x512xf32> to vector<18x512xf32>
    %103 = arith.addf %100, %102 : vector<18x512xf32>
    %104 = arith.truncf %103 : vector<18x512xf32> to vector<18x512xbf16>
    %c0_89 = arith.constant 0 : index
    %c7168_90 = arith.constant 7168 : index
    %105 = vector.load %arg4[%c0_89, %c7168_90] : memref<18x8192xbf16, #tpu.memory_space<vmem>>, vector<18x512xbf16>
    tpu.vector_store %arg4[%c0_89, %c7168_90], %104 {strides = array<i32>} : memref<18x8192xbf16, #tpu.memory_space<vmem>>, vector<18x512xbf16>,
    %c0_91 = arith.constant 0 : index
    %c7680 = arith.constant 7680 : index
    %106 = vector.load %arg2[%c0_91, %c7680] : memref<72x8192xbf16, #tpu.memory_space<vmem>>, vector<72x512xbf16>
    %cst_92 = arith.constant dense<0.000000e+00> : vector<18x512xf32>
    %107 = tpu.matmul %0, %106, %cst_92 {dimension_numbers = #tpu.dot_dimension_numbers<[1], [0], [0], [1], [0, 0, 1, 1], [], []>} : vector<18x72xbf16>, vector<72x512xbf16>, vector<18x512xf32> -> vector<18x512xf32>
    %c0_93 = arith.constant 0 : index
    %c7680_94 = arith.constant 7680 : index
    %108 = vector.load %arg3[%c0_93, %c7680_94] : memref<1x8192xf32, #tpu.memory_space<vmem>>, vector<1x512xf32>
    %109 = vector.broadcast %108 : vector<1x512xf32> to vector<18x512xf32>
    %110 = arith.addf %107, %109 : vector<18x512xf32>
    %111 = arith.truncf %110 : vector<18x512xf32> to vector<18x512xbf16>
    %c0_95 = arith.constant 0 : index
    %c7680_96 = arith.constant 7680 : index
    %112 = vector.load %arg4[%c0_95, %c7680_96] : memref<18x8192xbf16, #tpu.memory_space<vmem>>, vector<18x512xbf16>
    tpu.vector_store %arg4[%c0_95, %c7680_96], %111 {strides = array<i32>} : memref<18x8192xbf16, #tpu.memory_space<vmem>>, vector<18x512xbf16>,
    return
  }
  func.func @transform_0(%arg0: i32) -> (i32, i32) {
    %c0_i32 = arith.constant 0 : i32
    %c0_i32_0 = arith.constant 0 : i32
    %c0_i32_1 = arith.constant 0 : i32
    return %c0_i32, %c0_i32_0 : i32, i32
  }
  func.func @transform_1(%arg0: i32) -> (i32, i32) {
    %c0_i32 = arith.constant 0 : i32
    %c0_i32_0 = arith.constant 0 : i32
    return %c0_i32, %arg0 : i32, i32
  }
  func.func @transform_2(%arg0: i32) -> (i32, i32) {
    %c0_i32 = arith.constant 0 : i32
    %c0_i32_0 = arith.constant 0 : i32
    return %c0_i32, %arg0 : i32, i32
  }
  func.func @transform_3(%arg0: i32) -> (i32, i32) {
    %c0_i32 = arith.constant 0 : i32
    %c0_i32_0 = arith.constant 0 : i32
    return %c0_i32, %arg0 : i32, i32
  }
}

</mosaic_0001>

<llo_original>
// kernel: tpu_custom_call.1
$region0: #{tpu_custom_call.1}
  #allocation0 [shape = 'u32[]', space=smem, size = 0x4, offset = 0x4, fixed_abs, tag = 'smem constant byte address 0x4 - core index']
  #allocation1 [shape = 'u32[144,128]{1,0:T(1,128)}', space=vmem, size = 0x12000, scoped, tag = 'internal scratch']
  %s0 = inlined_call_operand.hbm [shape: bf16[18,72], index: 0, kind: input, shape index: {}]
  %s1 = inlined_call_operand.hbm [shape: bf16[72,65536], index: 1, kind: input, shape index: {}]
  %s2 = inlined_call_operand.hbm [shape: f32[1,65536], index: 2, kind: input, shape index: {}]
  %s3 = inlined_call_operand.hbm [shape: bf16[18,65536], index: 3, kind: output, shape index: {}]
  %s4 = sld [smem:[#allocation0]]
  $region57: #{tpu_custom_call.1} parent=0
    _
  %s6 = ssub.s32 1, %s4
  %s7 = scalar_select 0, %s6, %s4
  $region1: #{tpu_custom_call.1} parent=0
    #allocation2 [shape = 'u8[6144]{0}', space=vmem, size = 0x1800, scoped, tag = 'input window, operand 0, single buffered']
    #allocation3 [shape = 's32[2]{0}', space=sflag, size = 0x8, scoped, tag = 'scoped memory for tpu_custom_call.1']
    #allocation4 [shape = 's32[2]{0}', space=sflag, size = 0x8, scoped, tag = 'scoped memory for tpu_custom_call.1']
    #allocation5 [shape = 'u8[2359296]{0}', space=vmem, size = 0x240000, scoped, tag = 'input window, operand 1']
    #allocation6 [shape = 's32[2]{0}', space=sflag, size = 0x8, scoped, tag = 'scoped memory for tpu_custom_call.1']
    #allocation7 [shape = 'u8[65536]{0}', space=vmem, size = 0x10000, scoped, tag = 'input window, operand 2']
    #allocation8 [shape = 'u8[786432]{0}', space=vmem, size = 0xc0000, scoped, tag = 'output window, operand 0']
    %8 = vsyncpa [#allocation3], 0
    %9 = vsyncpa [#allocation6], 0
    %s10 = scalar_lea.sflag [#allocation6], 1
    %11 = vsyncpa %s10, 0
    %12 = vsyncpa [#allocation4], 0
    %s13 = scalar_lea.sflag [#allocation4], 1
    %14 = vsyncpa %s13, 0
    loop: start=0, step=1, limit=10
    $region2: #{tpu_custom_call.1} parent=1 // loop_pre_header
      _
    $region3: #{tpu_custom_call.1} parent=1 // loop_header
      %s16 = sphi 0, %s20
      %p17 = scmp.ge.s32.totalorder %s16, 10
      %s24 = sphi 0, %s24
      %s26 = sphi 0, %s24
      %s27 = sphi 0, %s26
      %s41 = sphi 0, %s27
      %s47 = sphi 0, %s49
      %s50 = sphi 0, %s47
      %s51 = sphi 0, %s50
      %s67 = sphi 0, %s51
      %s73 = sphi 0, %s75
      %s76 = sphi 0, %s73
      %s77 = sphi 0, %s76
      %s93 = sphi 0, %s77
      %s99 = sphi 0, %s101
      %s102 = sphi 0, %s99
      %s103 = sphi 0, %s102
      %s119 = sphi 0, %s103
    $region4: #{tpu_custom_call.1} parent=1 // loop_header_branch
      %19 = sbr.rel (%p17) target = $region8
    $region5: #{tpu_custom_call.1} parent=1 // loop_body
      %s21 = ssub.s32 %s16, 1
      %s22 = ssub.s32 %s16, 2
      %s23 = sadd.s32 %s16, 1
      %s25 = sadd.s32 %s24, 1
      %p28 = scmp.eq.s32.totalorder %s16, 7
      %p29 = scmp.ne.s32.totalorder %s24, %s26
      %p30 = scmp.eq.s32.totalorder %s16, 0
      %p31 = por %p29, %p30
      %p32 = scmp.ne.s32.totalorder %s24, %s26
      %p33 = scmp.eq.s32.totalorder %s21, 7
      %p34 = por %p32, %p33
      %p35 = scmp.ne.s32.totalorder %s26, %s27
      %p36 = scmp.eq.s32.totalorder %s21, 0
      %p37 = por %p35, %p36
      %p38 = scmp.ne.s32.totalorder %s26, %s27
      %p39 = scmp.eq.s32.totalorder %s22, 7
      %p40 = por %p38, %p39
      %p42 = scmp.ne.s32.totalorder %s27, %s41
      %p43 = scmp.eq.s32.totalorder %s22, 0
      %p44 = por %p42, %p43
      %s45 = ssub.s32 %s16, %s23
      %p46 = scmp.eq.s32.totalorder %s45, 0
      %s48 = sadd.s32 %s47, 1
      %s49 = scalar_select %p46, %s47, %s48
      %p52 = pneg %p46
      %p53 = scmp.eq.s32.totalorder %s16, 7
      %p54 = por %p52, %p53
      %p55 = scmp.ne.s32.totalorder %s47, %s50
      %p56 = scmp.eq.s32.totalorder %s16, 0
      %p57 = por %p55, %p56
      %p58 = scmp.ne.s32.totalorder %s47, %s50
      %p59 = scmp.eq.s32.totalorder %s21, 7
      %p60 = por %p58, %p59
      %p61 = scmp.ne.s32.totalorder %s50, %s51
      %p62 = scmp.eq.s32.totalorder %s21, 0
      %p63 = por %p61, %p62
      %p64 = scmp.ne.s32.totalorder %s50, %s51
      %p65 = scmp.eq.s32.totalorder %s22, 7
      %p66 = por %p64, %p65
      %p68 = scmp.ne.s32.totalorder %s51, %s67
      %p69 = scmp.eq.s32.totalorder %s22, 0
      %p70 = por %p68, %p69
      %s71 = ssub.s32 %s16, %s23
      %p72 = scmp.eq.s32.totalorder %s71, 0
      %s74 = sadd.s32 %s73, 1
      %s75 = scalar_select %p72, %s73, %s74
      %p78 = pneg %p72
      %p79 = scmp.eq.s32.totalorder %s16, 7
      %p80 = por %p78, %p79
      %p81 = scmp.ne.s32.totalorder %s73, %s76
      %p82 = scmp.eq.s32.totalorder %s16, 0
      %p83 = por %p81, %p82
      %p84 = scmp.ne.s32.totalorder %s73, %s76
      %p85 = scmp.eq.s32.totalorder %s21, 7
      %p86 = por %p84, %p85
      %p87 = scmp.ne.s32.totalorder %s76, %s77
      %p88 = scmp.eq.s32.totalorder %s21, 0
      %p89 = por %p87, %p88
      %p90 = scmp.ne.s32.totalorder %s76, %s77
      %p91 = scmp.eq.s32.totalorder %s22, 7
      %p92 = por %p90, %p91
      %p94 = scmp.ne.s32.totalorder %s77, %s93
      %p95 = scmp.eq.s32.totalorder %s22, 0
      %p96 = por %p94, %p95
      %s97 = ssub.s32 %s16, %s23
      %p98 = scmp.eq.s32.totalorder %s97, 0
      %s100 = sadd.s32 %s99, 1
      %s101 = scalar_select %p98, %s99, %s100
      %p104 = pneg %p98
      %p105 = scmp.eq.s32.totalorder %s16, 7
      %p106 = por %p104, %p105
      %p107 = scmp.ne.s32.totalorder %s99, %s102
      %p108 = scmp.eq.s32.totalorder %s16, 0
      %p109 = por %p107, %p108
      %p110 = scmp.ne.s32.totalorder %s99, %s102
      %p111 = scmp.eq.s32.totalorder %s21, 7
      %p112 = por %p110, %p111
      %p113 = scmp.ne.s32.totalorder %s102, %s103
      %p114 = scmp.eq.s32.totalorder %s21, 0
      %p115 = por %p113, %p114
      %p116 = scmp.ne.s32.totalorder %s102, %s103
      %p117 = scmp.eq.s32.totalorder %s22, 7
      %p118 = por %p116, %p117
      %p120 = scmp.ne.s32.totalorder %s103, %s119
      %p121 = scmp.eq.s32.totalorder %s22, 0
      %p122 = por %p120, %p121
      %p123 = scmp.le.s32.totalorder 1, %s16
      %p124 = scmp.lt.s32.totalorder %s16, 9
      %p125 = pnand %p123, %p124
      %p126 = pneg %p125
      // Predicated region
      $region9: #{tpu_custom_call.1} parent=5 // pred_check
        _
      $region10: #{tpu_custom_call.1} parent=5 // pred_check_branch
        %128 = sbr.rel (%p125) target = $region12
      $region11: #{tpu_custom_call.1} parent=5 // pred_region
        %s129 = ssub.s32 %s16, 1
        // Predicated region
        $region13: #{tpu_custom_call.1} parent=11 // pred_check
          %p130 = pneg %p37
        $region14: #{tpu_custom_call.1} parent=11 // pred_check_branch
          %132 = sbr.rel (%p130) target = $region16
        $region15: #{tpu_custom_call.1} parent=11 // pred_region
          %s134 = ssub.s32 192, 192
          %135 = vsyncadd [#allocation3], %s134
          %s136 = sshll.u32 [#allocation2], 4
          %s137 = int_to_ptr.vmem [resolvable:$true] %s136
          %142 = dma.hbm_to_vmem [thread:$0]  %s0, 192, %s137, [#allocation3], 64, 64, 4
        $region16: #{tpu_custom_call.1} parent=11 // pred_fallthru
          _
      $region12: #{tpu_custom_call.1} parent=5 // pred_fallthru
        _
      %p143 = scmp.lt.s32.totalorder %s16, 8
      // Predicated region
      $region17: #{tpu_custom_call.1} parent=5 // pred_check
        %p144 = pneg %p143
      $region18: #{tpu_custom_call.1} parent=5 // pred_check_branch
        %146 = sbr.rel (%p144) target = $region20
      $region19: #{tpu_custom_call.1} parent=5 // pred_region
        // Predicated region
        $region21: #{tpu_custom_call.1} parent=19 // pred_check
          %p147 = pneg %p57
        $region22: #{tpu_custom_call.1} parent=19 // pred_check_branch
          %149 = sbr.rel (%p147) target = $region24
        $region23: #{tpu_custom_call.1} parent=19 // pred_region
          %s150 = sand.u32 %s16, 1
          %s151 = scalar_lea.sflag [#allocation6], %s150
          %s152 = sand.u32 %s47, 1
          %s153 = smul.addr %s152, 2304
          %s154 = scalar_lea.vmem [#allocation5], %s153
          %s155 = smul.u32 64, %s16
          %s157 = ssub.s32 36864, 36864
          %158 = vsyncadd %s151, %s157
          %s159 = smul.addr %s155, 64
          %s160 = scalar_lea.hbm %s1, %s159
          %s161 = sshll.u32 %s154, 4
          %s162 = int_to_ptr.vmem [resolvable:$true] %s161
          %167 = dma.hbm_to_vmem [thread:$0]  %s160, 36864, %s162, %s151, 32768, 4096, 256
        $region24: #{tpu_custom_call.1} parent=19 // pred_fallthru
          _
        // Predicated region
        $region25: #{tpu_custom_call.1} parent=19 // pred_check
          %p168 = pneg %p83
        $region26: #{tpu_custom_call.1} parent=19 // pred_check_branch
          %170 = sbr.rel (%p168) target = $region28
        $region27: #{tpu_custom_call.1} parent=19 // pred_region
          %s171 = sand.u32 %s16, 1
          %s172 = scalar_lea.sflag [#allocation6], %s171
          %s173 = sand.u32 %s73, 1
          %s174 = smul.addr %s173, 64
          %s175 = scalar_lea.vmem [#allocation7], %s174
          %s176 = smul.u32 64, %s16
          %s178 = ssub.s32 1024, 1024
          %179 = vsyncadd %s172, %s178
          %s180 = smul.addr %s176, 16
          %s181 = scalar_lea.hbm %s2, %s180
          %s183 = sshll.u32 %s175, 4
          %s184 = int_to_ptr.vmem [resolvable:$true] %s183
          %186 = dma.hbm_to_vmem [thread:$0]  %s181, 1024, %s184, %s172
        $region28: #{tpu_custom_call.1} parent=19 // pred_fallthru
          _
      $region20: #{tpu_custom_call.1} parent=5 // pred_fallthru
        _
      %p187 = scmp.le.s32.totalorder 1, %s16
      %p188 = scmp.lt.s32.totalorder %s16, 9
      %p189 = pnand %p187, %p188
      %p190 = pneg %p189
      // Predicated region
      $region29: #{tpu_custom_call.1} parent=5 // pred_check
        _
      $region30: #{tpu_custom_call.1} parent=5 // pred_check_branch
        %192 = sbr.rel (%p189) target = $region32
      $region31: #{tpu_custom_call.1} parent=5 // pred_region
        %s193 = ssub.s32 %s16, 1
        // Predicated region
        $region33: #{tpu_custom_call.1} parent=31 // pred_check
          %p194 = pneg %p37
        $region34: #{tpu_custom_call.1} parent=31 // pred_check_branch
          %196 = sbr.rel (%p194) target = $region36
        $region35: #{tpu_custom_call.1} parent=31 // pred_region
          %197 = dma.done [#allocation3], 192
        $region36: #{tpu_custom_call.1} parent=31 // pred_fallthru
          _
        %s198 = sand.u32 %s21, 1
        %s199 = scalar_lea.sflag [#allocation6], %s198
        %s200 = sand.u32 %s50, 1
        %s201 = smul.addr %s200, 2304
        %s202 = scalar_lea.vmem [#allocation5], %s201
        // Predicated region
        $region37: #{tpu_custom_call.1} parent=31 // pred_check
          %p203 = pneg %p63
        $region38: #{tpu_custom_call.1} parent=31 // pred_check_branch
          %205 = sbr.rel (%p203) target = $region40
        $region39: #{tpu_custom_call.1} parent=31 // pred_region
          %206 = dma.done %s199, 36864
        $region40: #{tpu_custom_call.1} parent=31 // pred_fallthru
          _
        %s207 = sand.u32 %s21, 1
        %s208 = scalar_lea.sflag [#allocation6], %s207
        %s209 = sand.u32 %s76, 1
        %s210 = smul.addr %s209, 64
        %s211 = scalar_lea.vmem [#allocation7], %s210
        // Predicated region
        $region41: #{tpu_custom_call.1} parent=31 // pred_check
          %p212 = pneg %p89
        $region42: #{tpu_custom_call.1} parent=31 // pred_check_branch
          %214 = sbr.rel (%p212) target = $region44
        $region43: #{tpu_custom_call.1} parent=31 // pred_region
          %215 = dma.done %s208, 1024
        $region44: #{tpu_custom_call.1} parent=31 // pred_fallthru
          _
        %p216 = pneg %p37
        %p217 = pneg %p34
        %s218 = sand.u32 %s21, 1
        %s219 = scalar_lea.sflag [#allocation6], %s218
        %s220 = sand.u32 %s50, 1
        %s221 = smul.addr %s220, 2304
        %s222 = scalar_lea.vmem [#allocation5], %s221
        %p223 = pneg %p63
        %p224 = pneg %p60
        %s225 = sand.u32 %s21, 1
        %s226 = scalar_lea.sflag [#allocation6], %s225
        %s227 = sand.u32 %s76, 1
        %s228 = smul.addr %s227, 64
        %s229 = scalar_lea.vmem [#allocation7], %s228
        %p230 = pneg %p89
        %p231 = pneg %p86
        %p232 = pneg %p115
        %p233 = pneg %p112
        %s234 = sand.u32 %s102, 1
        %s235 = scalar_lea.sflag [#allocation4], %s234
        %s236 = sand.u32 %s102, 1
        %s237 = smul.addr %s236, 768
        %s238 = scalar_lea.vmem [#allocation8], %s237
        %s239 = smul.u32 64, %s21
        %s240 = smul.u32 64, %s21
        %s241 = smul.u32 64, %s21
        %v243 = vld [vmem:[#allocation2] sm:$0xf]
        %v244 = vld [vmem:[#allocation2 + $0x4] sm:$0xf]
        %v245 = vld [vmem:[#allocation2 + $0x8] sm:$0x1]
        %v246 = vld [vmem:[%s202] sm:$0xff]
        %v247 = vld [vmem:[%s202 + $0x8] sm:$0xff]
        %v248 = vld [vmem:[%s202 + $0x100] sm:$0xff]
        %v249 = vld [vmem:[%s202 + $0x108] sm:$0xff]
        %v250 = vld [vmem:[%s202 + $0x200] sm:$0xff]
        %v251 = vld [vmem:[%s202 + $0x208] sm:$0xff]
        %v252 = vld [vmem:[%s202 + $0x300] sm:$0xff]
        %v253 = vld [vmem:[%s202 + $0x308] sm:$0xff]
        %v254 = vld [vmem:[%s202 + $0x400] sm:$0xff]
        %v255 = vld [vmem:[%s202 + $0x408] sm:$0xff]
        %v256 = vld [vmem:[%s202 + $0x500] sm:$0xff]
        %v257 = vld [vmem:[%s202 + $0x508] sm:$0xff]
        %v258 = vld [vmem:[%s202 + $0x600] sm:$0xff]
        %v259 = vld [vmem:[%s202 + $0x608] sm:$0xff]
        %v260 = vld [vmem:[%s202 + $0x700] sm:$0xff]
        %v261 = vld [vmem:[%s202 + $0x708] sm:$0xff]
        %v262 = vld [vmem:[%s202 + $0x800] sm:$0xff]
        %v263 = vld [vmem:[%s202 + $0x808] sm:$0xff]
        %v264 = vld [vmem:[%s211] sm:$0xf]
        %v266 = vlaneseq
        %v267 = vshrl.u32 %v266, 7
        %v268 = vsub.s32 0, %v267
        %v269 = vrot.slane %v264, %v268
        %v270 = vlaneseq
        %v271 = vshrl.u32 %v270, 7
        %v272 = vsub.s32 1, %v271
        %v273 = vrot.slane %v264, %v272
        %v274 = vlaneseq
        %v275 = vshrl.u32 %v274, 7
        %v276 = vsub.s32 2, %v275
        %v277 = vrot.slane %v264, %v276
        %v278 = vlaneseq
        %v279 = vshrl.u32 %v278, 7
        %v280 = vsub.s32 3, %v279
        %v281 = vrot.slane %v264, %v280
        %v289 = vunpack.c.l.b16 %v243
        %v290 = vunpack.c.l.b16 %v244
        %v291 = vunpack.c.l.b16 %v245
        %v292 = vpack.c.b16 %v290, %v289
        %v293 = vpack.c.b16 %v291, %v291
        %v312 = vunpack.c.l.b16 %v246
        %v313 = vunpack.c.h.b16 %v246
        %v314 = vunpack.c.l.b16 %v247
        %v315 = vunpack.c.h.b16 %v247
        %v316 = vunpack.c.l.b16 %v248
        %v317 = vunpack.c.h.b16 %v248
        %v318 = vunpack.c.l.b16 %v249
        %v319 = vunpack.c.h.b16 %v249
        %v320 = vunpack.c.l.b16 %v250
        %v321 = vunpack.c.h.b16 %v250
        %v322 = vunpack.c.l.b16 %v251
        %v323 = vunpack.c.h.b16 %v251
        %v324 = vunpack.c.l.b16 %v252
        %v325 = vunpack.c.h.b16 %v252
        %v326 = vunpack.c.l.b16 %v253
        %v327 = vunpack.c.h.b16 %v253
        %v328 = vunpack.c.l.b16 %v254
        %v329 = vunpack.c.h.b16 %v254
        %v330 = vunpack.c.l.b16 %v255
        %v331 = vunpack.c.h.b16 %v255
        %v332 = vunpack.c.l.b16 %v256
        %v333 = vunpack.c.h.b16 %v256
        %v334 = vunpack.c.l.b16 %v257
        %v335 = vunpack.c.h.b16 %v257
        %v336 = vunpack.c.l.b16 %v258
        %v337 = vunpack.c.h.b16 %v258
        %v338 = vunpack.c.l.b16 %v259
        %v339 = vunpack.c.h.b16 %v259
        %v340 = vunpack.c.l.b16 %v260
        %v341 = vunpack.c.h.b16 %v260
        %v342 = vunpack.c.l.b16 %v261
        %v343 = vunpack.c.h.b16 %v261
        %v344 = vunpack.c.l.b16 %v262
        %v345 = vunpack.c.h.b16 %v262
        %v346 = vunpack.c.l.b16 %v263
        %v347 = vunpack.c.h.b16 %v263
        %v348 = vpack.c.b16 %v316, %v312
        %v349 = vpack.c.b16 %v317, %v313
        %v350 = vpack.c.b16 %v318, %v314
        %v351 = vpack.c.b16 %v319, %v315
        %v352 = vpack.c.b16 %v324, %v320
        %v353 = vpack.c.b16 %v325, %v321
        %v354 = vpack.c.b16 %v326, %v322
        %v355 = vpack.c.b16 %v327, %v323
        %v356 = vpack.c.b16 %v332, %v328
        %v357 = vpack.c.b16 %v333, %v329
        %v358 = vpack.c.b16 %v334, %v330
        %v359 = vpack.c.b16 %v335, %v331
        %v360 = vpack.c.b16 %v340, %v336
        %v361 = vpack.c.b16 %v341, %v337
        %v362 = vpack.c.b16 %v342, %v338
        %v363 = vpack.c.b16 %v343, %v339
        %v364 = vpack.c.b16 %v344, %v344
        %v365 = vpack.c.b16 %v345, %v345
        %v366 = vpack.c.b16 %v346, %v346
        %v367 = vpack.c.b16 %v347, %v347
        %vm384 = vcmask 588800
        %v386 = vsel %vm384, %v292, 0
        %v389 = vsel %vm384, %v293, 0
        %vm391 = vcmask 1043456
        %v393 = vsel %vm391, %v364, 0
        %v396 = vsel %vm391, %v365, 0
        %v399 = vsel %vm391, %v366, 0
        %v402 = vsel %vm391, %v367, 0
        %404 = vmatprep.subr.bf16.mxu0 0
        %405 = vmatpush1.bf16.msra.mxu0 0
        %406 = vmatprep.subr.bf16.mxu0 0
        %407 = vmatpush1.bf16.msra.mxu0 0
        %408 = vmatprep.subr.bf16.mxu0 0
        %409 = vmatpush1.bf16.msra.mxu0 0
        %410 = vmatprep.subr.bf16.mxu0 %v396
        %411 = vmatpush1.bf16.msra.mxu0 %v393
        %412 = vmatprep.subr.bf16.mxu0 %v361
        %413 = vmatpush1.bf16.msra.mxu0 %v360
        %414 = vmatprep.subr.bf16.mxu0 %v357
        %415 = vmatpush1.bf16.msra.mxu0 %v356
        %416 = vmatprep.subr.bf16.mxu0 %v353
        %417 = vmatpush1.bf16.msra.mxu0 %v352
        %418 = vmatprep.subr.bf16.mxu0 %v349
        %419 = vmatpush1.bf16.msra.mxu0 %v348
        %420 = vmatprep.subr.bf16.mxu0 0
        %421 = vmatpush2.bf16.msra.mxu0 0
        %422 = vmatprep.subr.bf16.mxu0 0
        %423 = vmatpush2.bf16.msra.mxu0 0
        %424 = vmatprep.subr.bf16.mxu0 0
        %425 = vmatpush2.bf16.msra.mxu0 0
        %426 = vmatprep.subr.bf16.mxu0 0
        %427 = vmatpush2.bf16.msra.mxu0 0
        %428 = vmatprep.subr.bf16.mxu0 0
        %429 = vmatpush2.bf16.msra.mxu0 0
        %430 = vmatprep.subr.bf16.mxu0 0
        %431 = vmatpush2.bf16.msra.mxu0 0
        %432 = vmatprep.subr.bf16.mxu0 0
        %433 = vmatpush2.bf16.msra.mxu0 0
        %434 = vmatprep.subr.bf16.mxu0 0
        %435 = vmatpush2.bf16.msra.mxu0 0
        %436 = vmatprep.mubr.bf16.mxu0 0
        %437 = vmatmul.mubr.bf16.gmra.mxu0 %v386
        %v438 = vpop.f32.mrf.mxu0
        %v439 = vadd.f32 %v269, %v438
        %v440 = vpop.f32.mrf.mxu0
        %v441 = vadd.f32 %v273, %v440
        %v442 = vpop.f32.mrf.mxu0
        %v443 = vadd.f32 %v269, %v442
        %v444 = vpop.f32.mrf.mxu0
        %v445 = vadd.f32 %v273, %v444
        %446 = vmatprep.mubr.bf16.mxu0 0
        %447 = vmatmul.mubr.bf16.gmra.mxu0 %v389
        %v448 = vpop.f32.mrf.mxu0
        %v449 = vadd.f32 %v269, %v448
        %v450 = vpop.f32.mrf.mxu0
        %v451 = vadd.f32 %v273, %v450
        %v452 = vpop.f32.mrf.mxu0
        %v453 = vpop.f32.mrf.mxu0
        %454 = vdwg.mxu0
        %455 = vmatprep.subr.bf16.mxu0 0
        %456 = vmatpush1.bf16.msra.mxu0 0
        %457 = vmatprep.subr.bf16.mxu0 0
        %458 = vmatpush1.bf16.msra.mxu0 0
        %459 = vmatprep.subr.bf16.mxu0 0
        %460 = vmatpush1.bf16.msra.mxu0 0
        %461 = vmatprep.subr.bf16.mxu0 %v402
        %462 = vmatpush1.bf16.msra.mxu0 %v399
        %463 = vmatprep.subr.bf16.mxu0 %v363
        %464 = vmatpush1.bf16.msra.mxu0 %v362
        %465 = vmatprep.subr.bf16.mxu0 %v359
        %466 = vmatpush1.bf16.msra.mxu0 %v358
        %467 = vmatprep.subr.bf16.mxu0 %v355
        %468 = vmatpush1.bf16.msra.mxu0 %v354
        %469 = vmatprep.subr.bf16.mxu0 %v351
        %470 = vmatpush1.bf16.msra.mxu0 %v350
        %471 = vmatprep.subr.bf16.mxu0 0
        %472 = vmatpush2.bf16.msra.mxu0 0
        %473 = vmatprep.subr.bf16.mxu0 0
        %474 = vmatpush2.bf16.msra.mxu0 0
        %475 = vmatprep.subr.bf16.mxu0 0
        %476 = vmatpush2.bf16.msra.mxu0 0
        %477 = vmatprep.subr.bf16.mxu0 0
        %478 = vmatpush2.bf16.msra.mxu0 0
        %479 = vmatprep.subr.bf16.mxu0 0
        %480 = vmatpush2.bf16.msra.mxu0 0
        %481 = vmatprep.subr.bf16.mxu0 0
        %482 = vmatpush2.bf16.msra.mxu0 0
        %483 = vmatprep.subr.bf16.mxu0 0
        %484 = vmatpush2.bf16.msra.mxu0 0
        %485 = vmatprep.subr.bf16.mxu0 0
        %486 = vmatpush2.bf16.msra.mxu0 0
        %487 = vmatprep.mubr.bf16.mxu0 0
        %488 = vmatmul.mubr.bf16.gmra.mxu0 %v386
        %v489 = vpop.f32.mrf.mxu0
        %v490 = vadd.f32 %v277, %v489
        %v491 = vpop.f32.mrf.mxu0
        %v492 = vadd.f32 %v281, %v491
        %v493 = vpop.f32.mrf.mxu0
        %v494 = vadd.f32 %v277, %v493
        %v495 = vpop.f32.mrf.mxu0
        %v496 = vadd.f32 %v281, %v495
        %497 = vmatprep.mubr.bf16.mxu0 0
        %498 = vmatmul.mubr.bf16.gmra.mxu0 %v389
        %v499 = vpop.f32.mrf.mxu0
        %v500 = vadd.f32 %v277, %v499
        %v501 = vpop.f32.mrf.mxu0
        %v502 = vadd.f32 %v281, %v501
        %v503 = vpop.f32.mrf.mxu0
        %v504 = vpop.f32.mrf.mxu0
        %505 = vdwg.mxu0
        %v506 = vpack.c.bf16 %v443, %v439
        %v507 = vpack.c.bf16 %v445, %v441
        %v508 = vpack.c.bf16 %v494, %v490
        %v509 = vpack.c.bf16 %v496, %v492
        %v510 = vpack.c.bf16 %v449, %v449
        %v511 = vpack.c.bf16 %v451, %v451
        %v512 = vpack.c.bf16 %v500, %v500
        %v513 = vpack.c.bf16 %v502, %v502
        %v522 = vunpack.c.l.b16 %v506
        %v523 = vunpack.c.l.b16 %v507
        %v524 = vunpack.c.l.b16 %v508
        %v525 = vunpack.c.l.b16 %v509
        %v526 = vunpack.c.h.b16 %v506
        %v527 = vunpack.c.h.b16 %v507
        %v528 = vunpack.c.h.b16 %v508
        %v529 = vunpack.c.h.b16 %v509
        %v530 = vunpack.c.l.b16 %v510
        %v531 = vunpack.c.l.b16 %v511
        %v532 = vunpack.c.l.b16 %v512
        %v533 = vunpack.c.l.b16 %v513
        %v534 = vpack.c.b16 %v523, %v522
        %v535 = vpack.c.b16 %v525, %v524
        %v536 = vpack.c.b16 %v527, %v526
        %v537 = vpack.c.b16 %v529, %v528
        %v538 = vpack.c.b16 %v531, %v530
        %v539 = vpack.c.b16 %v533, %v532
        %546 = vst [vmem:[%s238] sm:$0xff] %v534
        %547 = vst [vmem:[%s238 + $0x8] sm:$0xff] %v535
        %548 = vst [vmem:[%s238 + $0x100] sm:$0xff] %v536
        %549 = vst [vmem:[%s238 + $0x108] sm:$0xff] %v537
        %550 = vst [vmem:[%s238 + $0x200] sm:$0x11] %v538
        %551 = vst [vmem:[%s238 + $0x208] sm:$0x11] %v539
        %v552 = vld [vmem:[%s202 + $0x10] sm:$0xff]
        %v553 = vld [vmem:[%s202 + $0x18] sm:$0xff]
        %v554 = vld [vmem:[%s202 + $0x110] sm:$0xff]
        %v555 = vld [vmem:[%s202 + $0x118] sm:$0xff]
        %v556 = vld [vmem:[%s202 + $0x210] sm:$0xff]
        %v557 = vld [vmem:[%s202 + $0x218] sm:$0xff]
        %v558 = vld [vmem:[%s202 + $0x310] sm:$0xff]
        %v559 = vld [vmem:[%s202 + $0x318] sm:$0xff]
        %v560 = vld [vmem:[%s202 + $0x410] sm:$0xff]
        %v561 = vld [vmem:[%s202 + $0x418] sm:$0xff]
        %v562 = vld [vmem:[%s202 + $0x510] sm:$0xff]
        %v563 = vld [vmem:[%s202 + $0x518] sm:$0xff]
        %v564 = vld [vmem:[%s202 + $0x610] sm:$0xff]
        %v565 = vld [vmem:[%s202 + $0x618] sm:$0xff]
        %v566 = vld [vmem:[%s202 + $0x710] sm:$0xff]
        %v567 = vld [vmem:[%s202 + $0x718] sm:$0xff]
        %v568 = vld [vmem:[%s202 + $0x810] sm:$0xff]
        %v569 = vld [vmem:[%s202 + $0x818] sm:$0xff]
        %v570 = vld [vmem:[%s211 + $0x4] sm:$0xf]
        %v572 = vlaneseq
        %v573 = vshrl.u32 %v572, 7
        %v574 = vsub.s32 0, %v573
        %v575 = vrot.slane %v570, %v574
        %v576 = vlaneseq
        %v577 = vshrl.u32 %v576, 7
        %v578 = vsub.s32 1, %v577
        %v579 = vrot.slane %v570, %v578
        %v580 = vlaneseq
        %v581 = vshrl.u32 %v580, 7
        %v582 = vsub.s32 2, %v581
        %v583 = vrot.slane %v570, %v582
        %v584 = vlaneseq
        %v585 = vshrl.u32 %v584, 7
        %v586 = vsub.s32 3, %v585
        %v587 = vrot.slane %v570, %v586
        %v610 = vunpack.c.l.b16 %v552
        %v611 = vunpack.c.h.b16 %v552
        %v612 = vunpack.c.l.b16 %v553
        %v613 = vunpack.c.h.b16 %v553
        %v614 = vunpack.c.l.b16 %v554
        %v615 = vunpack.c.h.b16 %v554
        %v616 = vunpack.c.l.b16 %v555
        %v617 = vunpack.c.h.b16 %v555
        %v618 = vunpack.c.l.b16 %v556
        %v619 = vunpack.c.h.b16 %v556
        %v620 = vunpack.c.l.b16 %v557
        %v621 = vunpack.c.h.b16 %v557
        %v622 = vunpack.c.l.b16 %v558
        %v623 = vunpack.c.h.b16 %v558
        %v624 = vunpack.c.l.b16 %v559
        %v625 = vunpack.c.h.b16 %v559
        %v626 = vunpack.c.l.b16 %v560
        %v627 = vunpack.c.h.b16 %v560
        %v628 = vunpack.c.l.b16 %v561
        %v629 = vunpack.c.h.b16 %v561
        %v630 = vunpack.c.l.b16 %v562
        %v631 = vunpack.c.h.b16 %v562
        %v632 = vunpack.c.l.b16 %v563
        %v633 = vunpack.c.h.b16 %v563
        %v634 = vunpack.c.l.b16 %v564
        %v635 = vunpack.c.h.b16 %v564
        %v636 = vunpack.c.l.b16 %v565
        %v637 = vunpack.c.h.b16 %v565
        %v638 = vunpack.c.l.b16 %v566
        %v639 = vunpack.c.h.b16 %v566
        %v640 = vunpack.c.l.b16 %v567
        %v641 = vunpack.c.h.b16 %v567
        %v642 = vunpack.c.l.b16 %v568
        %v643 = vunpack.c.h.b16 %v568
        %v644 = vunpack.c.l.b16 %v569
        %v645 = vunpack.c.h.b16 %v569
        %v646 = vpack.c.b16 %v614, %v610
        %v647 = vpack.c.b16 %v615, %v611
        %v648 = vpack.c.b16 %v616, %v612
        %v649 = vpack.c.b16 %v617, %v613
        %v650 = vpack.c.b16 %v622, %v618
        %v651 = vpack.c.b16 %v623, %v619
        %v652 = vpack.c.b16 %v624, %v620
        %v653 = vpack.c.b16 %v625, %v621
        %v654 = vpack.c.b16 %v630, %v626
        %v655 = vpack.c.b16 %v631, %v627
        %v656 = vpack.c.b16 %v632, %v628
        %v657 = vpack.c.b16 %v633, %v629
        %v658 = vpack.c.b16 %v638, %v634
        %v659 = vpack.c.b16 %v639, %v635
        %v660 = vpack.c.b16 %v640, %v636
        %v661 = vpack.c.b16 %v641, %v637
        %v662 = vpack.c.b16 %v642, %v642
        %v663 = vpack.c.b16 %v643, %v643
        %v664 = vpack.c.b16 %v644, %v644
        %v665 = vpack.c.b16 %v645, %v645
        %v683 = vsel %vm391, %v662, 0
        %v686 = vsel %vm391, %v663, 0
        %v689 = vsel %vm391, %v664, 0
        %v692 = vsel %vm391, %v665, 0
        %694 = vmatprep.subr.bf16.mxu0 0
        %695 = vmatpush1.bf16.msra.mxu0 0
        %696 = vmatprep.subr.bf16.mxu0 0
        %697 = vmatpush1.bf16.msra.mxu0 0
        %698 = vmatprep.subr.bf16.mxu0 0
        %699 = vmatpush1.bf16.msra.mxu0 0
        %700 = vmatprep.subr.bf16.mxu0 %v686
        %701 = vmatpush1.bf16.msra.mxu0 %v683
        %702 = vmatprep.subr.bf16.mxu0 %v659
        %703 = vmatpush1.bf16.msra.mxu0 %v658
        %704 = vmatprep.subr.bf16.mxu0 %v655
        %705 = vmatpush1.bf16.msra.mxu0 %v654
        %706 = vmatprep.subr.bf16.mxu0 %v651
        %707 = vmatpush1.bf16.msra.mxu0 %v650
        %708 = vmatprep.subr.bf16.mxu0 %v647
        %709 = vmatpush1.bf16.msra.mxu0 %v646
        %710 = vmatprep.subr.bf16.mxu0 0
        %711 = vmatpush2.bf16.msra.mxu0 0
        %712 = vmatprep.subr.bf16.mxu0 0
        %713 = vmatpush2.bf16.msra.mxu0 0
        %714 = vmatprep.subr.bf16.mxu0 0
        %715 = vmatpush2.bf16.msra.mxu0 0
        %716 = vmatprep.subr.bf16.mxu0 0
        %717 = vmatpush2.bf16.msra.mxu0 0
        %718 = vmatprep.subr.bf16.mxu0 0
        %719 = vmatpush2.bf16.msra.mxu0 0
        %720 = vmatprep.subr.bf16.mxu0 0
        %721 = vmatpush2.bf16.msra.mxu0 0
        %722 = vmatprep.subr.bf16.mxu0 0
        %723 = vmatpush2.bf16.msra.mxu0 0
        %724 = vmatprep.subr.bf16.mxu0 0
        %725 = vmatpush2.bf16.msra.mxu0 0
        %726 = vmatprep.mubr.bf16.mxu0 0
        %727 = vmatmul.mubr.bf16.gmra.mxu0 %v386
        %v728 = vpop.f32.mrf.mxu0
        %v729 = vadd.f32 %v575, %v728
        %v730 = vpop.f32.mrf.mxu0
        %v731 = vadd.f32 %v579, %v730
        %v732 = vpop.f32.mrf.mxu0
        %v733 = vadd.f32 %v575, %v732
        %v734 = vpop.f32.mrf.mxu0
        %v735 = vadd.f32 %v579, %v734
        %736 = vmatprep.mubr.bf16.mxu0 0
        %737 = vmatmul.mubr.bf16.gmra.mxu0 %v389
        %v738 = vpop.f32.mrf.mxu0
        %v739 = vadd.f32 %v575, %v738
        %v740 = vpop.f32.mrf.mxu0
        %v741 = vadd.f32 %v579, %v740
        %v742 = vpop.f32.mrf.mxu0
        %v743 = vpop.f32.mrf.mxu0
        %744 = vdwg.mxu0
        %745 = vmatprep.subr.bf16.mxu0 0
        %746 = vmatpush1.bf16.msra.mxu0 0
        %747 = vmatprep.subr.bf16.mxu0 0
        %748 = vmatpush1.bf16.msra.mxu0 0
        %749 = vmatprep.subr.bf16.mxu0 0
        %750 = vmatpush1.bf16.msra.mxu0 0
        %751 = vmatprep.subr.bf16.mxu0 %v692
        %752 = vmatpush1.bf16.msra.mxu0 %v689
        %753 = vmatprep.subr.bf16.mxu0 %v661
        %754 = vmatpush1.bf16.msra.mxu0 %v660
        %755 = vmatprep.subr.bf16.mxu0 %v657
        %756 = vmatpush1.bf16.msra.mxu0 %v656
        %757 = vmatprep.subr.bf16.mxu0 %v653
        %758 = vmatpush1.bf16.msra.mxu0 %v652
        %759 = vmatprep.subr.bf16.mxu0 %v649
        %760 = vmatpush1.bf16.msra.mxu0 %v648
        %761 = vmatprep.subr.bf16.mxu0 0
        %762 = vmatpush2.bf16.msra.mxu0 0
        %763 = vmatprep.subr.bf16.mxu0 0
        %764 = vmatpush2.bf16.msra.mxu0 0
        %765 = vmatprep.subr.bf16.mxu0 0
        %766 = vmatpush2.bf16.msra.mxu0 0
        %767 = vmatprep.subr.bf16.mxu0 0
        %768 = vmatpush2.bf16.msra.mxu0 0
        %769 = vmatprep.subr.bf16.mxu0 0
        %770 = vmatpush2.bf16.msra.mxu0 0
        %771 = vmatprep.subr.bf16.mxu0 0
        %772 = vmatpush2.bf16.msra.mxu0 0
        %773 = vmatprep.subr.bf16.mxu0 0
        %774 = vmatpush2.bf16.msra.mxu0 0
        %775 = vmatprep.subr.bf16.mxu0 0
        %776 = vmatpush2.bf16.msra.mxu0 0
        %777 = vmatprep.mubr.bf16.mxu0 0
        %778 = vmatmul.mubr.bf16.gmra.mxu0 %v386
        %v779 = vpop.f32.mrf.mxu0
        %v780 = vadd.f32 %v583, %v779
        %v781 = vpop.f32.mrf.mxu0
        %v782 = vadd.f32 %v587, %v781
        %v783 = vpop.f32.mrf.mxu0
        %v784 = vadd.f32 %v583, %v783
        %v785 = vpop.f32.mrf.mxu0
        %v786 = vadd.f32 %v587, %v785
        %787 = vmatprep.mubr.bf16.mxu0 0
        %788 = vmatmul.mubr.bf16.gmra.mxu0 %v389
        %v789 = vpop.f32.mrf.mxu0
        %v790 = vadd.f32 %v583, %v789
        %v791 = vpop.f32.mrf.mxu0
        %v792 = vadd.f32 %v587, %v791
        %v793 = vpop.f32.mrf.mxu0
        %v794 = vpop.f32.mrf.mxu0
        %795 = vdwg.mxu0
        %v796 = vpack.c.bf16 %v733, %v729
        %v797 = vpack.c.bf16 %v735, %v731
        %v798 = vpack.c.bf16 %v784, %v780
        %v799 = vpack.c.bf16 %v786, %v782
        %v800 = vpack.c.bf16 %v739, %v739
        %v801 = vpack.c.bf16 %v741, %v741
        %v802 = vpack.c.bf16 %v790, %v790
        %v803 = vpack.c.bf16 %v792, %v792
        %v812 = vunpack.c.l.b16 %v796
        %v813 = vunpack.c.l.b16 %v797
        %v814 = vunpack.c.l.b16 %v798
        %v815 = vunpack.c.l.b16 %v799
        %v816 = vunpack.c.h.b16 %v796
        %v817 = vunpack.c.h.b16 %v797
        %v818 = vunpack.c.h.b16 %v798
        %v819 = vunpack.c.h.b16 %v799
        %v820 = vunpack.c.l.b16 %v800
        %v821 = vunpack.c.l.b16 %v801
        %v822 = vunpack.c.l.b16 %v802
        %v823 = vunpack.c.l.b16 %v803
        %v824 = vpack.c.b16 %v813, %v812
        %v825 = vpack.c.b16 %v815, %v814
        %v826 = vpack.c.b16 %v817, %v816
        %v827 = vpack.c.b16 %v819, %v818
        %v828 = vpack.c.b16 %v821, %v820
        %v829 = vpack.c.b16 %v823, %v822
        %836 = vst [vmem:[%s238 + $0x10] sm:$0xff] %v824
        %837 = vst [vmem:[%s238 + $0x18] sm:$0xff] %v825
        %838 = vst [vmem:[%s238 + $0x110] sm:$0xff] %v826
        %839 = vst [vmem:[%s238 + $0x118] sm:$0xff] %v827
        %840 = vst [vmem:[%s238 + $0x210] sm:$0x11] %v828
        %841 = vst [vmem:[%s238 + $0x218] sm:$0x11] %v829
        %v842 = vld [vmem:[%s202 + $0x20] sm:$0xff]
        %v843 = vld [vmem:[%s202 + $0x28] sm:$0xff]
        %v844 = vld [vmem:[%s202 + $0x120] sm:$0xff]
        %v845 = vld [vmem:[%s202 + $0x128] sm:$0xff]
        %v846 = vld [vmem:[%s202 + $0x220] sm:$0xff]
        %v847 = vld [vmem:[%s202 + $0x228] sm:$0xff]
        %v848 = vld [vmem:[%s202 + $0x320] sm:$0xff]
        %v849 = vld [vmem:[%s202 + $0x328] sm:$0xff]
        %v850 = vld [vmem:[%s202 + $0x420] sm:$0xff]
        %v851 = vld [vmem:[%s202 + $0x428] sm:$0xff]
        %v852 = vld [vmem:[%s202 + $0x520] sm:$0xff]
        %v853 = vld [vmem:[%s202 + $0x528] sm:$0xff]
        %v854 = vld [vmem:[%s202 + $0x620] sm:$0xff]
        %v855 = vld [vmem:[%s202 + $0x628] sm:$0xff]
        %v856 = vld [vmem:[%s202 + $0x720] sm:$0xff]
        %v857 = vld [vmem:[%s202 + $0x728] sm:$0xff]
        %v858 = vld [vmem:[%s202 + $0x820] sm:$0xff]
        %v859 = vld [vmem:[%s202 + $0x828] sm:$0xff]
        %v860 = vld [vmem:[%s211 + $0x8] sm:$0xf]
        %v862 = vlaneseq
        %v863 = vshrl.u32 %v862, 7
        %v864 = vsub.s32 0, %v863
        %v865 = vrot.slane %v860, %v864
        %v866 = vlaneseq
        %v867 = vshrl.u32 %v866, 7
        %v868 = vsub.s32 1, %v867
        %v869 = vrot.slane %v860, %v868
        %v870 = vlaneseq
        %v871 = vshrl.u32 %v870, 7
        %v872 = vsub.s32 2, %v871
        %v873 = vrot.slane %v860, %v872
        %v874 = vlaneseq
        %v875 = vshrl.u32 %v874, 7
        %v876 = vsub.s32 3, %v875
        %v877 = vrot.slane %v860, %v876
        %v900 = vunpack.c.l.b16 %v842
        %v901 = vunpack.c.h.b16 %v842
        %v902 = vunpack.c.l.b16 %v843
        %v903 = vunpack.c.h.b16 %v843
        %v904 = vunpack.c.l.b16 %v844
        %v905 = vunpack.c.h.b16 %v844
        %v906 = vunpack.c.l.b16 %v845
        %v907 = vunpack.c.h.b16 %v845
        %v908 = vunpack.c.l.b16 %v846
        %v909 = vunpack.c.h.b16 %v846
        %v910 = vunpack.c.l.b16 %v847
        %v911 = vunpack.c.h.b16 %v847
        %v912 = vunpack.c.l.b16 %v848
        %v913 = vunpack.c.h.b16 %v848
        %v914 = vunpack.c.l.b16 %v849
        %v915 = vunpack.c.h.b16 %v849
        %v916 = vunpack.c.l.b16 %v850
        %v917 = vunpack.c.h.b16 %v850
        %v918 = vunpack.c.l.b16 %v851
        %v919 = vunpack.c.h.b16 %v851
        %v920 = vunpack.c.l.b16 %v852
        %v921 = vunpack.c.h.b16 %v852
        %v922 = vunpack.c.l.b16 %v853
        %v923 = vunpack.c.h.b16 %v853
        %v924 = vunpack.c.l.b16 %v854
        %v925 = vunpack.c.h.b16 %v854
        %v926 = vunpack.c.l.b16 %v855
        %v927 = vunpack.c.h.b16 %v855
        %v928 = vunpack.c.l.b16 %v856
        %v929 = vunpack.c.h.b16 %v856
        %v930 = vunpack.c.l.b16 %v857
        %v931 = vunpack.c.h.b16 %v857
        %v932 = vunpack.c.l.b16 %v858
        %v933 = vunpack.c.h.b16 %v858
        %v934 = vunpack.c.l.b16 %v859
        %v935 = vunpack.c.h.b16 %v859
        %v936 = vpack.c.b16 %v904, %v900
        %v937 = vpack.c.b16 %v905, %v901
        %v938 = vpack.c.b16 %v906, %v902
        %v939 = vpack.c.b16 %v907, %v903
        %v940 = vpack.c.b16 %v912, %v908
        %v941 = vpack.c.b16 %v913, %v909
        %v942 = vpack.c.b16 %v914, %v910
        %v943 = vpack.c.b16 %v915, %v911
        %v944 = vpack.c.b16 %v920, %v916
        %v945 = vpack.c.b16 %v921, %v917
        %v946 = vpack.c.b16 %v922, %v918
        %v947 = vpack.c.b16 %v923, %v919
        %v948 = vpack.c.b16 %v928, %v924
        %v949 = vpack.c.b16 %v929, %v925
        %v950 = vpack.c.b16 %v930, %v926
        %v951 = vpack.c.b16 %v931, %v927
        %v952 = vpack.c.b16 %v932, %v932
        %v953 = vpack.c.b16 %v933, %v933
        %v954 = vpack.c.b16 %v934, %v934
        %v955 = vpack.c.b16 %v935, %v935
        %v973 = vsel %vm391, %v952, 0
        %v976 = vsel %vm391, %v953, 0
        %v979 = vsel %vm391, %v954, 0
        %v982 = vsel %vm391, %v955, 0
        %984 = vmatprep.subr.bf16.mxu0 0
        %985 = vmatpush1.bf16.msra.mxu0 0
        %986 = vmatprep.subr.bf16.mxu0 0
        %987 = vmatpush1.bf16.msra.mxu0 0
        %988 = vmatprep.subr.bf16.mxu0 0
        %989 = vmatpush1.bf16.msra.mxu0 0
        %990 = vmatprep.subr.bf16.mxu0 %v976
        %991 = vmatpush1.bf16.msra.mxu0 %v973
        %992 = vmatprep.subr.bf16.mxu0 %v949
        %993 = vmatpush1.bf16.msra.mxu0 %v948
        %994 = vmatprep.subr.bf16.mxu0 %v945
        %995 = vmatpush1.bf16.msra.mxu0 %v944
        %996 = vmatprep.subr.bf16.mxu0 %v941
        %997 = vmatpush1.bf16.msra.mxu0 %v940
        %998 = vmatprep.subr.bf16.mxu0 %v937
        %999 = vmatpush1.bf16.msra.mxu0 %v936
        %1000 = vmatprep.subr.bf16.mxu0 0
        %1001 = vmatpush2.bf16.msra.mxu0 0
        %1002 = vmatprep.subr.bf16.mxu0 0
        %1003 = vmatpush2.bf16.msra.mxu0 0
        %1004 = vmatprep.subr.bf16.mxu0 0
        %1005 = vmatpush2.bf16.msra.mxu0 0
        %1006 = vmatprep.subr.bf16.mxu0 0
        %1007 = vmatpush2.bf16.msra.mxu0 0
        %1008 = vmatprep.subr.bf16.mxu0 0
        %1009 = vmatpush2.bf16.msra.mxu0 0
        %1010 = vmatprep.subr.bf16.mxu0 0
        %1011 = vmatpush2.bf16.msra.mxu0 0
        %1012 = vmatprep.subr.bf16.mxu0 0
        %1013 = vmatpush2.bf16.msra.mxu0 0
        %1014 = vmatprep.subr.bf16.mxu0 0
        %1015 = vmatpush2.bf16.msra.mxu0 0
        %1016 = vmatprep.mubr.bf16.mxu0 0
        %1017 = vmatmul.mubr.bf16.gmra.mxu0 %v386
        %v1018 = vpop.f32.mrf.mxu0
        %v1019 = vadd.f32 %v865, %v1018
        %v1020 = vpop.f32.mrf.mxu0
        %v1021 = vadd.f32 %v869, %v1020
        %v1022 = vpop.f32.mrf.mxu0
        %v1023 = vadd.f32 %v865, %v1022
        %v1024 = vpop.f32.mrf.mxu0
        %v1025 = vadd.f32 %v869, %v1024
        %1026 = vmatprep.mubr.bf16.mxu0 0
        %1027 = vmatmul.mubr.bf16.gmra.mxu0 %v389
        %v1028 = vpop.f32.mrf.mxu0
        %v1029 = vadd.f32 %v865, %v1028
        %v1030 = vpop.f32.mrf.mxu0
        %v1031 = vadd.f32 %v869, %v1030
        %v1032 = vpop.f32.mrf.mxu0
        %v1033 = vpop.f32.mrf.mxu0
        %1034 = vdwg.mxu0
        %1035 = vmatprep.subr.bf16.mxu0 0
        %1036 = vmatpush1.bf16.msra.mxu0 0
        %1037 = vmatprep.subr.bf16.mxu0 0
        %1038 = vmatpush1.bf16.msra.mxu0 0
        %1039 = vmatprep.subr.bf16.mxu0 0
        %1040 = vmatpush1.bf16.msra.mxu0 0
        %1041 = vmatprep.subr.bf16.mxu0 %v982
        %1042 = vmatpush1.bf16.msra.mxu0 %v979
        %1043 = vmatprep.subr.bf16.mxu0 %v951
        %1044 = vmatpush1.bf16.msra.mxu0 %v950
        %1045 = vmatprep.subr.bf16.mxu0 %v947
        %1046 = vmatpush1.bf16.msra.mxu0 %v946
        %1047 = vmatprep.subr.bf16.mxu0 %v943
        %1048 = vmatpush1.bf16.msra.mxu0 %v942
        %1049 = vmatprep.subr.bf16.mxu0 %v939
        %1050 = vmatpush1.bf16.msra.mxu0 %v938
        %1051 = vmatprep.subr.bf16.mxu0 0
        %1052 = vmatpush2.bf16.msra.mxu0 0
        %1053 = vmatprep.subr.bf16.mxu0 0
        %1054 = vmatpush2.bf16.msra.mxu0 0
        %1055 = vmatprep.subr.bf16.mxu0 0
        %1056 = vmatpush2.bf16.msra.mxu0 0
        %1057 = vmatprep.subr.bf16.mxu0 0
        %1058 = vmatpush2.bf16.msra.mxu0 0
        %1059 = vmatprep.subr.bf16.mxu0 0
        %1060 = vmatpush2.bf16.msra.mxu0 0
        %1061 = vmatprep.subr.bf16.mxu0 0
        %1062 = vmatpush2.bf16.msra.mxu0 0
        %1063 = vmatprep.subr.bf16.mxu0 0
        %1064 = vmatpush2.bf16.msra.mxu0 0
        %1065 = vmatprep.subr.bf16.mxu0 0
        %1066 = vmatpush2.bf16.msra.mxu0 0
        %1067 = vmatprep.mubr.bf16.mxu0 0
        %1068 = vmatmul.mubr.bf16.gmra.mxu0 %v386
        %v1069 = vpop.f32.mrf.mxu0
        %v1070 = vadd.f32 %v873, %v1069
        %v1071 = vpop.f32.mrf.mxu0
        %v1072 = vadd.f32 %v877, %v1071
        %v1073 = vpop.f32.mrf.mxu0
        %v1074 = vadd.f32 %v873, %v1073
        %v1075 = vpop.f32.mrf.mxu0
        %v1076 = vadd.f32 %v877, %v1075
        %1077 = vmatprep.mubr.bf16.mxu0 0
        %1078 = vmatmul.mubr.bf16.gmra.mxu0 %v389
        %v1079 = vpop.f32.mrf.mxu0
        %v1080 = vadd.f32 %v873, %v1079
        %v1081 = vpop.f32.mrf.mxu0
        %v1082 = vadd.f32 %v877, %v1081
        %v1083 = vpop.f32.mrf.mxu0
        %v1084 = vpop.f32.mrf.mxu0
        %1085 = vdwg.mxu0
        %v1086 = vpack.c.bf16 %v1023, %v1019
        %v1087 = vpack.c.bf16 %v1025, %v1021
        %v1088 = vpack.c.bf16 %v1074, %v1070
        %v1089 = vpack.c.bf16 %v1076, %v1072
        %v1090 = vpack.c.bf16 %v1029, %v1029
        %v1091 = vpack.c.bf16 %v1031, %v1031
        %v1092 = vpack.c.bf16 %v1080, %v1080
        %v1093 = vpack.c.bf16 %v1082, %v1082
        %v1102 = vunpack.c.l.b16 %v1086
        %v1103 = vunpack.c.l.b16 %v1087
        %v1104 = vunpack.c.l.b16 %v1088
        %v1105 = vunpack.c.l.b16 %v1089
        %v1106 = vunpack.c.h.b16 %v1086
        %v1107 = vunpack.c.h.b16 %v1087
        %v1108 = vunpack.c.h.b16 %v1088
        %v1109 = vunpack.c.h.b16 %v1089
        %v1110 = vunpack.c.l.b16 %v1090
        %v1111 = vunpack.c.l.b16 %v1091
        %v1112 = vunpack.c.l.b16 %v1092
        %v1113 = vunpack.c.l.b16 %v1093
        %v1114 = vpack.c.b16 %v1103, %v1102
        %v1115 = vpack.c.b16 %v1105, %v1104
        %v1116 = vpack.c.b16 %v1107, %v1106
        %v1117 = vpack.c.b16 %v1109, %v1108
        %v1118 = vpack.c.b16 %v1111, %v1110
        %v1119 = vpack.c.b16 %v1113, %v1112
        %1126 = vst [vmem:[%s238 + $0x20] sm:$0xff] %v1114
        %1127 = vst [vmem:[%s238 + $0x28] sm:$0xff] %v1115
        %1128 = vst [vmem:[%s238 + $0x120] sm:$0xff] %v1116
        %1129 = vst [vmem:[%s238 + $0x128] sm:$0xff] %v1117
        %1130 = vst [vmem:[%s238 + $0x220] sm:$0x11] %v1118
        %1131 = vst [vmem:[%s238 + $0x228] sm:$0x11] %v1119
        %v1132 = vld [vmem:[%s202 + $0x30] sm:$0xff]
        %v1133 = vld [vmem:[%s202 + $0x38] sm:$0xff]
        %v1134 = vld [vmem:[%s202 + $0x130] sm:$0xff]
        %v1135 = vld [vmem:[%s202 + $0x138] sm:$0xff]
        %v1136 = vld [vmem:[%s202 + $0x230] sm:$0xff]
        %v1137 = vld [vmem:[%s202 + $0x238] sm:$0xff]
        %v1138 = vld [vmem:[%s202 + $0x330] sm:$0xff]
        %v1139 = vld [vmem:[%s202 + $0x338] sm:$0xff]
        %v1140 = vld [vmem:[%s202 + $0x430] sm:$0xff]
        %v1141 = vld [vmem:[%s202 + $0x438] sm:$0xff]
        %v1142 = vld [vmem:[%s202 + $0x530] sm:$0xff]
        %v1143 = vld [vmem:[%s202 + $0x538] sm:$0xff]
        %v1144 = vld [vmem:[%s202 + $0x630] sm:$0xff]
        %v1145 = vld [vmem:[%s202 + $0x638] sm:$0xff]
        %v1146 = vld [vmem:[%s202 + $0x730] sm:$0xff]
        %v1147 = vld [vmem:[%s202 + $0x738] sm:$0xff]
        %v1148 = vld [vmem:[%s202 + $0x830] sm:$0xff]
        %v1149 = vld [vmem:[%s202 + $0x838] sm:$0xff]
        %v1150 = vld [vmem:[%s211 + $0xc] sm:$0xf]
        %v1152 = vlaneseq
        %v1153 = vshrl.u32 %v1152, 7
        %v1154 = vsub.s32 0, %v1153
        %v1155 = vrot.slane %v1150, %v1154
        %v1156 = vlaneseq
        %v1157 = vshrl.u32 %v1156, 7
        %v1158 = vsub.s32 1, %v1157
        %v1159 = vrot.slane %v1150, %v1158
        %v1160 = vlaneseq
        %v1161 = vshrl.u32 %v1160, 7
        %v1162 = vsub.s32 2, %v1161
        %v1163 = vrot.slane %v1150, %v1162
        %v1164 = vlaneseq
        %v1165 = vshrl.u32 %v1164, 7
        %v1166 = vsub.s32 3, %v1165
        %v1167 = vrot.slane %v1150, %v1166
        %v1190 = vunpack.c.l.b16 %v1132
        %v1191 = vunpack.c.h.b16 %v1132
        %v1192 = vunpack.c.l.b16 %v1133
        %v1193 = vunpack.c.h.b16 %v1133
        %v1194 = vunpack.c.l.b16 %v1134
        %v1195 = vunpack.c.h.b16 %v1134
        %v1196 = vunpack.c.l.b16 %v1135
        %v1197 = vunpack.c.h.b16 %v1135
        %v1198 = vunpack.c.l.b16 %v1136
        %v1199 = vunpack.c.h.b16 %v1136
        %v1200 = vunpack.c.l.b16 %v1137
        %v1201 = vunpack.c.h.b16 %v1137
        %v1202 = vunpack.c.l.b16 %v1138
        %v1203 = vunpack.c.h.b16 %v1138
        %v1204 = vunpack.c.l.b16 %v1139
        %v1205 = vunpack.c.h.b16 %v1139
        %v1206 = vunpack.c.l.b16 %v1140
        %v1207 = vunpack.c.h.b16 %v1140
        %v1208 = vunpack.c.l.b16 %v1141
        %v1209 = vunpack.c.h.b16 %v1141
        %v1210 = vunpack.c.l.b16 %v1142
        %v1211 = vunpack.c.h.b16 %v1142
        %v1212 = vunpack.c.l.b16 %v1143
        %v1213 = vunpack.c.h.b16 %v1143
        %v1214 = vunpack.c.l.b16 %v1144
        %v1215 = vunpack.c.h.b16 %v1144
        %v1216 = vunpack.c.l.b16 %v1145
        %v1217 = vunpack.c.h.b16 %v1145
        %v1218 = vunpack.c.l.b16 %v1146
        %v1219 = vunpack.c.h.b16 %v1146
        %v1220 = vunpack.c.l.b16 %v1147
        %v1221 = vunpack.c.h.b16 %v1147
        %v1222 = vunpack.c.l.b16 %v1148
        %v1223 = vunpack.c.h.b16 %v1148
        %v1224 = vunpack.c.l.b16 %v1149
        %v1225 = vunpack.c.h.b16 %v1149
        %v1226 = vpack.c.b16 %v1194, %v1190
        %v1227 = vpack.c.b16 %v1195, %v1191
        %v1228 = vpack.c.b16 %v1196, %v1192
        %v1229 = vpack.c.b16 %v1197, %v1193
        %v1230 = vpack.c.b16 %v1202, %v1198
        %v1231 = vpack.c.b16 %v1203, %v1199
        %v1232 = vpack.c.b16 %v1204, %v1200
        %v1233 = vpack.c.b16 %v1205, %v1201
        %v1234 = vpack.c.b16 %v1210, %v1206
        %v1235 = vpack.c.b16 %v1211, %v1207
        %v1236 = vpack.c.b16 %v1212, %v1208
        %v1237 = vpack.c.b16 %v1213, %v1209
        %v1238 = vpack.c.b16 %v1218, %v1214
        %v1239 = vpack.c.b16 %v1219, %v1215
        %v1240 = vpack.c.b16 %v1220, %v1216
        %v1241 = vpack.c.b16 %v1221, %v1217
        %v1242 = vpack.c.b16 %v1222, %v1222
        %v1243 = vpack.c.b16 %v1223, %v1223
        %v1244 = vpack.c.b16 %v1224, %v1224
        %v1245 = vpack.c.b16 %v1225, %v1225
        %v1263 = vsel %vm391, %v1242, 0
        %v1266 = vsel %vm391, %v1243, 0
        %v1269 = vsel %vm391, %v1244, 0
        %v1272 = vsel %vm391, %v1245, 0
        %1274 = vmatprep.subr.bf16.mxu0 0
        %1275 = vmatpush1.bf16.msra.mxu0 0
        %1276 = vmatprep.subr.bf16.mxu0 0
        %1277 = vmatpush1.bf16.msra.mxu0 0
        %1278 = vmatprep.subr.bf16.mxu0 0
        %1279 = vmatpush1.bf16.msra.mxu0 0
        %1280 = vmatprep.subr.bf16.mxu0 %v1266
        %1281 = vmatpush1.bf16.msra.mxu0 %v1263
        %1282 = vmatprep.subr.bf16.mxu0 %v1239
        %1283 = vmatpush1.bf16.msra.mxu0 %v1238
        %1284 = vmatprep.subr.bf16.mxu0 %v1235
        %1285 = vmatpush1.bf16.msra.mxu0 %v1234
        %1286 = vmatprep.subr.bf16.mxu0 %v1231
        %1287 = vmatpush1.bf16.msra.mxu0 %v1230
        %1288 = vmatprep.subr.bf16.mxu0 %v1227
        %1289 = vmatpush1.bf16.msra.mxu0 %v1226
        %1290 = vmatprep.subr.bf16.mxu0 0
        %1291 = vmatpush2.bf16.msra.mxu0 0
        %1292 = vmatprep.subr.bf16.mxu0 0
        %1293 = vmatpush2.bf16.msra.mxu0 0
        %1294 = vmatprep.subr.bf16.mxu0 0
        %1295 = vmatpush2.bf16.msra.mxu0 0
        %1296 = vmatprep.subr.bf16.mxu0 0
        %1297 = vmatpush2.bf16.msra.mxu0 0
        %1298 = vmatprep.subr.bf16.mxu0 0
        %1299 = vmatpush2.bf16.msra.mxu0 0
        %1300 = vmatprep.subr.bf16.mxu0 0
        %1301 = vmatpush2.bf16.msra.mxu0 0
        %1302 = vmatprep.subr.bf16.mxu0 0
        %1303 = vmatpush2.bf16.msra.mxu0 0
        %1304 = vmatprep.subr.bf16.mxu0 0
        %1305 = vmatpush2.bf16.msra.mxu0 0
        %1306 = vmatprep.mubr.bf16.mxu0 0
        %1307 = vmatmul.mubr.bf16.gmra.mxu0 %v386
        %v1308 = vpop.f32.mrf.mxu0
        %v1309 = vadd.f32 %v1155, %v1308
        %v1310 = vpop.f32.mrf.mxu0
        %v1311 = vadd.f32 %v1159, %v1310
        %v1312 = vpop.f32.mrf.mxu0
        %v1313 = vadd.f32 %v1155, %v1312
        %v1314 = vpop.f32.mrf.mxu0
        %v1315 = vadd.f32 %v1159, %v1314
        %1316 = vmatprep.mubr.bf16.mxu0 0
        %1317 = vmatmul.mubr.bf16.gmra.mxu0 %v389
        %v1318 = vpop.f32.mrf.mxu0
        %v1319 = vadd.f32 %v1155, %v1318
        %v1320 = vpop.f32.mrf.mxu0
        %v1321 = vadd.f32 %v1159, %v1320
        %v1322 = vpop.f32.mrf.mxu0
        %v1323 = vpop.f32.mrf.mxu0
        %1324 = vdwg.mxu0
        %1325 = vmatprep.subr.bf16.mxu0 0
        %1326 = vmatpush1.bf16.msra.mxu0 0
        %1327 = vmatprep.subr.bf16.mxu0 0
        %1328 = vmatpush1.bf16.msra.mxu0 0
        %1329 = vmatprep.subr.bf16.mxu0 0
        %1330 = vmatpush1.bf16.msra.mxu0 0
        %1331 = vmatprep.subr.bf16.mxu0 %v1272
        %1332 = vmatpush1.bf16.msra.mxu0 %v1269
        %1333 = vmatprep.subr.bf16.mxu0 %v1241
        %1334 = vmatpush1.bf16.msra.mxu0 %v1240
        %1335 = vmatprep.subr.bf16.mxu0 %v1237
        %1336 = vmatpush1.bf16.msra.mxu0 %v1236
        %1337 = vmatprep.subr.bf16.mxu0 %v1233
        %1338 = vmatpush1.bf16.msra.mxu0 %v1232
        %1339 = vmatprep.subr.bf16.mxu0 %v1229
        %1340 = vmatpush1.bf16.msra.mxu0 %v1228
        %1341 = vmatprep.subr.bf16.mxu0 0
        %1342 = vmatpush2.bf16.msra.mxu0 0
        %1343 = vmatprep.subr.bf16.mxu0 0
        %1344 = vmatpush2.bf16.msra.mxu0 0
        %1345 = vmatprep.subr.bf16.mxu0 0
        %1346 = vmatpush2.bf16.msra.mxu0 0
        %1347 = vmatprep.subr.bf16.mxu0 0
        %1348 = vmatpush2.bf16.msra.mxu0 0
        %1349 = vmatprep.subr.bf16.mxu0 0
        %1350 = vmatpush2.bf16.msra.mxu0 0
        %1351 = vmatprep.subr.bf16.mxu0 0
        %1352 = vmatpush2.bf16.msra.mxu0 0
        %1353 = vmatprep.subr.bf16.mxu0 0
        %1354 = vmatpush2.bf16.msra.mxu0 0
        %1355 = vmatprep.subr.bf16.mxu0 0
        %1356 = vmatpush2.bf16.msra.mxu0 0
        %1357 = vmatprep.mubr.bf16.mxu0 0
        %1358 = vmatmul.mubr.bf16.gmra.mxu0 %v386
        %v1359 = vpop.f32.mrf.mxu0
        %v1360 = vadd.f32 %v1163, %v1359
        %v1361 = vpop.f32.mrf.mxu0
        %v1362 = vadd.f32 %v1167, %v1361
        %v1363 = vpop.f32.mrf.mxu0
        %v1364 = vadd.f32 %v1163, %v1363
        %v1365 = vpop.f32.mrf.mxu0
        %v1366 = vadd.f32 %v1167, %v1365
        %1367 = vmatprep.mubr.bf16.mxu0 0
        %1368 = vmatmul.mubr.bf16.gmra.mxu0 %v389
        %v1369 = vpop.f32.mrf.mxu0
        %v1370 = vadd.f32 %v1163, %v1369
        %v1371 = vpop.f32.mrf.mxu0
        %v1372 = vadd.f32 %v1167, %v1371
        %v1373 = vpop.f32.mrf.mxu0
        %v1374 = vpop.f32.mrf.mxu0
        %1375 = vdwg.mxu0
        %v1376 = vpack.c.bf16 %v1313, %v1309
        %v1377 = vpack.c.bf16 %v1315, %v1311
        %v1378 = vpack.c.bf16 %v1364, %v1360
        %v1379 = vpack.c.bf16 %v1366, %v1362
        %v1380 = vpack.c.bf16 %v1319, %v1319
        %v1381 = vpack.c.bf16 %v1321, %v1321
        %v1382 = vpack.c.bf16 %v1370, %v1370
        %v1383 = vpack.c.bf16 %v1372, %v1372
        %v1392 = vunpack.c.l.b16 %v1376
        %v1393 = vunpack.c.l.b16 %v1377
        %v1394 = vunpack.c.l.b16 %v1378
        %v1395 = vunpack.c.l.b16 %v1379
        %v1396 = vunpack.c.h.b16 %v1376
        %v1397 = vunpack.c.h.b16 %v1377
        %v1398 = vunpack.c.h.b16 %v1378
        %v1399 = vunpack.c.h.b16 %v1379
        %v1400 = vunpack.c.l.b16 %v1380
        %v1401 = vunpack.c.l.b16 %v1381
        %v1402 = vunpack.c.l.b16 %v1382
        %v1403 = vunpack.c.l.b16 %v1383
        %v1404 = vpack.c.b16 %v1393, %v1392
        %v1405 = vpack.c.b16 %v1395, %v1394
        %v1406 = vpack.c.b16 %v1397, %v1396
        %v1407 = vpack.c.b16 %v1399, %v1398
        %v1408 = vpack.c.b16 %v1401, %v1400
        %v1409 = vpack.c.b16 %v1403, %v1402
        %1416 = vst [vmem:[%s238 + $0x30] sm:$0xff] %v1404
        %1417 = vst [vmem:[%s238 + $0x38] sm:$0xff] %v1405
        %1418 = vst [vmem:[%s238 + $0x130] sm:$0xff] %v1406
        %1419 = vst [vmem:[%s238 + $0x138] sm:$0xff] %v1407
        %1420 = vst [vmem:[%s238 + $0x230] sm:$0x11] %v1408
        %1421 = vst [vmem:[%s238 + $0x238] sm:$0x11] %v1409
        %v1422 = vld [vmem:[%s202 + $0x40] sm:$0xff]
        %v1423 = vld [vmem:[%s202 + $0x48] sm:$0xff]
        %v1424 = vld [vmem:[%s202 + $0x140] sm:$0xff]
        %v1425 = vld [vmem:[%s202 + $0x148] sm:$0xff]
        %v1426 = vld [vmem:[%s202 + $0x240] sm:$0xff]
        %v1427 = vld [vmem:[%s202 + $0x248] sm:$0xff]
        %v1428 = vld [vmem:[%s202 + $0x340] sm:$0xff]
        %v1429 = vld [vmem:[%s202 + $0x348] sm:$0xff]
        %v1430 = vld [vmem:[%s202 + $0x440] sm:$0xff]
        %v1431 = vld [vmem:[%s202 + $0x448] sm:$0xff]
        %v1432 = vld [vmem:[%s202 + $0x540] sm:$0xff]
        %v1433 = vld [vmem:[%s202 + $0x548] sm:$0xff]
        %v1434 = vld [vmem:[%s202 + $0x640] sm:$0xff]
        %v1435 = vld [vmem:[%s202 + $0x648] sm:$0xff]
        %v1436 = vld [vmem:[%s202 + $0x740] sm:$0xff]
        %v1437 = vld [vmem:[%s202 + $0x748] sm:$0xff]
        %v1438 = vld [vmem:[%s202 + $0x840] sm:$0xff]
        %v1439 = vld [vmem:[%s202 + $0x848] sm:$0xff]
        %v1440 = vld [vmem:[%s211 + $0x10] sm:$0xf]
        %v1442 = vlaneseq
        %v1443 = vshrl.u32 %v1442, 7
        %v1444 = vsub.s32 0, %v1443
        %v1445 = vrot.slane %v1440, %v1444
        %v1446 = vlaneseq
        %v1447 = vshrl.u32 %v1446, 7
        %v1448 = vsub.s32 1, %v1447
        %v1449 = vrot.slane %v1440, %v1448
        %v1450 = vlaneseq
        %v1451 = vshrl.u32 %v1450, 7
        %v1452 = vsub.s32 2, %v1451
        %v1453 = vrot.slane %v1440, %v1452
        %v1454 = vlaneseq
        %v1455 = vshrl.u32 %v1454, 7
        %v1456 = vsub.s32 3, %v1455
        %v1457 = vrot.slane %v1440, %v1456
        %v1480 = vunpack.c.l.b16 %v1422
        %v1481 = vunpack.c.h.b16 %v1422
        %v1482 = vunpack.c.l.b16 %v1423
        %v1483 = vunpack.c.h.b16 %v1423
        %v1484 = vunpack.c.l.b16 %v1424
        %v1485 = vunpack.c.h.b16 %v1424
        %v1486 = vunpack.c.l.b16 %v1425
        %v1487 = vunpack.c.h.b16 %v1425
        %v1488 = vunpack.c.l.b16 %v1426
        %v1489 = vunpack.c.h.b16 %v1426
        %v1490 = vunpack.c.l.b16 %v1427
        %v1491 = vunpack.c.h.b16 %v1427
        %v1492 = vunpack.c.l.b16 %v1428
        %v1493 = vunpack.c.h.b16 %v1428
        %v1494 = vunpack.c.l.b16 %v1429
        %v1495 = vunpack.c.h.b16 %v1429
        %v1496 = vunpack.c.l.b16 %v1430
        %v1497 = vunpack.c.h.b16 %v1430
        %v1498 = vunpack.c.l.b16 %v1431
        %v1499 = vunpack.c.h.b16 %v1431
        %v1500 = vunpack.c.l.b16 %v1432
        %v1501 = vunpack.c.h.b16 %v1432
        %v1502 = vunpack.c.l.b16 %v1433
        %v1503 = vunpack.c.h.b16 %v1433
        %v1504 = vunpack.c.l.b16 %v1434
        %v1505 = vunpack.c.h.b16 %v1434
        %v1506 = vunpack.c.l.b16 %v1435
        %v1507 = vunpack.c.h.b16 %v1435
        %v1508 = vunpack.c.l.b16 %v1436
        %v1509 = vunpack.c.h.b16 %v1436
        %v1510 = vunpack.c.l.b16 %v1437
        %v1511 = vunpack.c.h.b16 %v1437
        %v1512 = vunpack.c.l.b16 %v1438
        %v1513 = vunpack.c.h.b16 %v1438
        %v1514 = vunpack.c.l.b16 %v1439
        %v1515 = vunpack.c.h.b16 %v1439
        %v1516 = vpack.c.b16 %v1484, %v1480
        %v1517 = vpack.c.b16 %v1485, %v1481
        %v1518 = vpack.c.b16 %v1486, %v1482
        %v1519 = vpack.c.b16 %v1487, %v1483
        %v1520 = vpack.c.b16 %v1492, %v1488
        %v1521 = vpack.c.b16 %v1493, %v1489
        %v1522 = vpack.c.b16 %v1494, %v1490
        %v1523 = vpack.c.b16 %v1495, %v1491
        %v1524 = vpack.c.b16 %v1500, %v1496
        %v1525 = vpack.c.b16 %v1501, %v1497
        %v1526 = vpack.c.b16 %v1502, %v1498
        %v1527 = vpack.c.b16 %v1503, %v1499
        %v1528 = vpack.c.b16 %v1508, %v1504
        %v1529 = vpack.c.b16 %v1509, %v1505
        %v1530 = vpack.c.b16 %v1510, %v1506
        %v1531 = vpack.c.b16 %v1511, %v1507
        %v1532 = vpack.c.b16 %v1512, %v1512
        %v1533 = vpack.c.b16 %v1513, %v1513
        %v1534 = vpack.c.b16 %v1514, %v1514
        %v1535 = vpack.c.b16 %v1515, %v1515
        %v1553 = vsel %vm391, %v1532, 0
        %v1556 = vsel %vm391, %v1533, 0
        %v1559 = vsel %vm391, %v1534, 0
        %v1562 = vsel %vm391, %v1535, 0
        %1564 = vmatprep.subr.bf16.mxu0 0
        %1565 = vmatpush1.bf16.msra.mxu0 0
        %1566 = vmatprep.subr.bf16.mxu0 0
        %1567 = vmatpush1.bf16.msra.mxu0 0
        %1568 = vmatprep.subr.bf16.mxu0 0
        %1569 = vmatpush1.bf16.msra.mxu0 0
        %1570 = vmatprep.subr.bf16.mxu0 %v1556
        %1571 = vmatpush1.bf16.msra.mxu0 %v1553
        %1572 = vmatprep.subr.bf16.mxu0 %v1529
        %1573 = vmatpush1.bf16.msra.mxu0 %v1528
        %1574 = vmatprep.subr.bf16.mxu0 %v1525
        %1575 = vmatpush1.bf16.msra.mxu0 %v1524
        %1576 = vmatprep.subr.bf16.mxu0 %v1521
        %1577 = vmatpush1.bf16.msra.mxu0 %v1520
        %1578 = vmatprep.subr.bf16.mxu0 %v1517
        %1579 = vmatpush1.bf16.msra.mxu0 %v1516
        %1580 = vmatprep.subr.bf16.mxu0 0
        %1581 = vmatpush2.bf16.msra.mxu0 0
        %1582 = vmatprep.subr.bf16.mxu0 0
        %1583 = vmatpush2.bf16.msra.mxu0 0
        %1584 = vmatprep.subr.bf16.mxu0 0
        %1585 = vmatpush2.bf16.msra.mxu0 0
        %1586 = vmatprep.subr.bf16.mxu0 0
        %1587 = vmatpush2.bf16.msra.mxu0 0
        %1588 = vmatprep.subr.bf16.mxu0 0
        %1589 = vmatpush2.bf16.msra.mxu0 0
        %1590 = vmatprep.subr.bf16.mxu0 0
        %1591 = vmatpush2.bf16.msra.mxu0 0
        %1592 = vmatprep.subr.bf16.mxu0 0
        %1593 = vmatpush2.bf16.msra.mxu0 0
        %1594 = vmatprep.subr.bf16.mxu0 0
        %1595 = vmatpush2.bf16.msra.mxu0 0
        %1596 = vmatprep.mubr.bf16.mxu0 0
        %1597 = vmatmul.mubr.bf16.gmra.mxu0 %v386
        %v1598 = vpop.f32.mrf.mxu0
        %v1599 = vadd.f32 %v1445, %v1598
        %v1600 = vpop.f32.mrf.mxu0
        %v1601 = vadd.f32 %v1449, %v1600
        %v1602 = vpop.f32.mrf.mxu0
        %v1603 = vadd.f32 %v1445, %v1602
        %v1604 = vpop.f32.mrf.mxu0
        %v1605 = vadd.f32 %v1449, %v1604
        %1606 = vmatprep.mubr.bf16.mxu0 0
        %1607 = vmatmul.mubr.bf16.gmra.mxu0 %v389
        %v1608 = vpop.f32.mrf.mxu0
        %v1609 = vadd.f32 %v1445, %v1608
        %v1610 = vpop.f32.mrf.mxu0
        %v1611 = vadd.f32 %v1449, %v1610
        %v1612 = vpop.f32.mrf.mxu0
        %v1613 = vpop.f32.mrf.mxu0
        %1614 = vdwg.mxu0
        %1615 = vmatprep.subr.bf16.mxu0 0
        %1616 = vmatpush1.bf16.msra.mxu0 0
        %1617 = vmatprep.subr.bf16.mxu0 0
        %1618 = vmatpush1.bf16.msra.mxu0 0
        %1619 = vmatprep.subr.bf16.mxu0 0
        %1620 = vmatpush1.bf16.msra.mxu0 0
        %1621 = vmatprep.subr.bf16.mxu0 %v1562
        %1622 = vmatpush1.bf16.msra.mxu0 %v1559
        %1623 = vmatprep.subr.bf16.mxu0 %v1531
        %1624 = vmatpush1.bf16.msra.mxu0 %v1530
        %1625 = vmatprep.subr.bf16.mxu0 %v1527
        %1626 = vmatpush1.bf16.msra.mxu0 %v1526
        %1627 = vmatprep.subr.bf16.mxu0 %v1523
        %1628 = vmatpush1.bf16.msra.mxu0 %v1522
        %1629 = vmatprep.subr.bf16.mxu0 %v1519
        %1630 = vmatpush1.bf16.msra.mxu0 %v1518
        %1631 = vmatprep.subr.bf16.mxu0 0
        %1632 = vmatpush2.bf16.msra.mxu0 0
        %1633 = vmatprep.subr.bf16.mxu0 0
        %1634 = vmatpush2.bf16.msra.mxu0 0
        %1635 = vmatprep.subr.bf16.mxu0 0
        %1636 = vmatpush2.bf16.msra.mxu0 0
        %1637 = vmatprep.subr.bf16.mxu0 0
        %1638 = vmatpush2.bf16.msra.mxu0 0
        %1639 = vmatprep.subr.bf16.mxu0 0
        %1640 = vmatpush2.bf16.msra.mxu0 0
        %1641 = vmatprep.subr.bf16.mxu0 0
        %1642 = vmatpush2.bf16.msra.mxu0 0
        %1643 = vmatprep.subr.bf16.mxu0 0
        %1644 = vmatpush2.bf16.msra.mxu0 0
        %1645 = vmatprep.subr.bf16.mxu0 0
        %1646 = vmatpush2.bf16.msra.mxu0 0
        %1647 = vmatprep.mubr.bf16.mxu0 0
        %1648 = vmatmul.mubr.bf16.gmra.mxu0 %v386
        %v1649 = vpop.f32.mrf.mxu0
        %v1650 = vadd.f32 %v1453, %v1649
        %v1651 = vpop.f32.mrf.mxu0
        %v1652 = vadd.f32 %v1457, %v1651
        %v1653 = vpop.f32.mrf.mxu0
        %v1654 = vadd.f32 %v1453, %v1653
        %v1655 = vpop.f32.mrf.mxu0
        %v1656 = vadd.f32 %v1457, %v1655
        %1657 = vmatprep.mubr.bf16.mxu0 0
        %1658 = vmatmul.mubr.bf16.gmra.mxu0 %v389
        %v1659 = vpop.f32.mrf.mxu0
        %v1660 = vadd.f32 %v1453, %v1659
        %v1661 = vpop.f32.mrf.mxu0
        %v1662 = vadd.f32 %v1457, %v1661
        %v1663 = vpop.f32.mrf.mxu0
        %v1664 = vpop.f32.mrf.mxu0
        %1665 = vdwg.mxu0
        %v1666 = vpack.c.bf16 %v1603, %v1599
        %v1667 = vpack.c.bf16 %v1605, %v1601
        %v1668 = vpack.c.bf16 %v1654, %v1650
        %v1669 = vpack.c.bf16 %v1656, %v1652
        %v1670 = vpack.c.bf16 %v1609, %v1609
        %v1671 = vpack.c.bf16 %v1611, %v1611
        %v1672 = vpack.c.bf16 %v1660, %v1660
        %v1673 = vpack.c.bf16 %v1662, %v1662
        %v1682 = vunpack.c.l.b16 %v1666
        %v1683 = vunpack.c.l.b16 %v1667
        %v1684 = vunpack.c.l.b16 %v1668
        %v1685 = vunpack.c.l.b16 %v1669
        %v1686 = vunpack.c.h.b16 %v1666
        %v1687 = vunpack.c.h.b16 %v1667
        %v1688 = vunpack.c.h.b16 %v1668
        %v1689 = vunpack.c.h.b16 %v1669
        %v1690 = vunpack.c.l.b16 %v1670
        %v1691 = vunpack.c.l.b16 %v1671
        %v1692 = vunpack.c.l.b16 %v1672
        %v1693 = vunpack.c.l.b16 %v1673
        %v1694 = vpack.c.b16 %v1683, %v1682
        %v1695 = vpack.c.b16 %v1685, %v1684
        %v1696 = vpack.c.b16 %v1687, %v1686
        %v1697 = vpack.c.b16 %v1689, %v1688
        %v1698 = vpack.c.b16 %v1691, %v1690
        %v1699 = vpack.c.b16 %v1693, %v1692
        %1706 = vst [vmem:[%s238 + $0x40] sm:$0xff] %v1694
        %1707 = vst [vmem:[%s238 + $0x48] sm:$0xff] %v1695
        %1708 = vst [vmem:[%s238 + $0x140] sm:$0xff] %v1696
        %1709 = vst [vmem:[%s238 + $0x148] sm:$0xff] %v1697
        %1710 = vst [vmem:[%s238 + $0x240] sm:$0x11] %v1698
        %1711 = vst [vmem:[%s238 + $0x248] sm:$0x11] %v1699
        %v1712 = vld [vmem:[%s202 + $0x50] sm:$0xff]
        %v1713 = vld [vmem:[%s202 + $0x58] sm:$0xff]
        %v1714 = vld [vmem:[%s202 + $0x150] sm:$0xff]
        %v1715 = vld [vmem:[%s202 + $0x158] sm:$0xff]
        %v1716 = vld [vmem:[%s202 + $0x250] sm:$0xff]
        %v1717 = vld [vmem:[%s202 + $0x258] sm:$0xff]
        %v1718 = vld [vmem:[%s202 + $0x350] sm:$0xff]
        %v1719 = vld [vmem:[%s202 + $0x358] sm:$0xff]
        %v1720 = vld [vmem:[%s202 + $0x450] sm:$0xff]
        %v1721 = vld [vmem:[%s202 + $0x458] sm:$0xff]
        %v1722 = vld [vmem:[%s202 + $0x550] sm:$0xff]
        %v1723 = vld [vmem:[%s202 + $0x558] sm:$0xff]
        %v1724 = vld [vmem:[%s202 + $0x650] sm:$0xff]
        %v1725 = vld [vmem:[%s202 + $0x658] sm:$0xff]
        %v1726 = vld [vmem:[%s202 + $0x750] sm:$0xff]
        %v1727 = vld [vmem:[%s202 + $0x758] sm:$0xff]
        %v1728 = vld [vmem:[%s202 + $0x850] sm:$0xff]
        %v1729 = vld [vmem:[%s202 + $0x858] sm:$0xff]
        %v1730 = vld [vmem:[%s211 + $0x14] sm:$0xf]
        %v1732 = vlaneseq
        %v1733 = vshrl.u32 %v1732, 7
        %v1734 = vsub.s32 0, %v1733
        %v1735 = vrot.slane %v1730, %v1734
        %v1736 = vlaneseq
        %v1737 = vshrl.u32 %v1736, 7
        %v1738 = vsub.s32 1, %v1737
        %v1739 = vrot.slane %v1730, %v1738
        %v1740 = vlaneseq
        %v1741 = vshrl.u32 %v1740, 7
        %v1742 = vsub.s32 2, %v1741
        %v1743 = vrot.slane %v1730, %v1742
        %v1744 = vlaneseq
        %v1745 = vshrl.u32 %v1744, 7
        %v1746 = vsub.s32 3, %v1745
        %v1747 = vrot.slane %v1730, %v1746
        %v1770 = vunpack.c.l.b16 %v1712
        %v1771 = vunpack.c.h.b16 %v1712
        %v1772 = vunpack.c.l.b16 %v1713
        %v1773 = vunpack.c.h.b16 %v1713
        %v1774 = vunpack.c.l.b16 %v1714
        %v1775 = vunpack.c.h.b16 %v1714
        %v1776 = vunpack.c.l.b16 %v1715
        %v1777 = vunpack.c.h.b16 %v1715
        %v1778 = vunpack.c.l.b16 %v1716
        %v1779 = vunpack.c.h.b16 %v1716
        %v1780 = vunpack.c.l.b16 %v1717
        %v1781 = vunpack.c.h.b16 %v1717
        %v1782 = vunpack.c.l.b16 %v1718
        %v1783 = vunpack.c.h.b16 %v1718
        %v1784 = vunpack.c.l.b16 %v1719
        %v1785 = vunpack.c.h.b16 %v1719
        %v1786 = vunpack.c.l.b16 %v1720
        %v1787 = vunpack.c.h.b16 %v1720
        %v1788 = vunpack.c.l.b16 %v1721
        %v1789 = vunpack.c.h.b16 %v1721
        %v1790 = vunpack.c.l.b16 %v1722
        %v1791 = vunpack.c.h.b16 %v1722
        %v1792 = vunpack.c.l.b16 %v1723
        %v1793 = vunpack.c.h.b16 %v1723
        %v1794 = vunpack.c.l.b16 %v1724
        %v1795 = vunpack.c.h.b16 %v1724
        %v1796 = vunpack.c.l.b16 %v1725
        %v1797 = vunpack.c.h.b16 %v1725
        %v1798 = vunpack.c.l.b16 %v1726
        %v1799 = vunpack.c.h.b16 %v1726
        %v1800 = vunpack.c.l.b16 %v1727
        %v1801 = vunpack.c.h.b16 %v1727
        %v1802 = vunpack.c.l.b16 %v1728
        %v1803 = vunpack.c.h.b16 %v1728
        %v1804 = vunpack.c.l.b16 %v1729
        %v1805 = vunpack.c.h.b16 %v1729
        %v1806 = vpack.c.b16 %v1774, %v1770
        %v1807 = vpack.c.b16 %v1775, %v1771
        %v1808 = vpack.c.b16 %v1776, %v1772
        %v1809 = vpack.c.b16 %v1777, %v1773
        %v1810 = vpack.c.b16 %v1782, %v1778
        %v1811 = vpack.c.b16 %v1783, %v1779
        %v1812 = vpack.c.b16 %v1784, %v1780
        %v1813 = vpack.c.b16 %v1785, %v1781
        %v1814 = vpack.c.b16 %v1790, %v1786
        %v1815 = vpack.c.b16 %v1791, %v1787
        %v1816 = vpack.c.b16 %v1792, %v1788
        %v1817 = vpack.c.b16 %v1793, %v1789
        %v1818 = vpack.c.b16 %v1798, %v1794
        %v1819 = vpack.c.b16 %v1799, %v1795
        %v1820 = vpack.c.b16 %v1800, %v1796
        %v1821 = vpack.c.b16 %v1801, %v1797
        %v1822 = vpack.c.b16 %v1802, %v1802
        %v1823 = vpack.c.b16 %v1803, %v1803
        %v1824 = vpack.c.b16 %v1804, %v1804
        %v1825 = vpack.c.b16 %v1805, %v1805
        %v1843 = vsel %vm391, %v1822, 0
        %v1846 = vsel %vm391, %v1823, 0
        %v1849 = vsel %vm391, %v1824, 0
        %v1852 = vsel %vm391, %v1825, 0
        %1854 = vmatprep.subr.bf16.mxu0 0
        %1855 = vmatpush1.bf16.msra.mxu0 0
        %1856 = vmatprep.subr.bf16.mxu0 0
        %1857 = vmatpush1.bf16.msra.mxu0 0
        %1858 = vmatprep.subr.bf16.mxu0 0
        %1859 = vmatpush1.bf16.msra.mxu0 0
        %1860 = vmatprep.subr.bf16.mxu0 %v1846
        %1861 = vmatpush1.bf16.msra.mxu0 %v1843
        %1862 = vmatprep.subr.bf16.mxu0 %v1819
        %1863 = vmatpush1.bf16.msra.mxu0 %v1818
        %1864 = vmatprep.subr.bf16.mxu0 %v1815
        %1865 = vmatpush1.bf16.msra.mxu0 %v1814
        %1866 = vmatprep.subr.bf16.mxu0 %v1811
        %1867 = vmatpush1.bf16.msra.mxu0 %v1810
        %1868 = vmatprep.subr.bf16.mxu0 %v1807
        %1869 = vmatpush1.bf16.msra.mxu0 %v1806
        %1870 = vmatprep.subr.bf16.mxu0 0
        %1871 = vmatpush2.bf16.msra.mxu0 0
        %1872 = vmatprep.subr.bf16.mxu0 0
        %1873 = vmatpush2.bf16.msra.mxu0 0
        %1874 = vmatprep.subr.bf16.mxu0 0
        %1875 = vmatpush2.bf16.msra.mxu0 0
        %1876 = vmatprep.subr.bf16.mxu0 0
        %1877 = vmatpush2.bf16.msra.mxu0 0
        %1878 = vmatprep.subr.bf16.mxu0 0
        %1879 = vmatpush2.bf16.msra.mxu0 0
        %1880 = vmatprep.subr.bf16.mxu0 0
        %1881 = vmatpush2.bf16.msra.mxu0 0
        %1882 = vmatprep.subr.bf16.mxu0 0
        %1883 = vmatpush2.bf16.msra.mxu0 0
        %1884 = vmatprep.subr.bf16.mxu0 0
        %1885 = vmatpush2.bf16.msra.mxu0 0
        %1886 = vmatprep.mubr.bf16.mxu0 0
        %1887 = vmatmul.mubr.bf16.gmra.mxu0 %v386
        %v1888 = vpop.f32.mrf.mxu0
        %v1889 = vadd.f32 %v1735, %v1888
        %v1890 = vpop.f32.mrf.mxu0
        %v1891 = vadd.f32 %v1739, %v1890
        %v1892 = vpop.f32.mrf.mxu0
        %v1893 = vadd.f32 %v1735, %v1892
        %v1894 = vpop.f32.mrf.mxu0
        %v1895 = vadd.f32 %v1739, %v1894
        %1896 = vmatprep.mubr.bf16.mxu0 0
        %1897 = vmatmul.mubr.bf16.gmra.mxu0 %v389
        %v1898 = vpop.f32.mrf.mxu0
        %v1899 = vadd.f32 %v1735, %v1898
        %v1900 = vpop.f32.mrf.mxu0
        %v1901 = vadd.f32 %v1739, %v1900
        %v1902 = vpop.f32.mrf.mxu0
        %v1903 = vpop.f32.mrf.mxu0
        %1904 = vdwg.mxu0
        %1905 = vmatprep.subr.bf16.mxu0 0
        %1906 = vmatpush1.bf16.msra.mxu0 0
        %1907 = vmatprep.subr.bf16.mxu0 0
        %1908 = vmatpush1.bf16.msra.mxu0 0
        %1909 = vmatprep.subr.bf16.mxu0 0
        %1910 = vmatpush1.bf16.msra.mxu0 0
        %1911 = vmatprep.subr.bf16.mxu0 %v1852
        %1912 = vmatpush1.bf16.msra.mxu0 %v1849
        %1913 = vmatprep.subr.bf16.mxu0 %v1821
        %1914 = vmatpush1.bf16.msra.mxu0 %v1820
        %1915 = vmatprep.subr.bf16.mxu0 %v1817
        %1916 = vmatpush1.bf16.msra.mxu0 %v1816
        %1917 = vmatprep.subr.bf16.mxu0 %v1813
        %1918 = vmatpush1.bf16.msra.mxu0 %v1812
        %1919 = vmatprep.subr.bf16.mxu0 %v1809
        %1920 = vmatpush1.bf16.msra.mxu0 %v1808
        %1921 = vmatprep.subr.bf16.mxu0 0
        %1922 = vmatpush2.bf16.msra.mxu0 0
        %1923 = vmatprep.subr.bf16.mxu0 0
        %1924 = vmatpush2.bf16.msra.mxu0 0
        %1925 = vmatprep.subr.bf16.mxu0 0
        %1926 = vmatpush2.bf16.msra.mxu0 0
        %1927 = vmatprep.subr.bf16.mxu0 0
        %1928 = vmatpush2.bf16.msra.mxu0 0
        %1929 = vmatprep.subr.bf16.mxu0 0
        %1930 = vmatpush2.bf16.msra.mxu0 0
        %1931 = vmatprep.subr.bf16.mxu0 0
        %1932 = vmatpush2.bf16.msra.mxu0 0
        %1933 = vmatprep.subr.bf16.mxu0 0
        %1934 = vmatpush2.bf16.msra.mxu0 0
        %1935 = vmatprep.subr.bf16.mxu0 0
        %1936 = vmatpush2.bf16.msra.mxu0 0
        %1937 = vmatprep.mubr.bf16.mxu0 0
        %1938 = vmatmul.mubr.bf16.gmra.mxu0 %v386
        %v1939 = vpop.f32.mrf.mxu0
        %v1940 = vadd.f32 %v1743, %v1939
        %v1941 = vpop.f32.mrf.mxu0
        %v1942 = vadd.f32 %v1747, %v1941
        %v1943 = vpop.f32.mrf.mxu0
        %v1944 = vadd.f32 %v1743, %v1943
        %v1945 = vpop.f32.mrf.mxu0
        %v1946 = vadd.f32 %v1747, %v1945
        %1947 = vmatprep.mubr.bf16.mxu0 0
        %1948 = vmatmul.mubr.bf16.gmra.mxu0 %v389
        %v1949 = vpop.f32.mrf.mxu0
        %v1950 = vadd.f32 %v1743, %v1949
        %v1951 = vpop.f32.mrf.mxu0
        %v1952 = vadd.f32 %v1747, %v1951
        %v1953 = vpop.f32.mrf.mxu0
        %v1954 = vpop.f32.mrf.mxu0
        %1955 = vdwg.mxu0
        %v1956 = vpack.c.bf16 %v1893, %v1889
        %v1957 = vpack.c.bf16 %v1895, %v1891
        %v1958 = vpack.c.bf16 %v1944, %v1940
        %v1959 = vpack.c.bf16 %v1946, %v1942
        %v1960 = vpack.c.bf16 %v1899, %v1899
        %v1961 = vpack.c.bf16 %v1901, %v1901
        %v1962 = vpack.c.bf16 %v1950, %v1950
        %v1963 = vpack.c.bf16 %v1952, %v1952
        %v1972 = vunpack.c.l.b16 %v1956
        %v1973 = vunpack.c.l.b16 %v1957
        %v1974 = vunpack.c.l.b16 %v1958
        %v1975 = vunpack.c.l.b16 %v1959
        %v1976 = vunpack.c.h.b16 %v1956
        %v1977 = vunpack.c.h.b16 %v1957
        %v1978 = vunpack.c.h.b16 %v1958
        %v1979 = vunpack.c.h.b16 %v1959
        %v1980 = vunpack.c.l.b16 %v1960
        %v1981 = vunpack.c.l.b16 %v1961
        %v1982 = vunpack.c.l.b16 %v1962
        %v1983 = vunpack.c.l.b16 %v1963
        %v1984 = vpack.c.b16 %v1973, %v1972
        %v1985 = vpack.c.b16 %v1975, %v1974
        %v1986 = vpack.c.b16 %v1977, %v1976
        %v1987 = vpack.c.b16 %v1979, %v1978
        %v1988 = vpack.c.b16 %v1981, %v1980
        %v1989 = vpack.c.b16 %v1983, %v1982
        %1996 = vst [vmem:[%s238 + $0x50] sm:$0xff] %v1984
        %1997 = vst [vmem:[%s238 + $0x58] sm:$0xff] %v1985
        %1998 = vst [vmem:[%s238 + $0x150] sm:$0xff] %v1986
        %1999 = vst [vmem:[%s238 + $0x158] sm:$0xff] %v1987
        %2000 = vst [vmem:[%s238 + $0x250] sm:$0x11] %v1988
        %2001 = vst [vmem:[%s238 + $0x258] sm:$0x11] %v1989
        %v2002 = vld [vmem:[%s202 + $0x60] sm:$0xff]
        %v2003 = vld [vmem:[%s202 + $0x68] sm:$0xff]
        %v2004 = vld [vmem:[%s202 + $0x160] sm:$0xff]
        %v2005 = vld [vmem:[%s202 + $0x168] sm:$0xff]
        %v2006 = vld [vmem:[%s202 + $0x260] sm:$0xff]
        %v2007 = vld [vmem:[%s202 + $0x268] sm:$0xff]
        %v2008 = vld [vmem:[%s202 + $0x360] sm:$0xff]
        %v2009 = vld [vmem:[%s202 + $0x368] sm:$0xff]
        %v2010 = vld [vmem:[%s202 + $0x460] sm:$0xff]
        %v2011 = vld [vmem:[%s202 + $0x468] sm:$0xff]
        %v2012 = vld [vmem:[%s202 + $0x560] sm:$0xff]
        %v2013 = vld [vmem:[%s202 + $0x568] sm:$0xff]
        %v2014 = vld [vmem:[%s202 + $0x660] sm:$0xff]
        %v2015 = vld [vmem:[%s202 + $0x668] sm:$0xff]
        %v2016 = vld [vmem:[%s202 + $0x760] sm:$0xff]
        %v2017 = vld [vmem:[%s202 + $0x768] sm:$0xff]
        %v2018 = vld [vmem:[%s202 + $0x860] sm:$0xff]
        %v2019 = vld [vmem:[%s202 + $0x868] sm:$0xff]
        %v2020 = vld [vmem:[%s211 + $0x18] sm:$0xf]
        %v2022 = vlaneseq
        %v2023 = vshrl.u32 %v2022, 7
        %v2024 = vsub.s32 0, %v2023
        %v2025 = vrot.slane %v2020, %v2024
        %v2026 = vlaneseq
        %v2027 = vshrl.u32 %v2026, 7
        %v2028 = vsub.s32 1, %v2027
        %v2029 = vrot.slane %v2020, %v2028
        %v2030 = vlaneseq
        %v2031 = vshrl.u32 %v2030, 7
        %v2032 = vsub.s32 2, %v2031
        %v2033 = vrot.slane %v2020, %v2032
        %v2034 = vlaneseq
        %v2035 = vshrl.u32 %v2034, 7
        %v2036 = vsub.s32 3, %v2035
        %v2037 = vrot.slane %v2020, %v2036
        %v2060 = vunpack.c.l.b16 %v2002
        %v2061 = vunpack.c.h.b16 %v2002
        %v2062 = vunpack.c.l.b16 %v2003
        %v2063 = vunpack.c.h.b16 %v2003
        %v2064 = vunpack.c.l.b16 %v2004
        %v2065 = vunpack.c.h.b16 %v2004
        %v2066 = vunpack.c.l.b16 %v2005
        %v2067 = vunpack.c.h.b16 %v2005
        %v2068 = vunpack.c.l.b16 %v2006
        %v2069 = vunpack.c.h.b16 %v2006
        %v2070 = vunpack.c.l.b16 %v2007
        %v2071 = vunpack.c.h.b16 %v2007
        %v2072 = vunpack.c.l.b16 %v2008
        %v2073 = vunpack.c.h.b16 %v2008
        %v2074 = vunpack.c.l.b16 %v2009
        %v2075 = vunpack.c.h.b16 %v2009
        %v2076 = vunpack.c.l.b16 %v2010
        %v2077 = vunpack.c.h.b16 %v2010
        %v2078 = vunpack.c.l.b16 %v2011
        %v2079 = vunpack.c.h.b16 %v2011
        %v2080 = vunpack.c.l.b16 %v2012
        %v2081 = vunpack.c.h.b16 %v2012
        %v2082 = vunpack.c.l.b16 %v2013
        %v2083 = vunpack.c.h.b16 %v2013
        %v2084 = vunpack.c.l.b16 %v2014
        %v2085 = vunpack.c.h.b16 %v2014
        %v2086 = vunpack.c.l.b16 %v2015
        %v2087 = vunpack.c.h.b16 %v2015
        %v2088 = vunpack.c.l.b16 %v2016
        %v2089 = vunpack.c.h.b16 %v2016
        %v2090 = vunpack.c.l.b16 %v2017
        %v2091 = vunpack.c.h.b16 %v2017
        %v2092 = vunpack.c.l.b16 %v2018
        %v2093 = vunpack.c.h.b16 %v2018
        %v2094 = vunpack.c.l.b16 %v2019
        %v2095 = vunpack.c.h.b16 %v2019
        %v2096 = vpack.c.b16 %v2064, %v2060
        %v2097 = vpack.c.b16 %v2065, %v2061
        %v2098 = vpack.c.b16 %v2066, %v2062
        %v2099 = vpack.c.b16 %v2067, %v2063
        %v2100 = vpack.c.b16 %v2072, %v2068
        %v2101 = vpack.c.b16 %v2073, %v2069
        %v2102 = vpack.c.b16 %v2074, %v2070
        %v2103 = vpack.c.b16 %v2075, %v2071
        %v2104 = vpack.c.b16 %v2080, %v2076
        %v2105 = vpack.c.b16 %v2081, %v2077
        %v2106 = vpack.c.b16 %v2082, %v2078
        %v2107 = vpack.c.b16 %v2083, %v2079
        %v2108 = vpack.c.b16 %v2088, %v2084
        %v2109 = vpack.c.b16 %v2089, %v2085
        %v2110 = vpack.c.b16 %v2090, %v2086
        %v2111 = vpack.c.b16 %v2091, %v2087
        %v2112 = vpack.c.b16 %v2092, %v2092
        %v2113 = vpack.c.b16 %v2093, %v2093
        %v2114 = vpack.c.b16 %v2094, %v2094
        %v2115 = vpack.c.b16 %v2095, %v2095
        %v2133 = vsel %vm391, %v2112, 0
        %v2136 = vsel %vm391, %v2113, 0
        %v2139 = vsel %vm391, %v2114, 0
        %v2142 = vsel %vm391, %v2115, 0
        %2144 = vmatprep.subr.bf16.mxu0 0
        %2145 = vmatpush1.bf16.msra.mxu0 0
        %2146 = vmatprep.subr.bf16.mxu0 0
        %2147 = vmatpush1.bf16.msra.mxu0 0
        %2148 = vmatprep.subr.bf16.mxu0 0
        %2149 = vmatpush1.bf16.msra.mxu0 0
        %2150 = vmatprep.subr.bf16.mxu0 %v2136
        %2151 = vmatpush1.bf16.msra.mxu0 %v2133
        %2152 = vmatprep.subr.bf16.mxu0 %v2109
        %2153 = vmatpush1.bf16.msra.mxu0 %v2108
        %2154 = vmatprep.subr.bf16.mxu0 %v2105
        %2155 = vmatpush1.bf16.msra.mxu0 %v2104
        %2156 = vmatprep.subr.bf16.mxu0 %v2101
        %2157 = vmatpush1.bf16.msra.mxu0 %v2100
        %2158 = vmatprep.subr.bf16.mxu0 %v2097
        %2159 = vmatpush1.bf16.msra.mxu0 %v2096
        %2160 = vmatprep.subr.bf16.mxu0 0
        %2161 = vmatpush2.bf16.msra.mxu0 0
        %2162 = vmatprep.subr.bf16.mxu0 0
        %2163 = vmatpush2.bf16.msra.mxu0 0
        %2164 = vmatprep.subr.bf16.mxu0 0
        %2165 = vmatpush2.bf16.msra.mxu0 0
        %2166 = vmatprep.subr.bf16.mxu0 0
        %2167 = vmatpush2.bf16.msra.mxu0 0
        %2168 = vmatprep.subr.bf16.mxu0 0
        %2169 = vmatpush2.bf16.msra.mxu0 0
        %2170 = vmatprep.subr.bf16.mxu0 0
        %2171 = vmatpush2.bf16.msra.mxu0 0
        %2172 = vmatprep.subr.bf16.mxu0 0
        %2173 = vmatpush2.bf16.msra.mxu0 0
        %2174 = vmatprep.subr.bf16.mxu0 0
        %2175 = vmatpush2.bf16.msra.mxu0 0
        %2176 = vmatprep.mubr.bf16.mxu0 0
        %2177 = vmatmul.mubr.bf16.gmra.mxu0 %v386
        %v2178 = vpop.f32.mrf.mxu0
        %v2179 = vadd.f32 %v2025, %v2178
        %v2180 = vpop.f32.mrf.mxu0
        %v2181 = vadd.f32 %v2029, %v2180
        %v2182 = vpop.f32.mrf.mxu0
        %v2183 = vadd.f32 %v2025, %v2182
        %v2184 = vpop.f32.mrf.mxu0
        %v2185 = vadd.f32 %v2029, %v2184
        %2186 = vmatprep.mubr.bf16.mxu0 0
        %2187 = vmatmul.mubr.bf16.gmra.mxu0 %v389
        %v2188 = vpop.f32.mrf.mxu0
        %v2189 = vadd.f32 %v2025, %v2188
        %v2190 = vpop.f32.mrf.mxu0
        %v2191 = vadd.f32 %v2029, %v2190
        %v2192 = vpop.f32.mrf.mxu0
        %v2193 = vpop.f32.mrf.mxu0
        %2194 = vdwg.mxu0
        %2195 = vmatprep.subr.bf16.mxu0 0
        %2196 = vmatpush1.bf16.msra.mxu0 0
        %2197 = vmatprep.subr.bf16.mxu0 0
        %2198 = vmatpush1.bf16.msra.mxu0 0
        %2199 = vmatprep.subr.bf16.mxu0 0
        %2200 = vmatpush1.bf16.msra.mxu0 0
        %2201 = vmatprep.subr.bf16.mxu0 %v2142
        %2202 = vmatpush1.bf16.msra.mxu0 %v2139
        %2203 = vmatprep.subr.bf16.mxu0 %v2111
        %2204 = vmatpush1.bf16.msra.mxu0 %v2110
        %2205 = vmatprep.subr.bf16.mxu0 %v2107
        %2206 = vmatpush1.bf16.msra.mxu0 %v2106
        %2207 = vmatprep.subr.bf16.mxu0 %v2103
        %2208 = vmatpush1.bf16.msra.mxu0 %v2102
        %2209 = vmatprep.subr.bf16.mxu0 %v2099
        %2210 = vmatpush1.bf16.msra.mxu0 %v2098
        %2211 = vmatprep.subr.bf16.mxu0 0
        %2212 = vmatpush2.bf16.msra.mxu0 0
        %2213 = vmatprep.subr.bf16.mxu0 0
        %2214 = vmatpush2.bf16.msra.mxu0 0
        %2215 = vmatprep.subr.bf16.mxu0 0
        %2216 = vmatpush2.bf16.msra.mxu0 0
        %2217 = vmatprep.subr.bf16.mxu0 0
        %2218 = vmatpush2.bf16.msra.mxu0 0
        %2219 = vmatprep.subr.bf16.mxu0 0
        %2220 = vmatpush2.bf16.msra.mxu0 0
        %2221 = vmatprep.subr.bf16.mxu0 0
        %2222 = vmatpush2.bf16.msra.mxu0 0
        %2223 = vmatprep.subr.bf16.mxu0 0
        %2224 = vmatpush2.bf16.msra.mxu0 0
        %2225 = vmatprep.subr.bf16.mxu0 0
        %2226 = vmatpush2.bf16.msra.mxu0 0
        %2227 = vmatprep.mubr.bf16.mxu0 0
        %2228 = vmatmul.mubr.bf16.gmra.mxu0 %v386
        %v2229 = vpop.f32.mrf.mxu0
        %v2230 = vadd.f32 %v2033, %v2229
        %v2231 = vpop.f32.mrf.mxu0
        %v2232 = vadd.f32 %v2037, %v2231
        %v2233 = vpop.f32.mrf.mxu0
        %v2234 = vadd.f32 %v2033, %v2233
        %v2235 = vpop.f32.mrf.mxu0
        %v2236 = vadd.f32 %v2037, %v2235
        %2237 = vmatprep.mubr.bf16.mxu0 0
        %2238 = vmatmul.mubr.bf16.gmra.mxu0 %v389
        %v2239 = vpop.f32.mrf.mxu0
        %v2240 = vadd.f32 %v2033, %v2239
        %v2241 = vpop.f32.mrf.mxu0
        %v2242 = vadd.f32 %v2037, %v2241
        %v2243 = vpop.f32.mrf.mxu0
        %v2244 = vpop.f32.mrf.mxu0
        %2245 = vdwg.mxu0
        %v2246 = vpack.c.bf16 %v2183, %v2179
        %v2247 = vpack.c.bf16 %v2185, %v2181
        %v2248 = vpack.c.bf16 %v2234, %v2230
        %v2249 = vpack.c.bf16 %v2236, %v2232
        %v2250 = vpack.c.bf16 %v2189, %v2189
        %v2251 = vpack.c.bf16 %v2191, %v2191
        %v2252 = vpack.c.bf16 %v2240, %v2240
        %v2253 = vpack.c.bf16 %v2242, %v2242
        %v2262 = vunpack.c.l.b16 %v2246
        %v2263 = vunpack.c.l.b16 %v2247
        %v2264 = vunpack.c.l.b16 %v2248
        %v2265 = vunpack.c.l.b16 %v2249
        %v2266 = vunpack.c.h.b16 %v2246
        %v2267 = vunpack.c.h.b16 %v2247
        %v2268 = vunpack.c.h.b16 %v2248
        %v2269 = vunpack.c.h.b16 %v2249
        %v2270 = vunpack.c.l.b16 %v2250
        %v2271 = vunpack.c.l.b16 %v2251
        %v2272 = vunpack.c.l.b16 %v2252
        %v2273 = vunpack.c.l.b16 %v2253
        %v2274 = vpack.c.b16 %v2263, %v2262
        %v2275 = vpack.c.b16 %v2265, %v2264
        %v2276 = vpack.c.b16 %v2267, %v2266
        %v2277 = vpack.c.b16 %v2269, %v2268
        %v2278 = vpack.c.b16 %v2271, %v2270
        %v2279 = vpack.c.b16 %v2273, %v2272
        %2286 = vst [vmem:[%s238 + $0x60] sm:$0xff] %v2274
        %2287 = vst [vmem:[%s238 + $0x68] sm:$0xff] %v2275
        %2288 = vst [vmem:[%s238 + $0x160] sm:$0xff] %v2276
        %2289 = vst [vmem:[%s238 + $0x168] sm:$0xff] %v2277
        %2290 = vst [vmem:[%s238 + $0x260] sm:$0x11] %v2278
        %2291 = vst [vmem:[%s238 + $0x268] sm:$0x11] %v2279
        %v2292 = vld [vmem:[%s202 + $0x70] sm:$0xff]
        %v2293 = vld [vmem:[%s202 + $0x78] sm:$0xff]
        %v2294 = vld [vmem:[%s202 + $0x170] sm:$0xff]
        %v2295 = vld [vmem:[%s202 + $0x178] sm:$0xff]
        %v2296 = vld [vmem:[%s202 + $0x270] sm:$0xff]
        %v2297 = vld [vmem:[%s202 + $0x278] sm:$0xff]
        %v2298 = vld [vmem:[%s202 + $0x370] sm:$0xff]
        %v2299 = vld [vmem:[%s202 + $0x378] sm:$0xff]
        %v2300 = vld [vmem:[%s202 + $0x470] sm:$0xff]
        %v2301 = vld [vmem:[%s202 + $0x478] sm:$0xff]
        %v2302 = vld [vmem:[%s202 + $0x570] sm:$0xff]
        %v2303 = vld [vmem:[%s202 + $0x578] sm:$0xff]
        %v2304 = vld [vmem:[%s202 + $0x670] sm:$0xff]
        %v2305 = vld [vmem:[%s202 + $0x678] sm:$0xff]
        %v2306 = vld [vmem:[%s202 + $0x770] sm:$0xff]
        %v2307 = vld [vmem:[%s202 + $0x778] sm:$0xff]
        %v2308 = vld [vmem:[%s202 + $0x870] sm:$0xff]
        %v2309 = vld [vmem:[%s202 + $0x878] sm:$0xff]
        %v2310 = vld [vmem:[%s211 + $0x1c] sm:$0xf]
        %v2312 = vlaneseq
        %v2313 = vshrl.u32 %v2312, 7
        %v2314 = vsub.s32 0, %v2313
        %v2315 = vrot.slane %v2310, %v2314
        %v2316 = vlaneseq
        %v2317 = vshrl.u32 %v2316, 7
        %v2318 = vsub.s32 1, %v2317
        %v2319 = vrot.slane %v2310, %v2318
        %v2320 = vlaneseq
        %v2321 = vshrl.u32 %v2320, 7
        %v2322 = vsub.s32 2, %v2321
        %v2323 = vrot.slane %v2310, %v2322
        %v2324 = vlaneseq
        %v2325 = vshrl.u32 %v2324, 7
        %v2326 = vsub.s32 3, %v2325
        %v2327 = vrot.slane %v2310, %v2326
        %v2350 = vunpack.c.l.b16 %v2292
        %v2351 = vunpack.c.h.b16 %v2292
        %v2352 = vunpack.c.l.b16 %v2293
        %v2353 = vunpack.c.h.b16 %v2293
        %v2354 = vunpack.c.l.b16 %v2294
        %v2355 = vunpack.c.h.b16 %v2294
        %v2356 = vunpack.c.l.b16 %v2295
        %v2357 = vunpack.c.h.b16 %v2295
        %v2358 = vunpack.c.l.b16 %v2296
        %v2359 = vunpack.c.h.b16 %v2296
        %v2360 = vunpack.c.l.b16 %v2297
        %v2361 = vunpack.c.h.b16 %v2297
        %v2362 = vunpack.c.l.b16 %v2298
        %v2363 = vunpack.c.h.b16 %v2298
        %v2364 = vunpack.c.l.b16 %v2299
        %v2365 = vunpack.c.h.b16 %v2299
        %v2366 = vunpack.c.l.b16 %v2300
        %v2367 = vunpack.c.h.b16 %v2300
        %v2368 = vunpack.c.l.b16 %v2301
        %v2369 = vunpack.c.h.b16 %v2301
        %v2370 = vunpack.c.l.b16 %v2302
        %v2371 = vunpack.c.h.b16 %v2302
        %v2372 = vunpack.c.l.b16 %v2303
        %v2373 = vunpack.c.h.b16 %v2303
        %v2374 = vunpack.c.l.b16 %v2304
        %v2375 = vunpack.c.h.b16 %v2304
        %v2376 = vunpack.c.l.b16 %v2305
        %v2377 = vunpack.c.h.b16 %v2305
        %v2378 = vunpack.c.l.b16 %v2306
        %v2379 = vunpack.c.h.b16 %v2306
        %v2380 = vunpack.c.l.b16 %v2307
        %v2381 = vunpack.c.h.b16 %v2307
        %v2382 = vunpack.c.l.b16 %v2308
        %v2383 = vunpack.c.h.b16 %v2308
        %v2384 = vunpack.c.l.b16 %v2309
        %v2385 = vunpack.c.h.b16 %v2309
        %v2386 = vpack.c.b16 %v2354, %v2350
        %v2387 = vpack.c.b16 %v2355, %v2351
        %v2388 = vpack.c.b16 %v2356, %v2352
        %v2389 = vpack.c.b16 %v2357, %v2353
        %v2390 = vpack.c.b16 %v2362, %v2358
        %v2391 = vpack.c.b16 %v2363, %v2359
        %v2392 = vpack.c.b16 %v2364, %v2360
        %v2393 = vpack.c.b16 %v2365, %v2361
        %v2394 = vpack.c.b16 %v2370, %v2366
        %v2395 = vpack.c.b16 %v2371, %v2367
        %v2396 = vpack.c.b16 %v2372, %v2368
        %v2397 = vpack.c.b16 %v2373, %v2369
        %v2398 = vpack.c.b16 %v2378, %v2374
        %v2399 = vpack.c.b16 %v2379, %v2375
        %v2400 = vpack.c.b16 %v2380, %v2376
        %v2401 = vpack.c.b16 %v2381, %v2377
        %v2402 = vpack.c.b16 %v2382, %v2382
        %v2403 = vpack.c.b16 %v2383, %v2383
        %v2404 = vpack.c.b16 %v2384, %v2384
        %v2405 = vpack.c.b16 %v2385, %v2385
        %v2423 = vsel %vm391, %v2402, 0
        %v2426 = vsel %vm391, %v2403, 0
        %v2429 = vsel %vm391, %v2404, 0
        %v2432 = vsel %vm391, %v2405, 0
        %2434 = vmatprep.subr.bf16.mxu0 0
        %2435 = vmatpush1.bf16.msra.mxu0 0
        %2436 = vmatprep.subr.bf16.mxu0 0
        %2437 = vmatpush1.bf16.msra.mxu0 0
        %2438 = vmatprep.subr.bf16.mxu0 0
        %2439 = vmatpush1.bf16.msra.mxu0 0
        %2440 = vmatprep.subr.bf16.mxu0 %v2426
        %2441 = vmatpush1.bf16.msra.mxu0 %v2423
        %2442 = vmatprep.subr.bf16.mxu0 %v2399
        %2443 = vmatpush1.bf16.msra.mxu0 %v2398
        %2444 = vmatprep.subr.bf16.mxu0 %v2395
        %2445 = vmatpush1.bf16.msra.mxu0 %v2394
        %2446 = vmatprep.subr.bf16.mxu0 %v2391
        %2447 = vmatpush1.bf16.msra.mxu0 %v2390
        %2448 = vmatprep.subr.bf16.mxu0 %v2387
        %2449 = vmatpush1.bf16.msra.mxu0 %v2386
        %2450 = vmatprep.subr.bf16.mxu0 0
        %2451 = vmatpush2.bf16.msra.mxu0 0
        %2452 = vmatprep.subr.bf16.mxu0 0
        %2453 = vmatpush2.bf16.msra.mxu0 0
        %2454 = vmatprep.subr.bf16.mxu0 0
        %2455 = vmatpush2.bf16.msra.mxu0 0
        %2456 = vmatprep.subr.bf16.mxu0 0
        %2457 = vmatpush2.bf16.msra.mxu0 0
        %2458 = vmatprep.subr.bf16.mxu0 0
        %2459 = vmatpush2.bf16.msra.mxu0 0
        %2460 = vmatprep.subr.bf16.mxu0 0
        %2461 = vmatpush2.bf16.msra.mxu0 0
        %2462 = vmatprep.subr.bf16.mxu0 0
        %2463 = vmatpush2.bf16.msra.mxu0 0
        %2464 = vmatprep.subr.bf16.mxu0 0
        %2465 = vmatpush2.bf16.msra.mxu0 0
        %2466 = vmatprep.mubr.bf16.mxu0 0
        %2467 = vmatmul.mubr.bf16.gmra.mxu0 %v386
        %v2468 = vpop.f32.mrf.mxu0
        %v2469 = vadd.f32 %v2315, %v2468
        %v2470 = vpop.f32.mrf.mxu0
        %v2471 = vadd.f32 %v2319, %v2470
        %v2472 = vpop.f32.mrf.mxu0
        %v2473 = vadd.f32 %v2315, %v2472
        %v2474 = vpop.f32.mrf.mxu0
        %v2475 = vadd.f32 %v2319, %v2474
        %2476 = vmatprep.mubr.bf16.mxu0 0
        %2477 = vmatmul.mubr.bf16.gmra.mxu0 %v389
        %v2478 = vpop.f32.mrf.mxu0
        %v2479 = vadd.f32 %v2315, %v2478
        %v2480 = vpop.f32.mrf.mxu0
        %v2481 = vadd.f32 %v2319, %v2480
        %v2482 = vpop.f32.mrf.mxu0
        %v2483 = vpop.f32.mrf.mxu0
        %2484 = vdwg.mxu0
        %2485 = vmatprep.subr.bf16.mxu0 0
        %2486 = vmatpush1.bf16.msra.mxu0 0
        %2487 = vmatprep.subr.bf16.mxu0 0
        %2488 = vmatpush1.bf16.msra.mxu0 0
        %2489 = vmatprep.subr.bf16.mxu0 0
        %2490 = vmatpush1.bf16.msra.mxu0 0
        %2491 = vmatprep.subr.bf16.mxu0 %v2432
        %2492 = vmatpush1.bf16.msra.mxu0 %v2429
        %2493 = vmatprep.subr.bf16.mxu0 %v2401
        %2494 = vmatpush1.bf16.msra.mxu0 %v2400
        %2495 = vmatprep.subr.bf16.mxu0 %v2397
        %2496 = vmatpush1.bf16.msra.mxu0 %v2396
        %2497 = vmatprep.subr.bf16.mxu0 %v2393
        %2498 = vmatpush1.bf16.msra.mxu0 %v2392
        %2499 = vmatprep.subr.bf16.mxu0 %v2389
        %2500 = vmatpush1.bf16.msra.mxu0 %v2388
        %2501 = vmatprep.subr.bf16.mxu0 0
        %2502 = vmatpush2.bf16.msra.mxu0 0
        %2503 = vmatprep.subr.bf16.mxu0 0
        %2504 = vmatpush2.bf16.msra.mxu0 0
        %2505 = vmatprep.subr.bf16.mxu0 0
        %2506 = vmatpush2.bf16.msra.mxu0 0
        %2507 = vmatprep.subr.bf16.mxu0 0
        %2508 = vmatpush2.bf16.msra.mxu0 0
        %2509 = vmatprep.subr.bf16.mxu0 0
        %2510 = vmatpush2.bf16.msra.mxu0 0
        %2511 = vmatprep.subr.bf16.mxu0 0
        %2512 = vmatpush2.bf16.msra.mxu0 0
        %2513 = vmatprep.subr.bf16.mxu0 0
        %2514 = vmatpush2.bf16.msra.mxu0 0
        %2515 = vmatprep.subr.bf16.mxu0 0
        %2516 = vmatpush2.bf16.msra.mxu0 0
        %2517 = vmatprep.mubr.bf16.mxu0 0
        %2518 = vmatmul.mubr.bf16.gmra.mxu0 %v386
        %v2519 = vpop.f32.mrf.mxu0
        %v2520 = vadd.f32 %v2323, %v2519
        %v2521 = vpop.f32.mrf.mxu0
        %v2522 = vadd.f32 %v2327, %v2521
        %v2523 = vpop.f32.mrf.mxu0
        %v2524 = vadd.f32 %v2323, %v2523
        %v2525 = vpop.f32.mrf.mxu0
        %v2526 = vadd.f32 %v2327, %v2525
        %2527 = vmatprep.mubr.bf16.mxu0 0
        %2528 = vmatmul.mubr.bf16.gmra.mxu0 %v389
        %v2529 = vpop.f32.mrf.mxu0
        %v2530 = vadd.f32 %v2323, %v2529
        %v2531 = vpop.f32.mrf.mxu0
        %v2532 = vadd.f32 %v2327, %v2531
        %v2533 = vpop.f32.mrf.mxu0
        %v2534 = vpop.f32.mrf.mxu0
        %2535 = vdwg.mxu0
        %v2536 = vpack.c.bf16 %v2473, %v2469
        %v2537 = vpack.c.bf16 %v2475, %v2471
        %v2538 = vpack.c.bf16 %v2524, %v2520
        %v2539 = vpack.c.bf16 %v2526, %v2522
        %v2540 = vpack.c.bf16 %v2479, %v2479
        %v2541 = vpack.c.bf16 %v2481, %v2481
        %v2542 = vpack.c.bf16 %v2530, %v2530
        %v2543 = vpack.c.bf16 %v2532, %v2532
        %v2552 = vunpack.c.l.b16 %v2536
        %v2553 = vunpack.c.l.b16 %v2537
        %v2554 = vunpack.c.l.b16 %v2538
        %v2555 = vunpack.c.l.b16 %v2539
        %v2556 = vunpack.c.h.b16 %v2536
        %v2557 = vunpack.c.h.b16 %v2537
        %v2558 = vunpack.c.h.b16 %v2538
        %v2559 = vunpack.c.h.b16 %v2539
        %v2560 = vunpack.c.l.b16 %v2540
        %v2561 = vunpack.c.l.b16 %v2541
        %v2562 = vunpack.c.l.b16 %v2542
        %v2563 = vunpack.c.l.b16 %v2543
        %v2564 = vpack.c.b16 %v2553, %v2552
        %v2565 = vpack.c.b16 %v2555, %v2554
        %v2566 = vpack.c.b16 %v2557, %v2556
        %v2567 = vpack.c.b16 %v2559, %v2558
        %v2568 = vpack.c.b16 %v2561, %v2560
        %v2569 = vpack.c.b16 %v2563, %v2562
        %2576 = vst [vmem:[%s238 + $0x70] sm:$0xff] %v2564
        %2577 = vst [vmem:[%s238 + $0x78] sm:$0xff] %v2565
        %2578 = vst [vmem:[%s238 + $0x170] sm:$0xff] %v2566
        %2579 = vst [vmem:[%s238 + $0x178] sm:$0xff] %v2567
        %2580 = vst [vmem:[%s238 + $0x270] sm:$0x11] %v2568
        %2581 = vst [vmem:[%s238 + $0x278] sm:$0x11] %v2569
        %v2582 = vld [vmem:[%s202 + $0x80] sm:$0xff]
        %v2583 = vld [vmem:[%s202 + $0x88] sm:$0xff]
        %v2584 = vld [vmem:[%s202 + $0x180] sm:$0xff]
        %v2585 = vld [vmem:[%s202 + $0x188] sm:$0xff]
        %v2586 = vld [vmem:[%s202 + $0x280] sm:$0xff]
        %v2587 = vld [vmem:[%s202 + $0x288] sm:$0xff]
        %v2588 = vld [vmem:[%s202 + $0x380] sm:$0xff]
        %v2589 = vld [vmem:[%s202 + $0x388] sm:$0xff]
        %v2590 = vld [vmem:[%s202 + $0x480] sm:$0xff]
        %v2591 = vld [vmem:[%s202 + $0x488] sm:$0xff]
        %v2592 = vld [vmem:[%s202 + $0x580] sm:$0xff]
        %v2593 = vld [vmem:[%s202 + $0x588] sm:$0xff]
        %v2594 = vld [vmem:[%s202 + $0x680] sm:$0xff]
        %v2595 = vld [vmem:[%s202 + $0x688] sm:$0xff]
        %v2596 = vld [vmem:[%s202 + $0x780] sm:$0xff]
        %v2597 = vld [vmem:[%s202 + $0x788] sm:$0xff]
        %v2598 = vld [vmem:[%s202 + $0x880] sm:$0xff]
        %v2599 = vld [vmem:[%s202 + $0x888] sm:$0xff]
        %v2600 = vld [vmem:[%s211 + $0x20] sm:$0xf]
        %v2602 = vlaneseq
        %v2603 = vshrl.u32 %v2602, 7
        %v2604 = vsub.s32 0, %v2603
        %v2605 = vrot.slane %v2600, %v2604
        %v2606 = vlaneseq
        %v2607 = vshrl.u32 %v2606, 7
        %v2608 = vsub.s32 1, %v2607
        %v2609 = vrot.slane %v2600, %v2608
        %v2610 = vlaneseq
        %v2611 = vshrl.u32 %v2610, 7
        %v2612 = vsub.s32 2, %v2611
        %v2613 = vrot.slane %v2600, %v2612
        %v2614 = vlaneseq
        %v2615 = vshrl.u32 %v2614, 7
        %v2616 = vsub.s32 3, %v2615
        %v2617 = vrot.slane %v2600, %v2616
        %v2640 = vunpack.c.l.b16 %v2582
        %v2641 = vunpack.c.h.b16 %v2582
        %v2642 = vunpack.c.l.b16 %v2583
        %v2643 = vunpack.c.h.b16 %v2583
        %v2644 = vunpack.c.l.b16 %v2584
        %v2645 = vunpack.c.h.b16 %v2584
        %v2646 = vunpack.c.l.b16 %v2585
        %v2647 = vunpack.c.h.b16 %v2585
        %v2648 = vunpack.c.l.b16 %v2586
        %v2649 = vunpack.c.h.b16 %v2586
        %v2650 = vunpack.c.l.b16 %v2587
        %v2651 = vunpack.c.h.b16 %v2587
        %v2652 = vunpack.c.l.b16 %v2588
        %v2653 = vunpack.c.h.b16 %v2588
        %v2654 = vunpack.c.l.b16 %v2589
        %v2655 = vunpack.c.h.b16 %v2589
        %v2656 = vunpack.c.l.b16 %v2590
        %v2657 = vunpack.c.h.b16 %v2590
        %v2658 = vunpack.c.l.b16 %v2591
        %v2659 = vunpack.c.h.b16 %v2591
        %v2660 = vunpack.c.l.b16 %v2592
        %v2661 = vunpack.c.h.b16 %v2592
        %v2662 = vunpack.c.l.b16 %v2593
        %v2663 = vunpack.c.h.b16 %v2593
        %v2664 = vunpack.c.l.b16 %v2594
        %v2665 = vunpack.c.h.b16 %v2594
        %v2666 = vunpack.c.l.b16 %v2595
        %v2667 = vunpack.c.h.b16 %v2595
        %v2668 = vunpack.c.l.b16 %v2596
        %v2669 = vunpack.c.h.b16 %v2596
        %v2670 = vunpack.c.l.b16 %v2597
        %v2671 = vunpack.c.h.b16 %v2597
        %v2672 = vunpack.c.l.b16 %v2598
        %v2673 = vunpack.c.h.b16 %v2598
        %v2674 = vunpack.c.l.b16 %v2599
        %v2675 = vunpack.c.h.b16 %v2599
        %v2676 = vpack.c.b16 %v2644, %v2640
        %v2677 = vpack.c.b16 %v2645, %v2641
        %v2678 = vpack.c.b16 %v2646, %v2642
        %v2679 = vpack.c.b16 %v2647, %v2643
        %v2680 = vpack.c.b16 %v2652, %v2648
        %v2681 = vpack.c.b16 %v2653, %v2649
        %v2682 = vpack.c.b16 %v2654, %v2650
        %v2683 = vpack.c.b16 %v2655, %v2651
        %v2684 = vpack.c.b16 %v2660, %v2656
        %v2685 = vpack.c.b16 %v2661, %v2657
        %v2686 = vpack.c.b16 %v2662, %v2658
        %v2687 = vpack.c.b16 %v2663, %v2659
        %v2688 = vpack.c.b16 %v2668, %v2664
        %v2689 = vpack.c.b16 %v2669, %v2665
        %v2690 = vpack.c.b16 %v2670, %v2666
        %v2691 = vpack.c.b16 %v2671, %v2667
        %v2692 = vpack.c.b16 %v2672, %v2672
        %v2693 = vpack.c.b16 %v2673, %v2673
        %v2694 = vpack.c.b16 %v2674, %v2674
        %v2695 = vpack.c.b16 %v2675, %v2675
        %v2713 = vsel %vm391, %v2692, 0
        %v2716 = vsel %vm391, %v2693, 0
        %v2719 = vsel %vm391, %v2694, 0
        %v2722 = vsel %vm391, %v2695, 0
        %2724 = vmatprep.subr.bf16.mxu0 0
        %2725 = vmatpush1.bf16.msra.mxu0 0
        %2726 = vmatprep.subr.bf16.mxu0 0
        %2727 = vmatpush1.bf16.msra.mxu0 0
        %2728 = vmatprep.subr.bf16.mxu0 0
        %2729 = vmatpush1.bf16.msra.mxu0 0
        %2730 = vmatprep.subr.bf16.mxu0 %v2716
        %2731 = vmatpush1.bf16.msra.mxu0 %v2713
        %2732 = vmatprep.subr.bf16.mxu0 %v2689
        %2733 = vmatpush1.bf16.msra.mxu0 %v2688
        %2734 = vmatprep.subr.bf16.mxu0 %v2685
        %2735 = vmatpush1.bf16.msra.mxu0 %v2684
        %2736 = vmatprep.subr.bf16.mxu0 %v2681
        %2737 = vmatpush1.bf16.msra.mxu0 %v2680
        %2738 = vmatprep.subr.bf16.mxu0 %v2677
        %2739 = vmatpush1.bf16.msra.mxu0 %v2676
        %2740 = vmatprep.subr.bf16.mxu0 0
        %2741 = vmatpush2.bf16.msra.mxu0 0
        %2742 = vmatprep.subr.bf16.mxu0 0
        %2743 = vmatpush2.bf16.msra.mxu0 0
        %2744 = vmatprep.subr.bf16.mxu0 0
        %2745 = vmatpush2.bf16.msra.mxu0 0
        %2746 = vmatprep.subr.bf16.mxu0 0
        %2747 = vmatpush2.bf16.msra.mxu0 0
        %2748 = vmatprep.subr.bf16.mxu0 0
        %2749 = vmatpush2.bf16.msra.mxu0 0
        %2750 = vmatprep.subr.bf16.mxu0 0
        %2751 = vmatpush2.bf16.msra.mxu0 0
        %2752 = vmatprep.subr.bf16.mxu0 0
        %2753 = vmatpush2.bf16.msra.mxu0 0
        %2754 = vmatprep.subr.bf16.mxu0 0
        %2755 = vmatpush2.bf16.msra.mxu0 0
        %2756 = vmatprep.mubr.bf16.mxu0 0
        %2757 = vmatmul.mubr.bf16.gmra.mxu0 %v386
        %v2758 = vpop.f32.mrf.mxu0
        %v2759 = vadd.f32 %v2605, %v2758
        %v2760 = vpop.f32.mrf.mxu0
        %v2761 = vadd.f32 %v2609, %v2760
        %v2762 = vpop.f32.mrf.mxu0
        %v2763 = vadd.f32 %v2605, %v2762
        %v2764 = vpop.f32.mrf.mxu0
        %v2765 = vadd.f32 %v2609, %v2764
        %2766 = vmatprep.mubr.bf16.mxu0 0
        %2767 = vmatmul.mubr.bf16.gmra.mxu0 %v389
        %v2768 = vpop.f32.mrf.mxu0
        %v2769 = vadd.f32 %v2605, %v2768
        %v2770 = vpop.f32.mrf.mxu0
        %v2771 = vadd.f32 %v2609, %v2770
        %v2772 = vpop.f32.mrf.mxu0
        %v2773 = vpop.f32.mrf.mxu0
        %2774 = vdwg.mxu0
        %2775 = vmatprep.subr.bf16.mxu0 0
        %2776 = vmatpush1.bf16.msra.mxu0 0
        %2777 = vmatprep.subr.bf16.mxu0 0
        %2778 = vmatpush1.bf16.msra.mxu0 0
        %2779 = vmatprep.subr.bf16.mxu0 0
        %2780 = vmatpush1.bf16.msra.mxu0 0
        %2781 = vmatprep.subr.bf16.mxu0 %v2722
        %2782 = vmatpush1.bf16.msra.mxu0 %v2719
        %2783 = vmatprep.subr.bf16.mxu0 %v2691
        %2784 = vmatpush1.bf16.msra.mxu0 %v2690
        %2785 = vmatprep.subr.bf16.mxu0 %v2687
        %2786 = vmatpush1.bf16.msra.mxu0 %v2686
        %2787 = vmatprep.subr.bf16.mxu0 %v2683
        %2788 = vmatpush1.bf16.msra.mxu0 %v2682
        %2789 = vmatprep.subr.bf16.mxu0 %v2679
        %2790 = vmatpush1.bf16.msra.mxu0 %v2678
        %2791 = vmatprep.subr.bf16.mxu0 0
        %2792 = vmatpush2.bf16.msra.mxu0 0
        %2793 = vmatprep.subr.bf16.mxu0 0
        %2794 = vmatpush2.bf16.msra.mxu0 0
        %2795 = vmatprep.subr.bf16.mxu0 0
        %2796 = vmatpush2.bf16.msra.mxu0 0
        %2797 = vmatprep.subr.bf16.mxu0 0
        %2798 = vmatpush2.bf16.msra.mxu0 0
        %2799 = vmatprep.subr.bf16.mxu0 0
        %2800 = vmatpush2.bf16.msra.mxu0 0
        %2801 = vmatprep.subr.bf16.mxu0 0
        %2802 = vmatpush2.bf16.msra.mxu0 0
        %2803 = vmatprep.subr.bf16.mxu0 0
        %2804 = vmatpush2.bf16.msra.mxu0 0
        %2805 = vmatprep.subr.bf16.mxu0 0
        %2806 = vmatpush2.bf16.msra.mxu0 0
        %2807 = vmatprep.mubr.bf16.mxu0 0
        %2808 = vmatmul.mubr.bf16.gmra.mxu0 %v386
        %v2809 = vpop.f32.mrf.mxu0
        %v2810 = vadd.f32 %v2613, %v2809
        %v2811 = vpop.f32.mrf.mxu0
        %v2812 = vadd.f32 %v2617, %v2811
        %v2813 = vpop.f32.mrf.mxu0
        %v2814 = vadd.f32 %v2613, %v2813
        %v2815 = vpop.f32.mrf.mxu0
        %v2816 = vadd.f32 %v2617, %v2815
        %2817 = vmatprep.mubr.bf16.mxu0 0
        %2818 = vmatmul.mubr.bf16.gmra.mxu0 %v389
        %v2819 = vpop.f32.mrf.mxu0
        %v2820 = vadd.f32 %v2613, %v2819
        %v2821 = vpop.f32.mrf.mxu0
        %v2822 = vadd.f32 %v2617, %v2821
        %v2823 = vpop.f32.mrf.mxu0
        %v2824 = vpop.f32.mrf.mxu0
        %2825 = vdwg.mxu0
        %v2826 = vpack.c.bf16 %v2763, %v2759
        %v2827 = vpack.c.bf16 %v2765, %v2761
        %v2828 = vpack.c.bf16 %v2814, %v2810
        %v2829 = vpack.c.bf16 %v2816, %v2812
        %v2830 = vpack.c.bf16 %v2769, %v2769
        %v2831 = vpack.c.bf16 %v2771, %v2771
        %v2832 = vpack.c.bf16 %v2820, %v2820
        %v2833 = vpack.c.bf16 %v2822, %v2822
        %v2842 = vunpack.c.l.b16 %v2826
        %v2843 = vunpack.c.l.b16 %v2827
        %v2844 = vunpack.c.l.b16 %v2828
        %v2845 = vunpack.c.l.b16 %v2829
        %v2846 = vunpack.c.h.b16 %v2826
        %v2847 = vunpack.c.h.b16 %v2827
        %v2848 = vunpack.c.h.b16 %v2828
        %v2849 = vunpack.c.h.b16 %v2829
        %v2850 = vunpack.c.l.b16 %v2830
        %v2851 = vunpack.c.l.b16 %v2831
        %v2852 = vunpack.c.l.b16 %v2832
        %v2853 = vunpack.c.l.b16 %v2833
        %v2854 = vpack.c.b16 %v2843, %v2842
        %v2855 = vpack.c.b16 %v2845, %v2844
        %v2856 = vpack.c.b16 %v2847, %v2846
        %v2857 = vpack.c.b16 %v2849, %v2848
        %v2858 = vpack.c.b16 %v2851, %v2850
        %v2859 = vpack.c.b16 %v2853, %v2852
        %2866 = vst [vmem:[%s238 + $0x80] sm:$0xff] %v2854
        %2867 = vst [vmem:[%s238 + $0x88] sm:$0xff] %v2855
        %2868 = vst [vmem:[%s238 + $0x180] sm:$0xff] %v2856
        %2869 = vst [vmem:[%s238 + $0x188] sm:$0xff] %v2857
        %2870 = vst [vmem:[%s238 + $0x280] sm:$0x11] %v2858
        %2871 = vst [vmem:[%s238 + $0x288] sm:$0x11] %v2859
        %v2872 = vld [vmem:[%s202 + $0x90] sm:$0xff]
        %v2873 = vld [vmem:[%s202 + $0x98] sm:$0xff]
        %v2874 = vld [vmem:[%s202 + $0x190] sm:$0xff]
        %v2875 = vld [vmem:[%s202 + $0x198] sm:$0xff]
        %v2876 = vld [vmem:[%s202 + $0x290] sm:$0xff]
        %v2877 = vld [vmem:[%s202 + $0x298] sm:$0xff]
        %v2878 = vld [vmem:[%s202 + $0x390] sm:$0xff]
        %v2879 = vld [vmem:[%s202 + $0x398] sm:$0xff]
        %v2880 = vld [vmem:[%s202 + $0x490] sm:$0xff]
        %v2881 = vld [vmem:[%s202 + $0x498] sm:$0xff]
        %v2882 = vld [vmem:[%s202 + $0x590] sm:$0xff]
        %v2883 = vld [vmem:[%s202 + $0x598] sm:$0xff]
        %v2884 = vld [vmem:[%s202 + $0x690] sm:$0xff]
        %v2885 = vld [vmem:[%s202 + $0x698] sm:$0xff]
        %v2886 = vld [vmem:[%s202 + $0x790] sm:$0xff]
        %v2887 = vld [vmem:[%s202 + $0x798] sm:$0xff]
        %v2888 = vld [vmem:[%s202 + $0x890] sm:$0xff]
        %v2889 = vld [vmem:[%s202 + $0x898] sm:$0xff]
        %v2890 = vld [vmem:[%s211 + $0x24] sm:$0xf]
        %v2892 = vlaneseq
        %v2893 = vshrl.u32 %v2892, 7
        %v2894 = vsub.s32 0, %v2893
        %v2895 = vrot.slane %v2890, %v2894
        %v2896 = vlaneseq
        %v2897 = vshrl.u32 %v2896, 7
        %v2898 = vsub.s32 1, %v2897
        %v2899 = vrot.slane %v2890, %v2898
        %v2900 = vlaneseq
        %v2901 = vshrl.u32 %v2900, 7
        %v2902 = vsub.s32 2, %v2901
        %v2903 = vrot.slane %v2890, %v2902
        %v2904 = vlaneseq
        %v2905 = vshrl.u32 %v2904, 7
        %v2906 = vsub.s32 3, %v2905
        %v2907 = vrot.slane %v2890, %v2906
        %v2930 = vunpack.c.l.b16 %v2872
        %v2931 = vunpack.c.h.b16 %v2872
        %v2932 = vunpack.c.l.b16 %v2873
        %v2933 = vunpack.c.h.b16 %v2873
        %v2934 = vunpack.c.l.b16 %v2874
        %v2935 = vunpack.c.h.b16 %v2874
        %v2936 = vunpack.c.l.b16 %v2875
        %v2937 = vunpack.c.h.b16 %v2875
        %v2938 = vunpack.c.l.b16 %v2876
        %v2939 = vunpack.c.h.b16 %v2876
        %v2940 = vunpack.c.l.b16 %v2877
        %v2941 = vunpack.c.h.b16 %v2877
        %v2942 = vunpack.c.l.b16 %v2878
        %v2943 = vunpack.c.h.b16 %v2878
        %v2944 = vunpack.c.l.b16 %v2879
        %v2945 = vunpack.c.h.b16 %v2879
        %v2946 = vunpack.c.l.b16 %v2880
        %v2947 = vunpack.c.h.b16 %v2880
        %v2948 = vunpack.c.l.b16 %v2881
        %v2949 = vunpack.c.h.b16 %v2881
        %v2950 = vunpack.c.l.b16 %v2882
        %v2951 = vunpack.c.h.b16 %v2882
        %v2952 = vunpack.c.l.b16 %v2883
        %v2953 = vunpack.c.h.b16 %v2883
        %v2954 = vunpack.c.l.b16 %v2884
        %v2955 = vunpack.c.h.b16 %v2884
        %v2956 = vunpack.c.l.b16 %v2885
        %v2957 = vunpack.c.h.b16 %v2885
        %v2958 = vunpack.c.l.b16 %v2886
        %v2959 = vunpack.c.h.b16 %v2886
        %v2960 = vunpack.c.l.b16 %v2887
        %v2961 = vunpack.c.h.b16 %v2887
        %v2962 = vunpack.c.l.b16 %v2888
        %v2963 = vunpack.c.h.b16 %v2888
        %v2964 = vunpack.c.l.b16 %v2889
        %v2965 = vunpack.c.h.b16 %v2889
        %v2966 = vpack.c.b16 %v2934, %v2930
        %v2967 = vpack.c.b16 %v2935, %v2931
        %v2968 = vpack.c.b16 %v2936, %v2932
        %v2969 = vpack.c.b16 %v2937, %v2933
        %v2970 = vpack.c.b16 %v2942, %v2938
        %v2971 = vpack.c.b16 %v2943, %v2939
        %v2972 = vpack.c.b16 %v2944, %v2940
        %v2973 = vpack.c.b16 %v2945, %v2941
        %v2974 = vpack.c.b16 %v2950, %v2946
        %v2975 = vpack.c.b16 %v2951, %v2947
        %v2976 = vpack.c.b16 %v2952, %v2948
        %v2977 = vpack.c.b16 %v2953, %v2949
        %v2978 = vpack.c.b16 %v2958, %v2954
        %v2979 = vpack.c.b16 %v2959, %v2955
        %v2980 = vpack.c.b16 %v2960, %v2956
        %v2981 = vpack.c.b16 %v2961, %v2957
        %v2982 = vpack.c.b16 %v2962, %v2962
        %v2983 = vpack.c.b16 %v2963, %v2963
        %v2984 = vpack.c.b16 %v2964, %v2964
        %v2985 = vpack.c.b16 %v2965, %v2965
        %v3003 = vsel %vm391, %v2982, 0
        %v3006 = vsel %vm391, %v2983, 0
        %v3009 = vsel %vm391, %v2984, 0
        %v3012 = vsel %vm391, %v2985, 0
        %3014 = vmatprep.subr.bf16.mxu0 0
        %3015 = vmatpush1.bf16.msra.mxu0 0
        %3016 = vmatprep.subr.bf16.mxu0 0
        %3017 = vmatpush1.bf16.msra.mxu0 0
        %3018 = vmatprep.subr.bf16.mxu0 0
        %3019 = vmatpush1.bf16.msra.mxu0 0
        %3020 = vmatprep.subr.bf16.mxu0 %v3006
        %3021 = vmatpush1.bf16.msra.mxu0 %v3003
        %3022 = vmatprep.subr.bf16.mxu0 %v2979
        %3023 = vmatpush1.bf16.msra.mxu0 %v2978
        %3024 = vmatprep.subr.bf16.mxu0 %v2975
        %3025 = vmatpush1.bf16.msra.mxu0 %v2974
        %3026 = vmatprep.subr.bf16.mxu0 %v2971
        %3027 = vmatpush1.bf16.msra.mxu0 %v2970
        %3028 = vmatprep.subr.bf16.mxu0 %v2967
        %3029 = vmatpush1.bf16.msra.mxu0 %v2966
        %3030 = vmatprep.subr.bf16.mxu0 0
        %3031 = vmatpush2.bf16.msra.mxu0 0
        %3032 = vmatprep.subr.bf16.mxu0 0
        %3033 = vmatpush2.bf16.msra.mxu0 0
        %3034 = vmatprep.subr.bf16.mxu0 0
        %3035 = vmatpush2.bf16.msra.mxu0 0
        %3036 = vmatprep.subr.bf16.mxu0 0
        %3037 = vmatpush2.bf16.msra.mxu0 0
        %3038 = vmatprep.subr.bf16.mxu0 0
        %3039 = vmatpush2.bf16.msra.mxu0 0
        %3040 = vmatprep.subr.bf16.mxu0 0
        %3041 = vmatpush2.bf16.msra.mxu0 0
        %3042 = vmatprep.subr.bf16.mxu0 0
        %3043 = vmatpush2.bf16.msra.mxu0 0
        %3044 = vmatprep.subr.bf16.mxu0 0
        %3045 = vmatpush2.bf16.msra.mxu0 0
        %3046 = vmatprep.mubr.bf16.mxu0 0
        %3047 = vmatmul.mubr.bf16.gmra.mxu0 %v386
        %v3048 = vpop.f32.mrf.mxu0
        %v3049 = vadd.f32 %v2895, %v3048
        %v3050 = vpop.f32.mrf.mxu0
        %v3051 = vadd.f32 %v2899, %v3050
        %v3052 = vpop.f32.mrf.mxu0
        %v3053 = vadd.f32 %v2895, %v3052
        %v3054 = vpop.f32.mrf.mxu0
        %v3055 = vadd.f32 %v2899, %v3054
        %3056 = vmatprep.mubr.bf16.mxu0 0
        %3057 = vmatmul.mubr.bf16.gmra.mxu0 %v389
        %v3058 = vpop.f32.mrf.mxu0
        %v3059 = vadd.f32 %v2895, %v3058
        %v3060 = vpop.f32.mrf.mxu0
        %v3061 = vadd.f32 %v2899, %v3060
        %v3062 = vpop.f32.mrf.mxu0
        %v3063 = vpop.f32.mrf.mxu0
        %3064 = vdwg.mxu0
        %3065 = vmatprep.subr.bf16.mxu0 0
        %3066 = vmatpush1.bf16.msra.mxu0 0
        %3067 = vmatprep.subr.bf16.mxu0 0
        %3068 = vmatpush1.bf16.msra.mxu0 0
        %3069 = vmatprep.subr.bf16.mxu0 0
        %3070 = vmatpush1.bf16.msra.mxu0 0
        %3071 = vmatprep.subr.bf16.mxu0 %v3012
        %3072 = vmatpush1.bf16.msra.mxu0 %v3009
        %3073 = vmatprep.subr.bf16.mxu0 %v2981
        %3074 = vmatpush1.bf16.msra.mxu0 %v2980
        %3075 = vmatprep.subr.bf16.mxu0 %v2977
        %3076 = vmatpush1.bf16.msra.mxu0 %v2976
        %3077 = vmatprep.subr.bf16.mxu0 %v2973
        %3078 = vmatpush1.bf16.msra.mxu0 %v2972
        %3079 = vmatprep.subr.bf16.mxu0 %v2969
        %3080 = vmatpush1.bf16.msra.mxu0 %v2968
        %3081 = vmatprep.subr.bf16.mxu0 0
        %3082 = vmatpush2.bf16.msra.mxu0 0
        %3083 = vmatprep.subr.bf16.mxu0 0
        %3084 = vmatpush2.bf16.msra.mxu0 0
        %3085 = vmatprep.subr.bf16.mxu0 0
        %3086 = vmatpush2.bf16.msra.mxu0 0
        %3087 = vmatprep.subr.bf16.mxu0 0
        %3088 = vmatpush2.bf16.msra.mxu0 0
        %3089 = vmatprep.subr.bf16.mxu0 0
        %3090 = vmatpush2.bf16.msra.mxu0 0
        %3091 = vmatprep.subr.bf16.mxu0 0
        %3092 = vmatpush2.bf16.msra.mxu0 0
        %3093 = vmatprep.subr.bf16.mxu0 0
        %3094 = vmatpush2.bf16.msra.mxu0 0
        %3095 = vmatprep.subr.bf16.mxu0 0
        %3096 = vmatpush2.bf16.msra.mxu0 0
        %3097 = vmatprep.mubr.bf16.mxu0 0
        %3098 = vmatmul.mubr.bf16.gmra.mxu0 %v386
        %v3099 = vpop.f32.mrf.mxu0
        %v3100 = vadd.f32 %v2903, %v3099
        %v3101 = vpop.f32.mrf.mxu0
        %v3102 = vadd.f32 %v2907, %v3101
        %v3103 = vpop.f32.mrf.mxu0
        %v3104 = vadd.f32 %v2903, %v3103
        %v3105 = vpop.f32.mrf.mxu0
        %v3106 = vadd.f32 %v2907, %v3105
        %3107 = vmatprep.mubr.bf16.mxu0 0
        %3108 = vmatmul.mubr.bf16.gmra.mxu0 %v389
        %v3109 = vpop.f32.mrf.mxu0
        %v3110 = vadd.f32 %v2903, %v3109
        %v3111 = vpop.f32.mrf.mxu0
        %v3112 = vadd.f32 %v2907, %v3111
        %v3113 = vpop.f32.mrf.mxu0
        %v3114 = vpop.f32.mrf.mxu0
        %3115 = vdwg.mxu0
        %v3116 = vpack.c.bf16 %v3053, %v3049
        %v3117 = vpack.c.bf16 %v3055, %v3051
        %v3118 = vpack.c.bf16 %v3104, %v3100
        %v3119 = vpack.c.bf16 %v3106, %v3102
        %v3120 = vpack.c.bf16 %v3059, %v3059
        %v3121 = vpack.c.bf16 %v3061, %v3061
        %v3122 = vpack.c.bf16 %v3110, %v3110
        %v3123 = vpack.c.bf16 %v3112, %v3112
        %v3132 = vunpack.c.l.b16 %v3116
        %v3133 = vunpack.c.l.b16 %v3117
        %v3134 = vunpack.c.l.b16 %v3118
        %v3135 = vunpack.c.l.b16 %v3119
        %v3136 = vunpack.c.h.b16 %v3116
        %v3137 = vunpack.c.h.b16 %v3117
        %v3138 = vunpack.c.h.b16 %v3118
        %v3139 = vunpack.c.h.b16 %v3119
        %v3140 = vunpack.c.l.b16 %v3120
        %v3141 = vunpack.c.l.b16 %v3121
        %v3142 = vunpack.c.l.b16 %v3122
        %v3143 = vunpack.c.l.b16 %v3123
        %v3144 = vpack.c.b16 %v3133, %v3132
        %v3145 = vpack.c.b16 %v3135, %v3134
        %v3146 = vpack.c.b16 %v3137, %v3136
        %v3147 = vpack.c.b16 %v3139, %v3138
        %v3148 = vpack.c.b16 %v3141, %v3140
        %v3149 = vpack.c.b16 %v3143, %v3142
        %3156 = vst [vmem:[%s238 + $0x90] sm:$0xff] %v3144
        %3157 = vst [vmem:[%s238 + $0x98] sm:$0xff] %v3145
        %3158 = vst [vmem:[%s238 + $0x190] sm:$0xff] %v3146
        %3159 = vst [vmem:[%s238 + $0x198] sm:$0xff] %v3147
        %3160 = vst [vmem:[%s238 + $0x290] sm:$0x11] %v3148
        %3161 = vst [vmem:[%s238 + $0x298] sm:$0x11] %v3149
        %v3162 = vld [vmem:[%s202 + $0xa0] sm:$0xff]
        %v3163 = vld [vmem:[%s202 + $0xa8] sm:$0xff]
        %v3164 = vld [vmem:[%s202 + $0x1a0] sm:$0xff]
        %v3165 = vld [vmem:[%s202 + $0x1a8] sm:$0xff]
        %v3166 = vld [vmem:[%s202 + $0x2a0] sm:$0xff]
        %v3167 = vld [vmem:[%s202 + $0x2a8] sm:$0xff]
        %v3168 = vld [vmem:[%s202 + $0x3a0] sm:$0xff]
        %v3169 = vld [vmem:[%s202 + $0x3a8] sm:$0xff]
        %v3170 = vld [vmem:[%s202 + $0x4a0] sm:$0xff]
        %v3171 = vld [vmem:[%s202 + $0x4a8] sm:$0xff]
        %v3172 = vld [vmem:[%s202 + $0x5a0] sm:$0xff]
        %v3173 = vld [vmem:[%s202 + $0x5a8] sm:$0xff]
        %v3174 = vld [vmem:[%s202 + $0x6a0] sm:$0xff]
        %v3175 = vld [vmem:[%s202 + $0x6a8] sm:$0xff]
        %v3176 = vld [vmem:[%s202 + $0x7a0] sm:$0xff]
        %v3177 = vld [vmem:[%s202 + $0x7a8] sm:$0xff]
        %v3178 = vld [vmem:[%s202 + $0x8a0] sm:$0xff]
        %v3179 = vld [vmem:[%s202 + $0x8a8] sm:$0xff]
        %v3180 = vld [vmem:[%s211 + $0x28] sm:$0xf]
        %v3182 = vlaneseq
        %v3183 = vshrl.u32 %v3182, 7
        %v3184 = vsub.s32 0, %v3183
        %v3185 = vrot.slane %v3180, %v3184
        %v3186 = vlaneseq
        %v3187 = vshrl.u32 %v3186, 7
        %v3188 = vsub.s32 1, %v3187
        %v3189 = vrot.slane %v3180, %v3188
        %v3190 = vlaneseq
        %v3191 = vshrl.u32 %v3190, 7
        %v3192 = vsub.s32 2, %v3191
        %v3193 = vrot.slane %v3180, %v3192
        %v3194 = vlaneseq
        %v3195 = vshrl.u32 %v3194, 7
        %v3196 = vsub.s32 3, %v3195
        %v3197 = vrot.slane %v3180, %v3196
        %v3220 = vunpack.c.l.b16 %v3162
        %v3221 = vunpack.c.h.b16 %v3162
        %v3222 = vunpack.c.l.b16 %v3163
        %v3223 = vunpack.c.h.b16 %v3163
        %v3224 = vunpack.c.l.b16 %v3164
        %v3225 = vunpack.c.h.b16 %v3164
        %v3226 = vunpack.c.l.b16 %v3165
        %v3227 = vunpack.c.h.b16 %v3165
        %v3228 = vunpack.c.l.b16 %v3166
        %v3229 = vunpack.c.h.b16 %v3166
        %v3230 = vunpack.c.l.b16 %v3167
        %v3231 = vunpack.c.h.b16 %v3167
        %v3232 = vunpack.c.l.b16 %v3168
        %v3233 = vunpack.c.h.b16 %v3168
        %v3234 = vunpack.c.l.b16 %v3169
        %v3235 = vunpack.c.h.b16 %v3169
        %v3236 = vunpack.c.l.b16 %v3170
        %v3237 = vunpack.c.h.b16 %v3170
        %v3238 = vunpack.c.l.b16 %v3171
        %v3239 = vunpack.c.h.b16 %v3171
        %v3240 = vunpack.c.l.b16 %v3172
        %v3241 = vunpack.c.h.b16 %v3172
        %v3242 = vunpack.c.l.b16 %v3173
        %v3243 = vunpack.c.h.b16 %v3173
        %v3244 = vunpack.c.l.b16 %v3174
        %v3245 = vunpack.c.h.b16 %v3174
        %v3246 = vunpack.c.l.b16 %v3175
        %v3247 = vunpack.c.h.b16 %v3175
        %v3248 = vunpack.c.l.b16 %v3176
        %v3249 = vunpack.c.h.b16 %v3176
        %v3250 = vunpack.c.l.b16 %v3177
        %v3251 = vunpack.c.h.b16 %v3177
        %v3252 = vunpack.c.l.b16 %v3178
        %v3253 = vunpack.c.h.b16 %v3178
        %v3254 = vunpack.c.l.b16 %v3179
        %v3255 = vunpack.c.h.b16 %v3179
        %v3256 = vpack.c.b16 %v3224, %v3220
        %v3257 = vpack.c.b16 %v3225, %v3221
        %v3258 = vpack.c.b16 %v3226, %v3222
        %v3259 = vpack.c.b16 %v3227, %v3223
        %v3260 = vpack.c.b16 %v3232, %v3228
        %v3261 = vpack.c.b16 %v3233, %v3229
        %v3262 = vpack.c.b16 %v3234, %v3230
        %v3263 = vpack.c.b16 %v3235, %v3231
        %v3264 = vpack.c.b16 %v3240, %v3236
        %v3265 = vpack.c.b16 %v3241, %v3237
        %v3266 = vpack.c.b16 %v3242, %v3238
        %v3267 = vpack.c.b16 %v3243, %v3239
        %v3268 = vpack.c.b16 %v3248, %v3244
        %v3269 = vpack.c.b16 %v3249, %v3245
        %v3270 = vpack.c.b16 %v3250, %v3246
        %v3271 = vpack.c.b16 %v3251, %v3247
        %v3272 = vpack.c.b16 %v3252, %v3252
        %v3273 = vpack.c.b16 %v3253, %v3253
        %v3274 = vpack.c.b16 %v3254, %v3254
        %v3275 = vpack.c.b16 %v3255, %v3255
        %v3293 = vsel %vm391, %v3272, 0
        %v3296 = vsel %vm391, %v3273, 0
        %v3299 = vsel %vm391, %v3274, 0
        %v3302 = vsel %vm391, %v3275, 0
        %3304 = vmatprep.subr.bf16.mxu0 0
        %3305 = vmatpush1.bf16.msra.mxu0 0
        %3306 = vmatprep.subr.bf16.mxu0 0
        %3307 = vmatpush1.bf16.msra.mxu0 0
        %3308 = vmatprep.subr.bf16.mxu0 0
        %3309 = vmatpush1.bf16.msra.mxu0 0
        %3310 = vmatprep.subr.bf16.mxu0 %v3296
        %3311 = vmatpush1.bf16.msra.mxu0 %v3293
        %3312 = vmatprep.subr.bf16.mxu0 %v3269
        %3313 = vmatpush1.bf16.msra.mxu0 %v3268
        %3314 = vmatprep.subr.bf16.mxu0 %v3265
        %3315 = vmatpush1.bf16.msra.mxu0 %v3264
        %3316 = vmatprep.subr.bf16.mxu0 %v3261
        %3317 = vmatpush1.bf16.msra.mxu0 %v3260
        %3318 = vmatprep.subr.bf16.mxu0 %v3257
        %3319 = vmatpush1.bf16.msra.mxu0 %v3256
        %3320 = vmatprep.subr.bf16.mxu0 0
        %3321 = vmatpush2.bf16.msra.mxu0 0
        %3322 = vmatprep.subr.bf16.mxu0 0
        %3323 = vmatpush2.bf16.msra.mxu0 0
        %3324 = vmatprep.subr.bf16.mxu0 0
        %3325 = vmatpush2.bf16.msra.mxu0 0
        %3326 = vmatprep.subr.bf16.mxu0 0
        %3327 = vmatpush2.bf16.msra.mxu0 0
        %3328 = vmatprep.subr.bf16.mxu0 0
        %3329 = vmatpush2.bf16.msra.mxu0 0
        %3330 = vmatprep.subr.bf16.mxu0 0
        %3331 = vmatpush2.bf16.msra.mxu0 0
        %3332 = vmatprep.subr.bf16.mxu0 0
        %3333 = vmatpush2.bf16.msra.mxu0 0
        %3334 = vmatprep.subr.bf16.mxu0 0
        %3335 = vmatpush2.bf16.msra.mxu0 0
        %3336 = vmatprep.mubr.bf16.mxu0 0
        %3337 = vmatmul.mubr.bf16.gmra.mxu0 %v386
        %v3338 = vpop.f32.mrf.mxu0
        %v3339 = vadd.f32 %v3185, %v3338
        %v3340 = vpop.f32.mrf.mxu0
        %v3341 = vadd.f32 %v3189, %v3340
        %v3342 = vpop.f32.mrf.mxu0
        %v3343 = vadd.f32 %v3185, %v3342
        %v3344 = vpop.f32.mrf.mxu0
        %v3345 = vadd.f32 %v3189, %v3344
        %3346 = vmatprep.mubr.bf16.mxu0 0
        %3347 = vmatmul.mubr.bf16.gmra.mxu0 %v389
        %v3348 = vpop.f32.mrf.mxu0
        %v3349 = vadd.f32 %v3185, %v3348
        %v3350 = vpop.f32.mrf.mxu0
        %v3351 = vadd.f32 %v3189, %v3350
        %v3352 = vpop.f32.mrf.mxu0
        %v3353 = vpop.f32.mrf.mxu0
        %3354 = vdwg.mxu0
        %3355 = vmatprep.subr.bf16.mxu0 0
        %3356 = vmatpush1.bf16.msra.mxu0 0
        %3357 = vmatprep.subr.bf16.mxu0 0
        %3358 = vmatpush1.bf16.msra.mxu0 0
        %3359 = vmatprep.subr.bf16.mxu0 0
        %3360 = vmatpush1.bf16.msra.mxu0 0
        %3361 = vmatprep.subr.bf16.mxu0 %v3302
        %3362 = vmatpush1.bf16.msra.mxu0 %v3299
        %3363 = vmatprep.subr.bf16.mxu0 %v3271
        %3364 = vmatpush1.bf16.msra.mxu0 %v3270
        %3365 = vmatprep.subr.bf16.mxu0 %v3267
        %3366 = vmatpush1.bf16.msra.mxu0 %v3266
        %3367 = vmatprep.subr.bf16.mxu0 %v3263
        %3368 = vmatpush1.bf16.msra.mxu0 %v3262
        %3369 = vmatprep.subr.bf16.mxu0 %v3259
        %3370 = vmatpush1.bf16.msra.mxu0 %v3258
        %3371 = vmatprep.subr.bf16.mxu0 0
        %3372 = vmatpush2.bf16.msra.mxu0 0
        %3373 = vmatprep.subr.bf16.mxu0 0
        %3374 = vmatpush2.bf16.msra.mxu0 0
        %3375 = vmatprep.subr.bf16.mxu0 0
        %3376 = vmatpush2.bf16.msra.mxu0 0
        %3377 = vmatprep.subr.bf16.mxu0 0
        %3378 = vmatpush2.bf16.msra.mxu0 0
        %3379 = vmatprep.subr.bf16.mxu0 0
        %3380 = vmatpush2.bf16.msra.mxu0 0
        %3381 = vmatprep.subr.bf16.mxu0 0
        %3382 = vmatpush2.bf16.msra.mxu0 0
        %3383 = vmatprep.subr.bf16.mxu0 0
        %3384 = vmatpush2.bf16.msra.mxu0 0
        %3385 = vmatprep.subr.bf16.mxu0 0
        %3386 = vmatpush2.bf16.msra.mxu0 0
        %3387 = vmatprep.mubr.bf16.mxu0 0
        %3388 = vmatmul.mubr.bf16.gmra.mxu0 %v386
        %v3389 = vpop.f32.mrf.mxu0
        %v3390 = vadd.f32 %v3193, %v3389
        %v3391 = vpop.f32.mrf.mxu0
        %v3392 = vadd.f32 %v3197, %v3391
        %v3393 = vpop.f32.mrf.mxu0
        %v3394 = vadd.f32 %v3193, %v3393
        %v3395 = vpop.f32.mrf.mxu0
        %v3396 = vadd.f32 %v3197, %v3395
        %3397 = vmatprep.mubr.bf16.mxu0 0
        %3398 = vmatmul.mubr.bf16.gmra.mxu0 %v389
        %v3399 = vpop.f32.mrf.mxu0
        %v3400 = vadd.f32 %v3193, %v3399
        %v3401 = vpop.f32.mrf.mxu0
        %v3402 = vadd.f32 %v3197, %v3401
        %v3403 = vpop.f32.mrf.mxu0
        %v3404 = vpop.f32.mrf.mxu0
        %3405 = vdwg.mxu0
        %v3406 = vpack.c.bf16 %v3343, %v3339
        %v3407 = vpack.c.bf16 %v3345, %v3341
        %v3408 = vpack.c.bf16 %v3394, %v3390
        %v3409 = vpack.c.bf16 %v3396, %v3392
        %v3410 = vpack.c.bf16 %v3349, %v3349
        %v3411 = vpack.c.bf16 %v3351, %v3351
        %v3412 = vpack.c.bf16 %v3400, %v3400
        %v3413 = vpack.c.bf16 %v3402, %v3402
        %v3422 = vunpack.c.l.b16 %v3406
        %v3423 = vunpack.c.l.b16 %v3407
        %v3424 = vunpack.c.l.b16 %v3408
        %v3425 = vunpack.c.l.b16 %v3409
        %v3426 = vunpack.c.h.b16 %v3406
        %v3427 = vunpack.c.h.b16 %v3407
        %v3428 = vunpack.c.h.b16 %v3408
        %v3429 = vunpack.c.h.b16 %v3409
        %v3430 = vunpack.c.l.b16 %v3410
        %v3431 = vunpack.c.l.b16 %v3411
        %v3432 = vunpack.c.l.b16 %v3412
        %v3433 = vunpack.c.l.b16 %v3413
        %v3434 = vpack.c.b16 %v3423, %v3422
        %v3435 = vpack.c.b16 %v3425, %v3424
        %v3436 = vpack.c.b16 %v3427, %v3426
        %v3437 = vpack.c.b16 %v3429, %v3428
        %v3438 = vpack.c.b16 %v3431, %v3430
        %v3439 = vpack.c.b16 %v3433, %v3432
        %3446 = vst [vmem:[%s238 + $0xa0] sm:$0xff] %v3434
        %3447 = vst [vmem:[%s238 + $0xa8] sm:$0xff] %v3435
        %3448 = vst [vmem:[%s238 + $0x1a0] sm:$0xff] %v3436
        %3449 = vst [vmem:[%s238 + $0x1a8] sm:$0xff] %v3437
        %3450 = vst [vmem:[%s238 + $0x2a0] sm:$0x11] %v3438
        %3451 = vst [vmem:[%s238 + $0x2a8] sm:$0x11] %v3439
        %v3452 = vld [vmem:[%s202 + $0xb0] sm:$0xff]
        %v3453 = vld [vmem:[%s202 + $0xb8] sm:$0xff]
        %v3454 = vld [vmem:[%s202 + $0x1b0] sm:$0xff]
        %v3455 = vld [vmem:[%s202 + $0x1b8] sm:$0xff]
        %v3456 = vld [vmem:[%s202 + $0x2b0] sm:$0xff]
        %v3457 = vld [vmem:[%s202 + $0x2b8] sm:$0xff]
        %v3458 = vld [vmem:[%s202 + $0x3b0] sm:$0xff]
        %v3459 = vld [vmem:[%s202 + $0x3b8] sm:$0xff]
        %v3460 = vld [vmem:[%s202 + $0x4b0] sm:$0xff]
        %v3461 = vld [vmem:[%s202 + $0x4b8] sm:$0xff]
        %v3462 = vld [vmem:[%s202 + $0x5b0] sm:$0xff]
        %v3463 = vld [vmem:[%s202 + $0x5b8] sm:$0xff]
        %v3464 = vld [vmem:[%s202 + $0x6b0] sm:$0xff]
        %v3465 = vld [vmem:[%s202 + $0x6b8] sm:$0xff]
        %v3466 = vld [vmem:[%s202 + $0x7b0] sm:$0xff]
        %v3467 = vld [vmem:[%s202 + $0x7b8] sm:$0xff]
        %v3468 = vld [vmem:[%s202 + $0x8b0] sm:$0xff]
        %v3469 = vld [vmem:[%s202 + $0x8b8] sm:$0xff]
        %v3470 = vld [vmem:[%s211 + $0x2c] sm:$0xf]
        %v3472 = vlaneseq
        %v3473 = vshrl.u32 %v3472, 7
        %v3474 = vsub.s32 0, %v3473
        %v3475 = vrot.slane %v3470, %v3474
        %v3476 = vlaneseq
        %v3477 = vshrl.u32 %v3476, 7
        %v3478 = vsub.s32 1, %v3477
        %v3479 = vrot.slane %v3470, %v3478
        %v3480 = vlaneseq
        %v3481 = vshrl.u32 %v3480, 7
        %v3482 = vsub.s32 2, %v3481
        %v3483 = vrot.slane %v3470, %v3482
        %v3484 = vlaneseq
        %v3485 = vshrl.u32 %v3484, 7
        %v3486 = vsub.s32 3, %v3485
        %v3487 = vrot.slane %v3470, %v3486
        %v3510 = vunpack.c.l.b16 %v3452
        %v3511 = vunpack.c.h.b16 %v3452
        %v3512 = vunpack.c.l.b16 %v3453
        %v3513 = vunpack.c.h.b16 %v3453
        %v3514 = vunpack.c.l.b16 %v3454
        %v3515 = vunpack.c.h.b16 %v3454
        %v3516 = vunpack.c.l.b16 %v3455
        %v3517 = vunpack.c.h.b16 %v3455
        %v3518 = vunpack.c.l.b16 %v3456
        %v3519 = vunpack.c.h.b16 %v3456
        %v3520 = vunpack.c.l.b16 %v3457
        %v3521 = vunpack.c.h.b16 %v3457
        %v3522 = vunpack.c.l.b16 %v3458
        %v3523 = vunpack.c.h.b16 %v3458
        %v3524 = vunpack.c.l.b16 %v3459
        %v3525 = vunpack.c.h.b16 %v3459
        %v3526 = vunpack.c.l.b16 %v3460
        %v3527 = vunpack.c.h.b16 %v3460
        %v3528 = vunpack.c.l.b16 %v3461
        %v3529 = vunpack.c.h.b16 %v3461
        %v3530 = vunpack.c.l.b16 %v3462
        %v3531 = vunpack.c.h.b16 %v3462
        %v3532 = vunpack.c.l.b16 %v3463
        %v3533 = vunpack.c.h.b16 %v3463
        %v3534 = vunpack.c.l.b16 %v3464
        %v3535 = vunpack.c.h.b16 %v3464
        %v3536 = vunpack.c.l.b16 %v3465
        %v3537 = vunpack.c.h.b16 %v3465
        %v3538 = vunpack.c.l.b16 %v3466
        %v3539 = vunpack.c.h.b16 %v3466
        %v3540 = vunpack.c.l.b16 %v3467
        %v3541 = vunpack.c.h.b16 %v3467
        %v3542 = vunpack.c.l.b16 %v3468
        %v3543 = vunpack.c.h.b16 %v3468
        %v3544 = vunpack.c.l.b16 %v3469
        %v3545 = vunpack.c.h.b16 %v3469
        %v3546 = vpack.c.b16 %v3514, %v3510
        %v3547 = vpack.c.b16 %v3515, %v3511
        %v3548 = vpack.c.b16 %v3516, %v3512
        %v3549 = vpack.c.b16 %v3517, %v3513
        %v3550 = vpack.c.b16 %v3522, %v3518
        %v3551 = vpack.c.b16 %v3523, %v3519
        %v3552 = vpack.c.b16 %v3524, %v3520
        %v3553 = vpack.c.b16 %v3525, %v3521
        %v3554 = vpack.c.b16 %v3530, %v3526
        %v3555 = vpack.c.b16 %v3531, %v3527
        %v3556 = vpack.c.b16 %v3532, %v3528
        %v3557 = vpack.c.b16 %v3533, %v3529
        %v3558 = vpack.c.b16 %v3538, %v3534
        %v3559 = vpack.c.b16 %v3539, %v3535
        %v3560 = vpack.c.b16 %v3540, %v3536
        %v3561 = vpack.c.b16 %v3541, %v3537
        %v3562 = vpack.c.b16 %v3542, %v3542
        %v3563 = vpack.c.b16 %v3543, %v3543
        %v3564 = vpack.c.b16 %v3544, %v3544
        %v3565 = vpack.c.b16 %v3545, %v3545
        %v3583 = vsel %vm391, %v3562, 0
        %v3586 = vsel %vm391, %v3563, 0
        %v3589 = vsel %vm391, %v3564, 0
        %v3592 = vsel %vm391, %v3565, 0
        %3594 = vmatprep.subr.bf16.mxu0 0
        %3595 = vmatpush1.bf16.msra.mxu0 0
        %3596 = vmatprep.subr.bf16.mxu0 0
        %3597 = vmatpush1.bf16.msra.mxu0 0
        %3598 = vmatprep.subr.bf16.mxu0 0
        %3599 = vmatpush1.bf16.msra.mxu0 0
        %3600 = vmatprep.subr.bf16.mxu0 %v3586
        %3601 = vmatpush1.bf16.msra.mxu0 %v3583
        %3602 = vmatprep.subr.bf16.mxu0 %v3559
        %3603 = vmatpush1.bf16.msra.mxu0 %v3558
        %3604 = vmatprep.subr.bf16.mxu0 %v3555
        %3605 = vmatpush1.bf16.msra.mxu0 %v3554
        %3606 = vmatprep.subr.bf16.mxu0 %v3551
        %3607 = vmatpush1.bf16.msra.mxu0 %v3550
        %3608 = vmatprep.subr.bf16.mxu0 %v3547
        %3609 = vmatpush1.bf16.msra.mxu0 %v3546
        %3610 = vmatprep.subr.bf16.mxu0 0
        %3611 = vmatpush2.bf16.msra.mxu0 0
        %3612 = vmatprep.subr.bf16.mxu0 0
        %3613 = vmatpush2.bf16.msra.mxu0 0
        %3614 = vmatprep.subr.bf16.mxu0 0
        %3615 = vmatpush2.bf16.msra.mxu0 0
        %3616 = vmatprep.subr.bf16.mxu0 0
        %3617 = vmatpush2.bf16.msra.mxu0 0
        %3618 = vmatprep.subr.bf16.mxu0 0
        %3619 = vmatpush2.bf16.msra.mxu0 0
        %3620 = vmatprep.subr.bf16.mxu0 0
        %3621 = vmatpush2.bf16.msra.mxu0 0
        %3622 = vmatprep.subr.bf16.mxu0 0
        %3623 = vmatpush2.bf16.msra.mxu0 0
        %3624 = vmatprep.subr.bf16.mxu0 0
        %3625 = vmatpush2.bf16.msra.mxu0 0
        %3626 = vmatprep.mubr.bf16.mxu0 0
        %3627 = vmatmul.mubr.bf16.gmra.mxu0 %v386
        %v3628 = vpop.f32.mrf.mxu0
        %v3629 = vadd.f32 %v3475, %v3628
        %v3630 = vpop.f32.mrf.mxu0
        %v3631 = vadd.f32 %v3479, %v3630
        %v3632 = vpop.f32.mrf.mxu0
        %v3633 = vadd.f32 %v3475, %v3632
        %v3634 = vpop.f32.mrf.mxu0
        %v3635 = vadd.f32 %v3479, %v3634
        %3636 = vmatprep.mubr.bf16.mxu0 0
        %3637 = vmatmul.mubr.bf16.gmra.mxu0 %v389
        %v3638 = vpop.f32.mrf.mxu0
        %v3639 = vadd.f32 %v3475, %v3638
        %v3640 = vpop.f32.mrf.mxu0
        %v3641 = vadd.f32 %v3479, %v3640
        %v3642 = vpop.f32.mrf.mxu0
        %v3643 = vpop.f32.mrf.mxu0
        %3644 = vdwg.mxu0
        %3645 = vmatprep.subr.bf16.mxu0 0
        %3646 = vmatpush1.bf16.msra.mxu0 0
        %3647 = vmatprep.subr.bf16.mxu0 0
        %3648 = vmatpush1.bf16.msra.mxu0 0
        %3649 = vmatprep.subr.bf16.mxu0 0
        %3650 = vmatpush1.bf16.msra.mxu0 0
        %3651 = vmatprep.subr.bf16.mxu0 %v3592
        %3652 = vmatpush1.bf16.msra.mxu0 %v3589
        %3653 = vmatprep.subr.bf16.mxu0 %v3561
        %3654 = vmatpush1.bf16.msra.mxu0 %v3560
        %3655 = vmatprep.subr.bf16.mxu0 %v3557
        %3656 = vmatpush1.bf16.msra.mxu0 %v3556
        %3657 = vmatprep.subr.bf16.mxu0 %v3553
        %3658 = vmatpush1.bf16.msra.mxu0 %v3552
        %3659 = vmatprep.subr.bf16.mxu0 %v3549
        %3660 = vmatpush1.bf16.msra.mxu0 %v3548
        %3661 = vmatprep.subr.bf16.mxu0 0
        %3662 = vmatpush2.bf16.msra.mxu0 0
        %3663 = vmatprep.subr.bf16.mxu0 0
        %3664 = vmatpush2.bf16.msra.mxu0 0
        %3665 = vmatprep.subr.bf16.mxu0 0
        %3666 = vmatpush2.bf16.msra.mxu0 0
        %3667 = vmatprep.subr.bf16.mxu0 0
        %3668 = vmatpush2.bf16.msra.mxu0 0
        %3669 = vmatprep.subr.bf16.mxu0 0
        %3670 = vmatpush2.bf16.msra.mxu0 0
        %3671 = vmatprep.subr.bf16.mxu0 0
        %3672 = vmatpush2.bf16.msra.mxu0 0
        %3673 = vmatprep.subr.bf16.mxu0 0
        %3674 = vmatpush2.bf16.msra.mxu0 0
        %3675 = vmatprep.subr.bf16.mxu0 0
        %3676 = vmatpush2.bf16.msra.mxu0 0
        %3677 = vmatprep.mubr.bf16.mxu0 0
        %3678 = vmatmul.mubr.bf16.gmra.mxu0 %v386
        %v3679 = vpop.f32.mrf.mxu0
        %v3680 = vadd.f32 %v3483, %v3679
        %v3681 = vpop.f32.mrf.mxu0
        %v3682 = vadd.f32 %v3487, %v3681
        %v3683 = vpop.f32.mrf.mxu0
        %v3684 = vadd.f32 %v3483, %v3683
        %v3685 = vpop.f32.mrf.mxu0
        %v3686 = vadd.f32 %v3487, %v3685
        %3687 = vmatprep.mubr.bf16.mxu0 0
        %3688 = vmatmul.mubr.bf16.gmra.mxu0 %v389
        %v3689 = vpop.f32.mrf.mxu0
        %v3690 = vadd.f32 %v3483, %v3689
        %v3691 = vpop.f32.mrf.mxu0
        %v3692 = vadd.f32 %v3487, %v3691
        %v3693 = vpop.f32.mrf.mxu0
        %v3694 = vpop.f32.mrf.mxu0
        %3695 = vdwg.mxu0
        %v3696 = vpack.c.bf16 %v3633, %v3629
        %v3697 = vpack.c.bf16 %v3635, %v3631
        %v3698 = vpack.c.bf16 %v3684, %v3680
        %v3699 = vpack.c.bf16 %v3686, %v3682
        %v3700 = vpack.c.bf16 %v3639, %v3639
        %v3701 = vpack.c.bf16 %v3641, %v3641
        %v3702 = vpack.c.bf16 %v3690, %v3690
        %v3703 = vpack.c.bf16 %v3692, %v3692
        %v3712 = vunpack.c.l.b16 %v3696
        %v3713 = vunpack.c.l.b16 %v3697
        %v3714 = vunpack.c.l.b16 %v3698
        %v3715 = vunpack.c.l.b16 %v3699
        %v3716 = vunpack.c.h.b16 %v3696
        %v3717 = vunpack.c.h.b16 %v3697
        %v3718 = vunpack.c.h.b16 %v3698
        %v3719 = vunpack.c.h.b16 %v3699
        %v3720 = vunpack.c.l.b16 %v3700
        %v3721 = vunpack.c.l.b16 %v3701
        %v3722 = vunpack.c.l.b16 %v3702
        %v3723 = vunpack.c.l.b16 %v3703
        %v3724 = vpack.c.b16 %v3713, %v3712
        %v3725 = vpack.c.b16 %v3715, %v3714
        %v3726 = vpack.c.b16 %v3717, %v3716
        %v3727 = vpack.c.b16 %v3719, %v3718
        %v3728 = vpack.c.b16 %v3721, %v3720
        %v3729 = vpack.c.b16 %v3723, %v3722
        %3736 = vst [vmem:[%s238 + $0xb0] sm:$0xff] %v3724
        %3737 = vst [vmem:[%s238 + $0xb8] sm:$0xff] %v3725
        %3738 = vst [vmem:[%s238 + $0x1b0] sm:$0xff] %v3726
        %3739 = vst [vmem:[%s238 + $0x1b8] sm:$0xff] %v3727
        %3740 = vst [vmem:[%s238 + $0x2b0] sm:$0x11] %v3728
        %3741 = vst [vmem:[%s238 + $0x2b8] sm:$0x11] %v3729
        %v3742 = vld [vmem:[%s202 + $0xc0] sm:$0xff]
        %v3743 = vld [vmem:[%s202 + $0xc8] sm:$0xff]
        %v3744 = vld [vmem:[%s202 + $0x1c0] sm:$0xff]
        %v3745 = vld [vmem:[%s202 + $0x1c8] sm:$0xff]
        %v3746 = vld [vmem:[%s202 + $0x2c0] sm:$0xff]
        %v3747 = vld [vmem:[%s202 + $0x2c8] sm:$0xff]
        %v3748 = vld [vmem:[%s202 + $0x3c0] sm:$0xff]
        %v3749 = vld [vmem:[%s202 + $0x3c8] sm:$0xff]
        %v3750 = vld [vmem:[%s202 + $0x4c0] sm:$0xff]
        %v3751 = vld [vmem:[%s202 + $0x4c8] sm:$0xff]
        %v3752 = vld [vmem:[%s202 + $0x5c0] sm:$0xff]
        %v3753 = vld [vmem:[%s202 + $0x5c8] sm:$0xff]
        %v3754 = vld [vmem:[%s202 + $0x6c0] sm:$0xff]
        %v3755 = vld [vmem:[%s202 + $0x6c8] sm:$0xff]
        %v3756 = vld [vmem:[%s202 + $0x7c0] sm:$0xff]
        %v3757 = vld [vmem:[%s202 + $0x7c8] sm:$0xff]
        %v3758 = vld [vmem:[%s202 + $0x8c0] sm:$0xff]
        %v3759 = vld [vmem:[%s202 + $0x8c8] sm:$0xff]
        %v3760 = vld [vmem:[%s211 + $0x30] sm:$0xf]
        %v3762 = vlaneseq
        %v3763 = vshrl.u32 %v3762, 7
        %v3764 = vsub.s32 0, %v3763
        %v3765 = vrot.slane %v3760, %v3764
        %v3766 = vlaneseq
        %v3767 = vshrl.u32 %v3766, 7
        %v3768 = vsub.s32 1, %v3767
        %v3769 = vrot.slane %v3760, %v3768
        %v3770 = vlaneseq
        %v3771 = vshrl.u32 %v3770, 7
        %v3772 = vsub.s32 2, %v3771
        %v3773 = vrot.slane %v3760, %v3772
        %v3774 = vlaneseq
        %v3775 = vshrl.u32 %v3774, 7
        %v3776 = vsub.s32 3, %v3775
        %v3777 = vrot.slane %v3760, %v3776
        %v3800 = vunpack.c.l.b16 %v3742
        %v3801 = vunpack.c.h.b16 %v3742
        %v3802 = vunpack.c.l.b16 %v3743
        %v3803 = vunpack.c.h.b16 %v3743
        %v3804 = vunpack.c.l.b16 %v3744
        %v3805 = vunpack.c.h.b16 %v3744
        %v3806 = vunpack.c.l.b16 %v3745
        %v3807 = vunpack.c.h.b16 %v3745
        %v3808 = vunpack.c.l.b16 %v3746
        %v3809 = vunpack.c.h.b16 %v3746
        %v3810 = vunpack.c.l.b16 %v3747
        %v3811 = vunpack.c.h.b16 %v3747
        %v3812 = vunpack.c.l.b16 %v3748
        %v3813 = vunpack.c.h.b16 %v3748
        %v3814 = vunpack.c.l.b16 %v3749
        %v3815 = vunpack.c.h.b16 %v3749
        %v3816 = vunpack.c.l.b16 %v3750
        %v3817 = vunpack.c.h.b16 %v3750
        %v3818 = vunpack.c.l.b16 %v3751
        %v3819 = vunpack.c.h.b16 %v3751
        %v3820 = vunpack.c.l.b16 %v3752
        %v3821 = vunpack.c.h.b16 %v3752
        %v3822 = vunpack.c.l.b16 %v3753
        %v3823 = vunpack.c.h.b16 %v3753
        %v3824 = vunpack.c.l.b16 %v3754
        %v3825 = vunpack.c.h.b16 %v3754
        %v3826 = vunpack.c.l.b16 %v3755
        %v3827 = vunpack.c.h.b16 %v3755
        %v3828 = vunpack.c.l.b16 %v3756
        %v3829 = vunpack.c.h.b16 %v3756
        %v3830 = vunpack.c.l.b16 %v3757
        %v3831 = vunpack.c.h.b16 %v3757
        %v3832 = vunpack.c.l.b16 %v3758
        %v3833 = vunpack.c.h.b16 %v3758
        %v3834 = vunpack.c.l.b16 %v3759
        %v3835 = vunpack.c.h.b16 %v3759
        %v3836 = vpack.c.b16 %v3804, %v3800
        %v3837 = vpack.c.b16 %v3805, %v3801
        %v3838 = vpack.c.b16 %v3806, %v3802
        %v3839 = vpack.c.b16 %v3807, %v3803
        %v3840 = vpack.c.b16 %v3812, %v3808
        %v3841 = vpack.c.b16 %v3813, %v3809
        %v3842 = vpack.c.b16 %v3814, %v3810
        %v3843 = vpack.c.b16 %v3815, %v3811
        %v3844 = vpack.c.b16 %v3820, %v3816
        %v3845 = vpack.c.b16 %v3821, %v3817
        %v3846 = vpack.c.b16 %v3822, %v3818
        %v3847 = vpack.c.b16 %v3823, %v3819
        %v3848 = vpack.c.b16 %v3828, %v3824
        %v3849 = vpack.c.b16 %v3829, %v3825
        %v3850 = vpack.c.b16 %v3830, %v3826
        %v3851 = vpack.c.b16 %v3831, %v3827
        %v3852 = vpack.c.b16 %v3832, %v3832
        %v3853 = vpack.c.b16 %v3833, %v3833
        %v3854 = vpack.c.b16 %v3834, %v3834
        %v3855 = vpack.c.b16 %v3835, %v3835
        %v3873 = vsel %vm391, %v3852, 0
        %v3876 = vsel %vm391, %v3853, 0
        %v3879 = vsel %vm391, %v3854, 0
        %v3882 = vsel %vm391, %v3855, 0
        %3884 = vmatprep.subr.bf16.mxu0 0
        %3885 = vmatpush1.bf16.msra.mxu0 0
        %3886 = vmatprep.subr.bf16.mxu0 0
        %3887 = vmatpush1.bf16.msra.mxu0 0
        %3888 = vmatprep.subr.bf16.mxu0 0
        %3889 = vmatpush1.bf16.msra.mxu0 0
        %3890 = vmatprep.subr.bf16.mxu0 %v3876
        %3891 = vmatpush1.bf16.msra.mxu0 %v3873
        %3892 = vmatprep.subr.bf16.mxu0 %v3849
        %3893 = vmatpush1.bf16.msra.mxu0 %v3848
        %3894 = vmatprep.subr.bf16.mxu0 %v3845
        %3895 = vmatpush1.bf16.msra.mxu0 %v3844
        %3896 = vmatprep.subr.bf16.mxu0 %v3841
        %3897 = vmatpush1.bf16.msra.mxu0 %v3840
        %3898 = vmatprep.subr.bf16.mxu0 %v3837
        %3899 = vmatpush1.bf16.msra.mxu0 %v3836
        %3900 = vmatprep.subr.bf16.mxu0 0
        %3901 = vmatpush2.bf16.msra.mxu0 0
        %3902 = vmatprep.subr.bf16.mxu0 0
        %3903 = vmatpush2.bf16.msra.mxu0 0
        %3904 = vmatprep.subr.bf16.mxu0 0
        %3905 = vmatpush2.bf16.msra.mxu0 0
        %3906 = vmatprep.subr.bf16.mxu0 0
        %3907 = vmatpush2.bf16.msra.mxu0 0
        %3908 = vmatprep.subr.bf16.mxu0 0
        %3909 = vmatpush2.bf16.msra.mxu0 0
        %3910 = vmatprep.subr.bf16.mxu0 0
        %3911 = vmatpush2.bf16.msra.mxu0 0
        %3912 = vmatprep.subr.bf16.mxu0 0
        %3913 = vmatpush2.bf16.msra.mxu0 0
        %3914 = vmatprep.subr.bf16.mxu0 0
        %3915 = vmatpush2.bf16.msra.mxu0 0
        %3916 = vmatprep.mubr.bf16.mxu0 0
        %3917 = vmatmul.mubr.bf16.gmra.mxu0 %v386
        %v3918 = vpop.f32.mrf.mxu0
        %v3919 = vadd.f32 %v3765, %v3918
        %v3920 = vpop.f32.mrf.mxu0
        %v3921 = vadd.f32 %v3769, %v3920
        %v3922 = vpop.f32.mrf.mxu0
        %v3923 = vadd.f32 %v3765, %v3922
        %v3924 = vpop.f32.mrf.mxu0
        %v3925 = vadd.f32 %v3769, %v3924
        %3926 = vmatprep.mubr.bf16.mxu0 0
        %3927 = vmatmul.mubr.bf16.gmra.mxu0 %v389
        %v3928 = vpop.f32.mrf.mxu0
        %v3929 = vadd.f32 %v3765, %v3928
        %v3930 = vpop.f32.mrf.mxu0
        %v3931 = vadd.f32 %v3769, %v3930
        %v3932 = vpop.f32.mrf.mxu0
        %v3933 = vpop.f32.mrf.mxu0
        %3934 = vdwg.mxu0
        %3935 = vmatprep.subr.bf16.mxu0 0
        %3936 = vmatpush1.bf16.msra.mxu0 0
        %3937 = vmatprep.subr.bf16.mxu0 0
        %3938 = vmatpush1.bf16.msra.mxu0 0
        %3939 = vmatprep.subr.bf16.mxu0 0
        %3940 = vmatpush1.bf16.msra.mxu0 0
        %3941 = vmatprep.subr.bf16.mxu0 %v3882
        %3942 = vmatpush1.bf16.msra.mxu0 %v3879
        %3943 = vmatprep.subr.bf16.mxu0 %v3851
        %3944 = vmatpush1.bf16.msra.mxu0 %v3850
        %3945 = vmatprep.subr.bf16.mxu0 %v3847
        %3946 = vmatpush1.bf16.msra.mxu0 %v3846
        %3947 = vmatprep.subr.bf16.mxu0 %v3843
        %3948 = vmatpush1.bf16.msra.mxu0 %v3842
        %3949 = vmatprep.subr.bf16.mxu0 %v3839
        %3950 = vmatpush1.bf16.msra.mxu0 %v3838
        %3951 = vmatprep.subr.bf16.mxu0 0
        %3952 = vmatpush2.bf16.msra.mxu0 0
        %3953 = vmatprep.subr.bf16.mxu0 0
        %3954 = vmatpush2.bf16.msra.mxu0 0
        %3955 = vmatprep.subr.bf16.mxu0 0
        %3956 = vmatpush2.bf16.msra.mxu0 0
        %3957 = vmatprep.subr.bf16.mxu0 0
        %3958 = vmatpush2.bf16.msra.mxu0 0
        %3959 = vmatprep.subr.bf16.mxu0 0
        %3960 = vmatpush2.bf16.msra.mxu0 0
        %3961 = vmatprep.subr.bf16.mxu0 0
        %3962 = vmatpush2.bf16.msra.mxu0 0
        %3963 = vmatprep.subr.bf16.mxu0 0
        %3964 = vmatpush2.bf16.msra.mxu0 0
        %3965 = vmatprep.subr.bf16.mxu0 0
        %3966 = vmatpush2.bf16.msra.mxu0 0
        %3967 = vmatprep.mubr.bf16.mxu0 0
        %3968 = vmatmul.mubr.bf16.gmra.mxu0 %v386
        %v3969 = vpop.f32.mrf.mxu0
        %v3970 = vadd.f32 %v3773, %v3969
        %v3971 = vpop.f32.mrf.mxu0
        %v3972 = vadd.f32 %v3777, %v3971
        %v3973 = vpop.f32.mrf.mxu0
        %v3974 = vadd.f32 %v3773, %v3973
        %v3975 = vpop.f32.mrf.mxu0
        %v3976 = vadd.f32 %v3777, %v3975
        %3977 = vmatprep.mubr.bf16.mxu0 0
        %3978 = vmatmul.mubr.bf16.gmra.mxu0 %v389
        %v3979 = vpop.f32.mrf.mxu0
        %v3980 = vadd.f32 %v3773, %v3979
        %v3981 = vpop.f32.mrf.mxu0
        %v3982 = vadd.f32 %v3777, %v3981
        %v3983 = vpop.f32.mrf.mxu0
        %v3984 = vpop.f32.mrf.mxu0
        %3985 = vdwg.mxu0
        %v3986 = vpack.c.bf16 %v3923, %v3919
        %v3987 = vpack.c.bf16 %v3925, %v3921
        %v3988 = vpack.c.bf16 %v3974, %v3970
        %v3989 = vpack.c.bf16 %v3976, %v3972
        %v3990 = vpack.c.bf16 %v3929, %v3929
        %v3991 = vpack.c.bf16 %v3931, %v3931
        %v3992 = vpack.c.bf16 %v3980, %v3980
        %v3993 = vpack.c.bf16 %v3982, %v3982
        %v4002 = vunpack.c.l.b16 %v3986
        %v4003 = vunpack.c.l.b16 %v3987
        %v4004 = vunpack.c.l.b16 %v3988
        %v4005 = vunpack.c.l.b16 %v3989
        %v4006 = vunpack.c.h.b16 %v3986
        %v4007 = vunpack.c.h.b16 %v3987
        %v4008 = vunpack.c.h.b16 %v3988
        %v4009 = vunpack.c.h.b16 %v3989
        %v4010 = vunpack.c.l.b16 %v3990
        %v4011 = vunpack.c.l.b16 %v3991
        %v4012 = vunpack.c.l.b16 %v3992
        %v4013 = vunpack.c.l.b16 %v3993
        %v4014 = vpack.c.b16 %v4003, %v4002
        %v4015 = vpack.c.b16 %v4005, %v4004
        %v4016 = vpack.c.b16 %v4007, %v4006
        %v4017 = vpack.c.b16 %v4009, %v4008
        %v4018 = vpack.c.b16 %v4011, %v4010
        %v4019 = vpack.c.b16 %v4013, %v4012
        %4026 = vst [vmem:[%s238 + $0xc0] sm:$0xff] %v4014
        %4027 = vst [vmem:[%s238 + $0xc8] sm:$0xff] %v4015
        %4028 = vst [vmem:[%s238 + $0x1c0] sm:$0xff] %v4016
        %4029 = vst [vmem:[%s238 + $0x1c8] sm:$0xff] %v4017
        %4030 = vst [vmem:[%s238 + $0x2c0] sm:$0x11] %v4018
        %4031 = vst [vmem:[%s238 + $0x2c8] sm:$0x11] %v4019
        %v4032 = vld [vmem:[%s202 + $0xd0] sm:$0xff]
        %v4033 = vld [vmem:[%s202 + $0xd8] sm:$0xff]
        %v4034 = vld [vmem:[%s202 + $0x1d0] sm:$0xff]
        %v4035 = vld [vmem:[%s202 + $0x1d8] sm:$0xff]
        %v4036 = vld [vmem:[%s202 + $0x2d0] sm:$0xff]
        %v4037 = vld [vmem:[%s202 + $0x2d8] sm:$0xff]
        %v4038 = vld [vmem:[%s202 + $0x3d0] sm:$0xff]
        %v4039 = vld [vmem:[%s202 + $0x3d8] sm:$0xff]
        %v4040 = vld [vmem:[%s202 + $0x4d0] sm:$0xff]
        %v4041 = vld [vmem:[%s202 + $0x4d8] sm:$0xff]
        %v4042 = vld [vmem:[%s202 + $0x5d0] sm:$0xff]
        %v4043 = vld [vmem:[%s202 + $0x5d8] sm:$0xff]
        %v4044 = vld [vmem:[%s202 + $0x6d0] sm:$0xff]
        %v4045 = vld [vmem:[%s202 + $0x6d8] sm:$0xff]
        %v4046 = vld [vmem:[%s202 + $0x7d0] sm:$0xff]
        %v4047 = vld [vmem:[%s202 + $0x7d8] sm:$0xff]
        %v4048 = vld [vmem:[%s202 + $0x8d0] sm:$0xff]
        %v4049 = vld [vmem:[%s202 + $0x8d8] sm:$0xff]
        %v4050 = vld [vmem:[%s211 + $0x34] sm:$0xf]
        %v4052 = vlaneseq
        %v4053 = vshrl.u32 %v4052, 7
        %v4054 = vsub.s32 0, %v4053
        %v4055 = vrot.slane %v4050, %v4054
        %v4056 = vlaneseq
        %v4057 = vshrl.u32 %v4056, 7
        %v4058 = vsub.s32 1, %v4057
        %v4059 = vrot.slane %v4050, %v4058
        %v4060 = vlaneseq
        %v4061 = vshrl.u32 %v4060, 7
        %v4062 = vsub.s32 2, %v4061
        %v4063 = vrot.slane %v4050, %v4062
        %v4064 = vlaneseq
        %v4065 = vshrl.u32 %v4064, 7
        %v4066 = vsub.s32 3, %v4065
        %v4067 = vrot.slane %v4050, %v4066
        %v4090 = vunpack.c.l.b16 %v4032
        %v4091 = vunpack.c.h.b16 %v4032
        %v4092 = vunpack.c.l.b16 %v4033
        %v4093 = vunpack.c.h.b16 %v4033
        %v4094 = vunpack.c.l.b16 %v4034
        %v4095 = vunpack.c.h.b16 %v4034
        %v4096 = vunpack.c.l.b16 %v4035
        %v4097 = vunpack.c.h.b16 %v4035
        %v4098 = vunpack.c.l.b16 %v4036
        %v4099 = vunpack.c.h.b16 %v4036
        %v4100 = vunpack.c.l.b16 %v4037
        %v4101 = vunpack.c.h.b16 %v4037
        %v4102 = vunpack.c.l.b16 %v4038
        %v4103 = vunpack.c.h.b16 %v4038
        %v4104 = vunpack.c.l.b16 %v4039
        %v4105 = vunpack.c.h.b16 %v4039
        %v4106 = vunpack.c.l.b16 %v4040
        %v4107 = vunpack.c.h.b16 %v4040
        %v4108 = vunpack.c.l.b16 %v4041
        %v4109 = vunpack.c.h.b16 %v4041
        %v4110 = vunpack.c.l.b16 %v4042
        %v4111 = vunpack.c.h.b16 %v4042
        %v4112 = vunpack.c.l.b16 %v4043
        %v4113 = vunpack.c.h.b16 %v4043
        %v4114 = vunpack.c.l.b16 %v4044
        %v4115 = vunpack.c.h.b16 %v4044
        %v4116 = vunpack.c.l.b16 %v4045
        %v4117 = vunpack.c.h.b16 %v4045
        %v4118 = vunpack.c.l.b16 %v4046
        %v4119 = vunpack.c.h.b16 %v4046
        %v4120 = vunpack.c.l.b16 %v4047
        %v4121 = vunpack.c.h.b16 %v4047
        %v4122 = vunpack.c.l.b16 %v4048
        %v4123 = vunpack.c.h.b16 %v4048
        %v4124 = vunpack.c.l.b16 %v4049
        %v4125 = vunpack.c.h.b16 %v4049
        %v4126 = vpack.c.b16 %v4094, %v4090
        %v4127 = vpack.c.b16 %v4095, %v4091
        %v4128 = vpack.c.b16 %v4096, %v4092
        %v4129 = vpack.c.b16 %v4097, %v4093
        %v4130 = vpack.c.b16 %v4102, %v4098
        %v4131 = vpack.c.b16 %v4103, %v4099
        %v4132 = vpack.c.b16 %v4104, %v4100
        %v4133 = vpack.c.b16 %v4105, %v4101
        %v4134 = vpack.c.b16 %v4110, %v4106
        %v4135 = vpack.c.b16 %v4111, %v4107
        %v4136 = vpack.c.b16 %v4112, %v4108
        %v4137 = vpack.c.b16 %v4113, %v4109
        %v4138 = vpack.c.b16 %v4118, %v4114
        %v4139 = vpack.c.b16 %v4119, %v4115
        %v4140 = vpack.c.b16 %v4120, %v4116
        %v4141 = vpack.c.b16 %v4121, %v4117
        %v4142 = vpack.c.b16 %v4122, %v4122
        %v4143 = vpack.c.b16 %v4123, %v4123
        %v4144 = vpack.c.b16 %v4124, %v4124
        %v4145 = vpack.c.b16 %v4125, %v4125
        %v4163 = vsel %vm391, %v4142, 0
        %v4166 = vsel %vm391, %v4143, 0
        %v4169 = vsel %vm391, %v4144, 0
        %v4172 = vsel %vm391, %v4145, 0
        %4174 = vmatprep.subr.bf16.mxu0 0
        %4175 = vmatpush1.bf16.msra.mxu0 0
        %4176 = vmatprep.subr.bf16.mxu0 0
        %4177 = vmatpush1.bf16.msra.mxu0 0
        %4178 = vmatprep.subr.bf16.mxu0 0
        %4179 = vmatpush1.bf16.msra.mxu0 0
        %4180 = vmatprep.subr.bf16.mxu0 %v4166
        %4181 = vmatpush1.bf16.msra.mxu0 %v4163
        %4182 = vmatprep.subr.bf16.mxu0 %v4139
        %4183 = vmatpush1.bf16.msra.mxu0 %v4138
        %4184 = vmatprep.subr.bf16.mxu0 %v4135
        %4185 = vmatpush1.bf16.msra.mxu0 %v4134
        %4186 = vmatprep.subr.bf16.mxu0 %v4131
        %4187 = vmatpush1.bf16.msra.mxu0 %v4130
        %4188 = vmatprep.subr.bf16.mxu0 %v4127
        %4189 = vmatpush1.bf16.msra.mxu0 %v4126
        %4190 = vmatprep.subr.bf16.mxu0 0
        %4191 = vmatpush2.bf16.msra.mxu0 0
        %4192 = vmatprep.subr.bf16.mxu0 0
        %4193 = vmatpush2.bf16.msra.mxu0 0
        %4194 = vmatprep.subr.bf16.mxu0 0
        %4195 = vmatpush2.bf16.msra.mxu0 0
        %4196 = vmatprep.subr.bf16.mxu0 0
        %4197 = vmatpush2.bf16.msra.mxu0 0
        %4198 = vmatprep.subr.bf16.mxu0 0
        %4199 = vmatpush2.bf16.msra.mxu0 0
        %4200 = vmatprep.subr.bf16.mxu0 0
        %4201 = vmatpush2.bf16.msra.mxu0 0
        %4202 = vmatprep.subr.bf16.mxu0 0
        %4203 = vmatpush2.bf16.msra.mxu0 0
        %4204 = vmatprep.subr.bf16.mxu0 0
        %4205 = vmatpush2.bf16.msra.mxu0 0
        %4206 = vmatprep.mubr.bf16.mxu0 0
        %4207 = vmatmul.mubr.bf16.gmra.mxu0 %v386
        %v4208 = vpop.f32.mrf.mxu0
        %v4209 = vadd.f32 %v4055, %v4208
        %v4210 = vpop.f32.mrf.mxu0
        %v4211 = vadd.f32 %v4059, %v4210
        %v4212 = vpop.f32.mrf.mxu0
        %v4213 = vadd.f32 %v4055, %v4212
        %v4214 = vpop.f32.mrf.mxu0
        %v4215 = vadd.f32 %v4059, %v4214
        %4216 = vmatprep.mubr.bf16.mxu0 0
        %4217 = vmatmul.mubr.bf16.gmra.mxu0 %v389
        %v4218 = vpop.f32.mrf.mxu0
        %v4219 = vadd.f32 %v4055, %v4218
        %v4220 = vpop.f32.mrf.mxu0
        %v4221 = vadd.f32 %v4059, %v4220
        %v4222 = vpop.f32.mrf.mxu0
        %v4223 = vpop.f32.mrf.mxu0
        %4224 = vdwg.mxu0
        %4225 = vmatprep.subr.bf16.mxu0 0
        %4226 = vmatpush1.bf16.msra.mxu0 0
        %4227 = vmatprep.subr.bf16.mxu0 0
        %4228 = vmatpush1.bf16.msra.mxu0 0
        %4229 = vmatprep.subr.bf16.mxu0 0
        %4230 = vmatpush1.bf16.msra.mxu0 0
        %4231 = vmatprep.subr.bf16.mxu0 %v4172
        %4232 = vmatpush1.bf16.msra.mxu0 %v4169
        %4233 = vmatprep.subr.bf16.mxu0 %v4141
        %4234 = vmatpush1.bf16.msra.mxu0 %v4140
        %4235 = vmatprep.subr.bf16.mxu0 %v4137
        %4236 = vmatpush1.bf16.msra.mxu0 %v4136
        %4237 = vmatprep.subr.bf16.mxu0 %v4133
        %4238 = vmatpush1.bf16.msra.mxu0 %v4132
        %4239 = vmatprep.subr.bf16.mxu0 %v4129
        %4240 = vmatpush1.bf16.msra.mxu0 %v4128
        %4241 = vmatprep.subr.bf16.mxu0 0
        %4242 = vmatpush2.bf16.msra.mxu0 0
        %4243 = vmatprep.subr.bf16.mxu0 0
        %4244 = vmatpush2.bf16.msra.mxu0 0
        %4245 = vmatprep.subr.bf16.mxu0 0
        %4246 = vmatpush2.bf16.msra.mxu0 0
        %4247 = vmatprep.subr.bf16.mxu0 0
        %4248 = vmatpush2.bf16.msra.mxu0 0
        %4249 = vmatprep.subr.bf16.mxu0 0
        %4250 = vmatpush2.bf16.msra.mxu0 0
        %4251 = vmatprep.subr.bf16.mxu0 0
        %4252 = vmatpush2.bf16.msra.mxu0 0
        %4253 = vmatprep.subr.bf16.mxu0 0
        %4254 = vmatpush2.bf16.msra.mxu0 0
        %4255 = vmatprep.subr.bf16.mxu0 0
        %4256 = vmatpush2.bf16.msra.mxu0 0
        %4257 = vmatprep.mubr.bf16.mxu0 0
        %4258 = vmatmul.mubr.bf16.gmra.mxu0 %v386
        %v4259 = vpop.f32.mrf.mxu0
        %v4260 = vadd.f32 %v4063, %v4259
        %v4261 = vpop.f32.mrf.mxu0
        %v4262 = vadd.f32 %v4067, %v4261
        %v4263 = vpop.f32.mrf.mxu0
        %v4264 = vadd.f32 %v4063, %v4263
        %v4265 = vpop.f32.mrf.mxu0
        %v4266 = vadd.f32 %v4067, %v4265
        %4267 = vmatprep.mubr.bf16.mxu0 0
        %4268 = vmatmul.mubr.bf16.gmra.mxu0 %v389
        %v4269 = vpop.f32.mrf.mxu0
        %v4270 = vadd.f32 %v4063, %v4269
        %v4271 = vpop.f32.mrf.mxu0
        %v4272 = vadd.f32 %v4067, %v4271
        %v4273 = vpop.f32.mrf.mxu0
        %v4274 = vpop.f32.mrf.mxu0
        %4275 = vdwg.mxu0
        %v4276 = vpack.c.bf16 %v4213, %v4209
        %v4277 = vpack.c.bf16 %v4215, %v4211
        %v4278 = vpack.c.bf16 %v4264, %v4260
        %v4279 = vpack.c.bf16 %v4266, %v4262
        %v4280 = vpack.c.bf16 %v4219, %v4219
        %v4281 = vpack.c.bf16 %v4221, %v4221
        %v4282 = vpack.c.bf16 %v4270, %v4270
        %v4283 = vpack.c.bf16 %v4272, %v4272
        %v4292 = vunpack.c.l.b16 %v4276
        %v4293 = vunpack.c.l.b16 %v4277
        %v4294 = vunpack.c.l.b16 %v4278
        %v4295 = vunpack.c.l.b16 %v4279
        %v4296 = vunpack.c.h.b16 %v4276
        %v4297 = vunpack.c.h.b16 %v4277
        %v4298 = vunpack.c.h.b16 %v4278
        %v4299 = vunpack.c.h.b16 %v4279
        %v4300 = vunpack.c.l.b16 %v4280
        %v4301 = vunpack.c.l.b16 %v4281
        %v4302 = vunpack.c.l.b16 %v4282
        %v4303 = vunpack.c.l.b16 %v4283
        %v4304 = vpack.c.b16 %v4293, %v4292
        %v4305 = vpack.c.b16 %v4295, %v4294
        %v4306 = vpack.c.b16 %v4297, %v4296
        %v4307 = vpack.c.b16 %v4299, %v4298
        %v4308 = vpack.c.b16 %v4301, %v4300
        %v4309 = vpack.c.b16 %v4303, %v4302
        %4316 = vst [vmem:[%s238 + $0xd0] sm:$0xff] %v4304
        %4317 = vst [vmem:[%s238 + $0xd8] sm:$0xff] %v4305
        %4318 = vst [vmem:[%s238 + $0x1d0] sm:$0xff] %v4306
        %4319 = vst [vmem:[%s238 + $0x1d8] sm:$0xff] %v4307
        %4320 = vst [vmem:[%s238 + $0x2d0] sm:$0x11] %v4308
        %4321 = vst [vmem:[%s238 + $0x2d8] sm:$0x11] %v4309
        %v4322 = vld [vmem:[%s202 + $0xe0] sm:$0xff]
        %v4323 = vld [vmem:[%s202 + $0xe8] sm:$0xff]
        %v4324 = vld [vmem:[%s202 + $0x1e0] sm:$0xff]
        %v4325 = vld [vmem:[%s202 + $0x1e8] sm:$0xff]
        %v4326 = vld [vmem:[%s202 + $0x2e0] sm:$0xff]
        %v4327 = vld [vmem:[%s202 + $0x2e8] sm:$0xff]
        %v4328 = vld [vmem:[%s202 + $0x3e0] sm:$0xff]
        %v4329 = vld [vmem:[%s202 + $0x3e8] sm:$0xff]
        %v4330 = vld [vmem:[%s202 + $0x4e0] sm:$0xff]
        %v4331 = vld [vmem:[%s202 + $0x4e8] sm:$0xff]
        %v4332 = vld [vmem:[%s202 + $0x5e0] sm:$0xff]
        %v4333 = vld [vmem:[%s202 + $0x5e8] sm:$0xff]
        %v4334 = vld [vmem:[%s202 + $0x6e0] sm:$0xff]
        %v4335 = vld [vmem:[%s202 + $0x6e8] sm:$0xff]
        %v4336 = vld [vmem:[%s202 + $0x7e0] sm:$0xff]
        %v4337 = vld [vmem:[%s202 + $0x7e8] sm:$0xff]
        %v4338 = vld [vmem:[%s202 + $0x8e0] sm:$0xff]
        %v4339 = vld [vmem:[%s202 + $0x8e8] sm:$0xff]
        %v4340 = vld [vmem:[%s211 + $0x38] sm:$0xf]
        %v4342 = vlaneseq
        %v4343 = vshrl.u32 %v4342, 7
        %v4344 = vsub.s32 0, %v4343
        %v4345 = vrot.slane %v4340, %v4344
        %v4346 = vlaneseq
        %v4347 = vshrl.u32 %v4346, 7
        %v4348 = vsub.s32 1, %v4347
        %v4349 = vrot.slane %v4340, %v4348
        %v4350 = vlaneseq
        %v4351 = vshrl.u32 %v4350, 7
        %v4352 = vsub.s32 2, %v4351
        %v4353 = vrot.slane %v4340, %v4352
        %v4354 = vlaneseq
        %v4355 = vshrl.u32 %v4354, 7
        %v4356 = vsub.s32 3, %v4355
        %v4357 = vrot.slane %v4340, %v4356
        %v4380 = vunpack.c.l.b16 %v4322
        %v4381 = vunpack.c.h.b16 %v4322
        %v4382 = vunpack.c.l.b16 %v4323
        %v4383 = vunpack.c.h.b16 %v4323
        %v4384 = vunpack.c.l.b16 %v4324
        %v4385 = vunpack.c.h.b16 %v4324
        %v4386 = vunpack.c.l.b16 %v4325
        %v4387 = vunpack.c.h.b16 %v4325
        %v4388 = vunpack.c.l.b16 %v4326
        %v4389 = vunpack.c.h.b16 %v4326
        %v4390 = vunpack.c.l.b16 %v4327
        %v4391 = vunpack.c.h.b16 %v4327
        %v4392 = vunpack.c.l.b16 %v4328
        %v4393 = vunpack.c.h.b16 %v4328
        %v4394 = vunpack.c.l.b16 %v4329
        %v4395 = vunpack.c.h.b16 %v4329
        %v4396 = vunpack.c.l.b16 %v4330
        %v4397 = vunpack.c.h.b16 %v4330
        %v4398 = vunpack.c.l.b16 %v4331
        %v4399 = vunpack.c.h.b16 %v4331
        %v4400 = vunpack.c.l.b16 %v4332
        %v4401 = vunpack.c.h.b16 %v4332
        %v4402 = vunpack.c.l.b16 %v4333
        %v4403 = vunpack.c.h.b16 %v4333
        %v4404 = vunpack.c.l.b16 %v4334
        %v4405 = vunpack.c.h.b16 %v4334
        %v4406 = vunpack.c.l.b16 %v4335
        %v4407 = vunpack.c.h.b16 %v4335
        %v4408 = vunpack.c.l.b16 %v4336
        %v4409 = vunpack.c.h.b16 %v4336
        %v4410 = vunpack.c.l.b16 %v4337
        %v4411 = vunpack.c.h.b16 %v4337
        %v4412 = vunpack.c.l.b16 %v4338
        %v4413 = vunpack.c.h.b16 %v4338
        %v4414 = vunpack.c.l.b16 %v4339
        %v4415 = vunpack.c.h.b16 %v4339
        %v4416 = vpack.c.b16 %v4384, %v4380
        %v4417 = vpack.c.b16 %v4385, %v4381
        %v4418 = vpack.c.b16 %v4386, %v4382
        %v4419 = vpack.c.b16 %v4387, %v4383
        %v4420 = vpack.c.b16 %v4392, %v4388
        %v4421 = vpack.c.b16 %v4393, %v4389
        %v4422 = vpack.c.b16 %v4394, %v4390
        %v4423 = vpack.c.b16 %v4395, %v4391
        %v4424 = vpack.c.b16 %v4400, %v4396
        %v4425 = vpack.c.b16 %v4401, %v4397
        %v4426 = vpack.c.b16 %v4402, %v4398
        %v4427 = vpack.c.b16 %v4403, %v4399
        %v4428 = vpack.c.b16 %v4408, %v4404
        %v4429 = vpack.c.b16 %v4409, %v4405
        %v4430 = vpack.c.b16 %v4410, %v4406
        %v4431 = vpack.c.b16 %v4411, %v4407
        %v4432 = vpack.c.b16 %v4412, %v4412
        %v4433 = vpack.c.b16 %v4413, %v4413
        %v4434 = vpack.c.b16 %v4414, %v4414
        %v4435 = vpack.c.b16 %v4415, %v4415
        %v4453 = vsel %vm391, %v4432, 0
        %v4456 = vsel %vm391, %v4433, 0
        %v4459 = vsel %vm391, %v4434, 0
        %v4462 = vsel %vm391, %v4435, 0
        %4464 = vmatprep.subr.bf16.mxu0 0
        %4465 = vmatpush1.bf16.msra.mxu0 0
        %4466 = vmatprep.subr.bf16.mxu0 0
        %4467 = vmatpush1.bf16.msra.mxu0 0
        %4468 = vmatprep.subr.bf16.mxu0 0
        %4469 = vmatpush1.bf16.msra.mxu0 0
        %4470 = vmatprep.subr.bf16.mxu0 %v4456
        %4471 = vmatpush1.bf16.msra.mxu0 %v4453
        %4472 = vmatprep.subr.bf16.mxu0 %v4429
        %4473 = vmatpush1.bf16.msra.mxu0 %v4428
        %4474 = vmatprep.subr.bf16.mxu0 %v4425
        %4475 = vmatpush1.bf16.msra.mxu0 %v4424
        %4476 = vmatprep.subr.bf16.mxu0 %v4421
        %4477 = vmatpush1.bf16.msra.mxu0 %v4420
        %4478 = vmatprep.subr.bf16.mxu0 %v4417
        %4479 = vmatpush1.bf16.msra.mxu0 %v4416
        %4480 = vmatprep.subr.bf16.mxu0 0
        %4481 = vmatpush2.bf16.msra.mxu0 0
        %4482 = vmatprep.subr.bf16.mxu0 0
        %4483 = vmatpush2.bf16.msra.mxu0 0
        %4484 = vmatprep.subr.bf16.mxu0 0
        %4485 = vmatpush2.bf16.msra.mxu0 0
        %4486 = vmatprep.subr.bf16.mxu0 0
        %4487 = vmatpush2.bf16.msra.mxu0 0
        %4488 = vmatprep.subr.bf16.mxu0 0
        %4489 = vmatpush2.bf16.msra.mxu0 0
        %4490 = vmatprep.subr.bf16.mxu0 0
        %4491 = vmatpush2.bf16.msra.mxu0 0
        %4492 = vmatprep.subr.bf16.mxu0 0
        %4493 = vmatpush2.bf16.msra.mxu0 0
        %4494 = vmatprep.subr.bf16.mxu0 0
        %4495 = vmatpush2.bf16.msra.mxu0 0
        %4496 = vmatprep.mubr.bf16.mxu0 0
        %4497 = vmatmul.mubr.bf16.gmra.mxu0 %v386
        %v4498 = vpop.f32.mrf.mxu0
        %v4499 = vadd.f32 %v4345, %v4498
        %v4500 = vpop.f32.mrf.mxu0
        %v4501 = vadd.f32 %v4349, %v4500
        %v4502 = vpop.f32.mrf.mxu0
        %v4503 = vadd.f32 %v4345, %v4502
        %v4504 = vpop.f32.mrf.mxu0
        %v4505 = vadd.f32 %v4349, %v4504
        %4506 = vmatprep.mubr.bf16.mxu0 0
        %4507 = vmatmul.mubr.bf16.gmra.mxu0 %v389
        %v4508 = vpop.f32.mrf.mxu0
        %v4509 = vadd.f32 %v4345, %v4508
        %v4510 = vpop.f32.mrf.mxu0
        %v4511 = vadd.f32 %v4349, %v4510
        %v4512 = vpop.f32.mrf.mxu0
        %v4513 = vpop.f32.mrf.mxu0
        %4514 = vdwg.mxu0
        %4515 = vmatprep.subr.bf16.mxu0 0
        %4516 = vmatpush1.bf16.msra.mxu0 0
        %4517 = vmatprep.subr.bf16.mxu0 0
        %4518 = vmatpush1.bf16.msra.mxu0 0
        %4519 = vmatprep.subr.bf16.mxu0 0
        %4520 = vmatpush1.bf16.msra.mxu0 0
        %4521 = vmatprep.subr.bf16.mxu0 %v4462
        %4522 = vmatpush1.bf16.msra.mxu0 %v4459
        %4523 = vmatprep.subr.bf16.mxu0 %v4431
        %4524 = vmatpush1.bf16.msra.mxu0 %v4430
        %4525 = vmatprep.subr.bf16.mxu0 %v4427
        %4526 = vmatpush1.bf16.msra.mxu0 %v4426
        %4527 = vmatprep.subr.bf16.mxu0 %v4423
        %4528 = vmatpush1.bf16.msra.mxu0 %v4422
        %4529 = vmatprep.subr.bf16.mxu0 %v4419
        %4530 = vmatpush1.bf16.msra.mxu0 %v4418
        %4531 = vmatprep.subr.bf16.mxu0 0
        %4532 = vmatpush2.bf16.msra.mxu0 0
        %4533 = vmatprep.subr.bf16.mxu0 0
        %4534 = vmatpush2.bf16.msra.mxu0 0
        %4535 = vmatprep.subr.bf16.mxu0 0
        %4536 = vmatpush2.bf16.msra.mxu0 0
        %4537 = vmatprep.subr.bf16.mxu0 0
        %4538 = vmatpush2.bf16.msra.mxu0 0
        %4539 = vmatprep.subr.bf16.mxu0 0
        %4540 = vmatpush2.bf16.msra.mxu0 0
        %4541 = vmatprep.subr.bf16.mxu0 0
        %4542 = vmatpush2.bf16.msra.mxu0 0
        %4543 = vmatprep.subr.bf16.mxu0 0
        %4544 = vmatpush2.bf16.msra.mxu0 0
        %4545 = vmatprep.subr.bf16.mxu0 0
        %4546 = vmatpush2.bf16.msra.mxu0 0
        %4547 = vmatprep.mubr.bf16.mxu0 0
        %4548 = vmatmul.mubr.bf16.gmra.mxu0 %v386
        %v4549 = vpop.f32.mrf.mxu0
        %v4550 = vadd.f32 %v4353, %v4549
        %v4551 = vpop.f32.mrf.mxu0
        %v4552 = vadd.f32 %v4357, %v4551
        %v4553 = vpop.f32.mrf.mxu0
        %v4554 = vadd.f32 %v4353, %v4553
        %v4555 = vpop.f32.mrf.mxu0
        %v4556 = vadd.f32 %v4357, %v4555
        %4557 = vmatprep.mubr.bf16.mxu0 0
        %4558 = vmatmul.mubr.bf16.gmra.mxu0 %v389
        %v4559 = vpop.f32.mrf.mxu0
        %v4560 = vadd.f32 %v4353, %v4559
        %v4561 = vpop.f32.mrf.mxu0
        %v4562 = vadd.f32 %v4357, %v4561
        %v4563 = vpop.f32.mrf.mxu0
        %v4564 = vpop.f32.mrf.mxu0
        %4565 = vdwg.mxu0
        %v4566 = vpack.c.bf16 %v4503, %v4499
        %v4567 = vpack.c.bf16 %v4505, %v4501
        %v4568 = vpack.c.bf16 %v4554, %v4550
        %v4569 = vpack.c.bf16 %v4556, %v4552
        %v4570 = vpack.c.bf16 %v4509, %v4509
        %v4571 = vpack.c.bf16 %v4511, %v4511
        %v4572 = vpack.c.bf16 %v4560, %v4560
        %v4573 = vpack.c.bf16 %v4562, %v4562
        %v4582 = vunpack.c.l.b16 %v4566
        %v4583 = vunpack.c.l.b16 %v4567
        %v4584 = vunpack.c.l.b16 %v4568
        %v4585 = vunpack.c.l.b16 %v4569
        %v4586 = vunpack.c.h.b16 %v4566
        %v4587 = vunpack.c.h.b16 %v4567
        %v4588 = vunpack.c.h.b16 %v4568
        %v4589 = vunpack.c.h.b16 %v4569
        %v4590 = vunpack.c.l.b16 %v4570
        %v4591 = vunpack.c.l.b16 %v4571
        %v4592 = vunpack.c.l.b16 %v4572
        %v4593 = vunpack.c.l.b16 %v4573
        %v4594 = vpack.c.b16 %v4583, %v4582
        %v4595 = vpack.c.b16 %v4585, %v4584
        %v4596 = vpack.c.b16 %v4587, %v4586
        %v4597 = vpack.c.b16 %v4589, %v4588
        %v4598 = vpack.c.b16 %v4591, %v4590
        %v4599 = vpack.c.b16 %v4593, %v4592
        %4606 = vst [vmem:[%s238 + $0xe0] sm:$0xff] %v4594
        %4607 = vst [vmem:[%s238 + $0xe8] sm:$0xff] %v4595
        %4608 = vst [vmem:[%s238 + $0x1e0] sm:$0xff] %v4596
        %4609 = vst [vmem:[%s238 + $0x1e8] sm:$0xff] %v4597
        %4610 = vst [vmem:[%s238 + $0x2e0] sm:$0x11] %v4598
        %4611 = vst [vmem:[%s238 + $0x2e8] sm:$0x11] %v4599
        %v4612 = vld [vmem:[%s202 + $0xf0] sm:$0xff]
        %v4613 = vld [vmem:[%s202 + $0xf8] sm:$0xff]
        %v4614 = vld [vmem:[%s202 + $0x1f0] sm:$0xff]
        %v4615 = vld [vmem:[%s202 + $0x1f8] sm:$0xff]
        %v4616 = vld [vmem:[%s202 + $0x2f0] sm:$0xff]
        %v4617 = vld [vmem:[%s202 + $0x2f8] sm:$0xff]
        %v4618 = vld [vmem:[%s202 + $0x3f0] sm:$0xff]
        %v4619 = vld [vmem:[%s202 + $0x3f8] sm:$0xff]
        %v4620 = vld [vmem:[%s202 + $0x4f0] sm:$0xff]
        %v4621 = vld [vmem:[%s202 + $0x4f8] sm:$0xff]
        %v4622 = vld [vmem:[%s202 + $0x5f0] sm:$0xff]
        %v4623 = vld [vmem:[%s202 + $0x5f8] sm:$0xff]
        %v4624 = vld [vmem:[%s202 + $0x6f0] sm:$0xff]
        %v4625 = vld [vmem:[%s202 + $0x6f8] sm:$0xff]
        %v4626 = vld [vmem:[%s202 + $0x7f0] sm:$0xff]
        %v4627 = vld [vmem:[%s202 + $0x7f8] sm:$0xff]
        %v4628 = vld [vmem:[%s202 + $0x8f0] sm:$0xff]
        %v4629 = vld [vmem:[%s202 + $0x8f8] sm:$0xff]
        %v4630 = vld [vmem:[%s211 + $0x3c] sm:$0xf]
        %v4632 = vlaneseq
        %v4633 = vshrl.u32 %v4632, 7
        %v4634 = vsub.s32 0, %v4633
        %v4635 = vrot.slane %v4630, %v4634
        %v4636 = vlaneseq
        %v4637 = vshrl.u32 %v4636, 7
        %v4638 = vsub.s32 1, %v4637
        %v4639 = vrot.slane %v4630, %v4638
        %v4640 = vlaneseq
        %v4641 = vshrl.u32 %v4640, 7
        %v4642 = vsub.s32 2, %v4641
        %v4643 = vrot.slane %v4630, %v4642
        %v4644 = vlaneseq
        %v4645 = vshrl.u32 %v4644, 7
        %v4646 = vsub.s32 3, %v4645
        %v4647 = vrot.slane %v4630, %v4646
        %v4670 = vunpack.c.l.b16 %v4612
        %v4671 = vunpack.c.h.b16 %v4612
        %v4672 = vunpack.c.l.b16 %v4613
        %v4673 = vunpack.c.h.b16 %v4613
        %v4674 = vunpack.c.l.b16 %v4614
        %v4675 = vunpack.c.h.b16 %v4614
        %v4676 = vunpack.c.l.b16 %v4615
        %v4677 = vunpack.c.h.b16 %v4615
        %v4678 = vunpack.c.l.b16 %v4616
        %v4679 = vunpack.c.h.b16 %v4616
        %v4680 = vunpack.c.l.b16 %v4617
        %v4681 = vunpack.c.h.b16 %v4617
        %v4682 = vunpack.c.l.b16 %v4618
        %v4683 = vunpack.c.h.b16 %v4618
        %v4684 = vunpack.c.l.b16 %v4619
        %v4685 = vunpack.c.h.b16 %v4619
        %v4686 = vunpack.c.l.b16 %v4620
        %v4687 = vunpack.c.h.b16 %v4620
        %v4688 = vunpack.c.l.b16 %v4621
        %v4689 = vunpack.c.h.b16 %v4621
        %v4690 = vunpack.c.l.b16 %v4622
        %v4691 = vunpack.c.h.b16 %v4622
        %v4692 = vunpack.c.l.b16 %v4623
        %v4693 = vunpack.c.h.b16 %v4623
        %v4694 = vunpack.c.l.b16 %v4624
        %v4695 = vunpack.c.h.b16 %v4624
        %v4696 = vunpack.c.l.b16 %v4625
        %v4697 = vunpack.c.h.b16 %v4625
        %v4698 = vunpack.c.l.b16 %v4626
        %v4699 = vunpack.c.h.b16 %v4626
        %v4700 = vunpack.c.l.b16 %v4627
        %v4701 = vunpack.c.h.b16 %v4627
        %v4702 = vunpack.c.l.b16 %v4628
        %v4703 = vunpack.c.h.b16 %v4628
        %v4704 = vunpack.c.l.b16 %v4629
        %v4705 = vunpack.c.h.b16 %v4629
        %v4706 = vpack.c.b16 %v4674, %v4670
        %v4707 = vpack.c.b16 %v4675, %v4671
        %v4708 = vpack.c.b16 %v4676, %v4672
        %v4709 = vpack.c.b16 %v4677, %v4673
        %v4710 = vpack.c.b16 %v4682, %v4678
        %v4711 = vpack.c.b16 %v4683, %v4679
        %v4712 = vpack.c.b16 %v4684, %v4680
        %v4713 = vpack.c.b16 %v4685, %v4681
        %v4714 = vpack.c.b16 %v4690, %v4686
        %v4715 = vpack.c.b16 %v4691, %v4687
        %v4716 = vpack.c.b16 %v4692, %v4688
        %v4717 = vpack.c.b16 %v4693, %v4689
        %v4718 = vpack.c.b16 %v4698, %v4694
        %v4719 = vpack.c.b16 %v4699, %v4695
        %v4720 = vpack.c.b16 %v4700, %v4696
        %v4721 = vpack.c.b16 %v4701, %v4697
        %v4722 = vpack.c.b16 %v4702, %v4702
        %v4723 = vpack.c.b16 %v4703, %v4703
        %v4724 = vpack.c.b16 %v4704, %v4704
        %v4725 = vpack.c.b16 %v4705, %v4705
        %v4743 = vsel %vm391, %v4722, 0
        %v4746 = vsel %vm391, %v4723, 0
        %v4749 = vsel %vm391, %v4724, 0
        %v4752 = vsel %vm391, %v4725, 0
        %4754 = vmatprep.subr.bf16.mxu0 0
        %4755 = vmatpush1.bf16.msra.mxu0 0
        %4756 = vmatprep.subr.bf16.mxu0 0
        %4757 = vmatpush1.bf16.msra.mxu0 0
        %4758 = vmatprep.subr.bf16.mxu0 0
        %4759 = vmatpush1.bf16.msra.mxu0 0
        %4760 = vmatprep.subr.bf16.mxu0 %v4746
        %4761 = vmatpush1.bf16.msra.mxu0 %v4743
        %4762 = vmatprep.subr.bf16.mxu0 %v4719
        %4763 = vmatpush1.bf16.msra.mxu0 %v4718
        %4764 = vmatprep.subr.bf16.mxu0 %v4715
        %4765 = vmatpush1.bf16.msra.mxu0 %v4714
        %4766 = vmatprep.subr.bf16.mxu0 %v4711
        %4767 = vmatpush1.bf16.msra.mxu0 %v4710
        %4768 = vmatprep.subr.bf16.mxu0 %v4707
        %4769 = vmatpush1.bf16.msra.mxu0 %v4706
        %4770 = vmatprep.subr.bf16.mxu0 0
        %4771 = vmatpush2.bf16.msra.mxu0 0
        %4772 = vmatprep.subr.bf16.mxu0 0
        %4773 = vmatpush2.bf16.msra.mxu0 0
        %4774 = vmatprep.subr.bf16.mxu0 0
        %4775 = vmatpush2.bf16.msra.mxu0 0
        %4776 = vmatprep.subr.bf16.mxu0 0
        %4777 = vmatpush2.bf16.msra.mxu0 0
        %4778 = vmatprep.subr.bf16.mxu0 0
        %4779 = vmatpush2.bf16.msra.mxu0 0
        %4780 = vmatprep.subr.bf16.mxu0 0
        %4781 = vmatpush2.bf16.msra.mxu0 0
        %4782 = vmatprep.subr.bf16.mxu0 0
        %4783 = vmatpush2.bf16.msra.mxu0 0
        %4784 = vmatprep.subr.bf16.mxu0 0
        %4785 = vmatpush2.bf16.msra.mxu0 0
        %4786 = vmatprep.mubr.bf16.mxu0 0
        %4787 = vmatmul.mubr.bf16.gmra.mxu0 %v386
        %v4788 = vpop.f32.mrf.mxu0
        %v4789 = vadd.f32 %v4635, %v4788
        %v4790 = vpop.f32.mrf.mxu0
        %v4791 = vadd.f32 %v4639, %v4790
        %v4792 = vpop.f32.mrf.mxu0
        %v4793 = vadd.f32 %v4635, %v4792
        %v4794 = vpop.f32.mrf.mxu0
        %v4795 = vadd.f32 %v4639, %v4794
        %4796 = vmatprep.mubr.bf16.mxu0 0
        %4797 = vmatmul.mubr.bf16.gmra.mxu0 %v389
        %v4798 = vpop.f32.mrf.mxu0
        %v4799 = vadd.f32 %v4635, %v4798
        %v4800 = vpop.f32.mrf.mxu0
        %v4801 = vadd.f32 %v4639, %v4800
        %v4802 = vpop.f32.mrf.mxu0
        %v4803 = vpop.f32.mrf.mxu0
        %4804 = vdwg.mxu0
        %4805 = vmatprep.subr.bf16.mxu0 0
        %4806 = vmatpush1.bf16.msra.mxu0 0
        %4807 = vmatprep.subr.bf16.mxu0 0
        %4808 = vmatpush1.bf16.msra.mxu0 0
        %4809 = vmatprep.subr.bf16.mxu0 0
        %4810 = vmatpush1.bf16.msra.mxu0 0
        %4811 = vmatprep.subr.bf16.mxu0 %v4752
        %4812 = vmatpush1.bf16.msra.mxu0 %v4749
        %4813 = vmatprep.subr.bf16.mxu0 %v4721
        %4814 = vmatpush1.bf16.msra.mxu0 %v4720
        %4815 = vmatprep.subr.bf16.mxu0 %v4717
        %4816 = vmatpush1.bf16.msra.mxu0 %v4716
        %4817 = vmatprep.subr.bf16.mxu0 %v4713
        %4818 = vmatpush1.bf16.msra.mxu0 %v4712
        %4819 = vmatprep.subr.bf16.mxu0 %v4709
        %4820 = vmatpush1.bf16.msra.mxu0 %v4708
        %4821 = vmatprep.subr.bf16.mxu0 0
        %4822 = vmatpush2.bf16.msra.mxu0 0
        %4823 = vmatprep.subr.bf16.mxu0 0
        %4824 = vmatpush2.bf16.msra.mxu0 0
        %4825 = vmatprep.subr.bf16.mxu0 0
        %4826 = vmatpush2.bf16.msra.mxu0 0
        %4827 = vmatprep.subr.bf16.mxu0 0
        %4828 = vmatpush2.bf16.msra.mxu0 0
        %4829 = vmatprep.subr.bf16.mxu0 0
        %4830 = vmatpush2.bf16.msra.mxu0 0
        %4831 = vmatprep.subr.bf16.mxu0 0
        %4832 = vmatpush2.bf16.msra.mxu0 0
        %4833 = vmatprep.subr.bf16.mxu0 0
        %4834 = vmatpush2.bf16.msra.mxu0 0
        %4835 = vmatprep.subr.bf16.mxu0 0
        %4836 = vmatpush2.bf16.msra.mxu0 0
        %4837 = vmatprep.mubr.bf16.mxu0 0
        %4838 = vmatmul.mubr.bf16.gmra.mxu0 %v386
        %v4839 = vpop.f32.mrf.mxu0
        %v4840 = vadd.f32 %v4643, %v4839
        %v4841 = vpop.f32.mrf.mxu0
        %v4842 = vadd.f32 %v4647, %v4841
        %v4843 = vpop.f32.mrf.mxu0
        %v4844 = vadd.f32 %v4643, %v4843
        %v4845 = vpop.f32.mrf.mxu0
        %v4846 = vadd.f32 %v4647, %v4845
        %4847 = vmatprep.mubr.bf16.mxu0 0
        %4848 = vmatmul.mubr.bf16.gmra.mxu0 %v389
        %v4849 = vpop.f32.mrf.mxu0
        %v4850 = vadd.f32 %v4643, %v4849
        %v4851 = vpop.f32.mrf.mxu0
        %v4852 = vadd.f32 %v4647, %v4851
        %v4853 = vpop.f32.mrf.mxu0
        %v4854 = vpop.f32.mrf.mxu0
        %4855 = vdwg.mxu0
        %v4856 = vpack.c.bf16 %v4793, %v4789
        %v4857 = vpack.c.bf16 %v4795, %v4791
        %v4858 = vpack.c.bf16 %v4844, %v4840
        %v4859 = vpack.c.bf16 %v4846, %v4842
        %v4860 = vpack.c.bf16 %v4799, %v4799
        %v4861 = vpack.c.bf16 %v4801, %v4801
        %v4862 = vpack.c.bf16 %v4850, %v4850
        %v4863 = vpack.c.bf16 %v4852, %v4852
        %v4872 = vunpack.c.l.b16 %v4856
        %v4873 = vunpack.c.l.b16 %v4857
        %v4874 = vunpack.c.l.b16 %v4858
        %v4875 = vunpack.c.l.b16 %v4859
        %v4876 = vunpack.c.h.b16 %v4856
        %v4877 = vunpack.c.h.b16 %v4857
        %v4878 = vunpack.c.h.b16 %v4858
        %v4879 = vunpack.c.h.b16 %v4859
        %v4880 = vunpack.c.l.b16 %v4860
        %v4881 = vunpack.c.l.b16 %v4861
        %v4882 = vunpack.c.l.b16 %v4862
        %v4883 = vunpack.c.l.b16 %v4863
        %v4884 = vpack.c.b16 %v4873, %v4872
        %v4885 = vpack.c.b16 %v4875, %v4874
        %v4886 = vpack.c.b16 %v4877, %v4876
        %v4887 = vpack.c.b16 %v4879, %v4878
        %v4888 = vpack.c.b16 %v4881, %v4880
        %v4889 = vpack.c.b16 %v4883, %v4882
        %4896 = vst [vmem:[%s238 + $0xf0] sm:$0xff] %v4884
        %4897 = vst [vmem:[%s238 + $0xf8] sm:$0xff] %v4885
        %4898 = vst [vmem:[%s238 + $0x1f0] sm:$0xff] %v4886
        %4899 = vst [vmem:[%s238 + $0x1f8] sm:$0xff] %v4887
        %4900 = vst [vmem:[%s238 + $0x2f0] sm:$0x11] %v4888
        %4901 = vst [vmem:[%s238 + $0x2f8] sm:$0x11] %v4889
        %s4902 = sand.u32 %s102, 1
        %s4903 = scalar_lea.sflag [#allocation4], %s4902
        %s4904 = sand.u32 %s102, 1
        %s4905 = smul.addr %s4904, 768
        %s4906 = scalar_lea.vmem [#allocation8], %s4905
        // Predicated region
        $region45: #{tpu_custom_call.1} parent=31 // pred_check
          %p4907 = pneg %p112
        $region46: #{tpu_custom_call.1} parent=31 // pred_check_branch
          %4909 = sbr.rel (%p4907) target = $region48
        $region47: #{tpu_custom_call.1} parent=31 // pred_region
          %s4910 = smul.u32 64, %s21
          %s4912 = ssub.s32 12288, 12288
          %4913 = vsyncadd %s4903, %s4912
          %s4914 = smul.addr %s4910, 64
          %s4915 = scalar_lea.hbm %s3, %s4914
          %s4916 = sshll.u32 %s4906, 4
          %s4917 = int_to_ptr.vmem [resolvable:$true] %s4916
          %4922 = dma.vmem_to_hbm [thread:$0]  %s4917, 12288, %s4915, %s4903, 4096, 32768, 256
        $region48: #{tpu_custom_call.1} parent=31 // pred_fallthru
          _
      $region32: #{tpu_custom_call.1} parent=5 // pred_fallthru
        _
      %p4923 = scmp.le.s32.totalorder 2, %s16
      // Predicated region
      $region49: #{tpu_custom_call.1} parent=5 // pred_check
        %p4924 = pneg %p4923
      $region50: #{tpu_custom_call.1} parent=5 // pred_check_branch
        %4926 = sbr.rel (%p4924) target = $region52
      $region51: #{tpu_custom_call.1} parent=5 // pred_region
        %s4927 = ssub.s32 %s16, 2
        // Predicated region
        $region53: #{tpu_custom_call.1} parent=51 // pred_check
          %p4928 = pneg %p118
        $region54: #{tpu_custom_call.1} parent=51 // pred_check_branch
          %4930 = sbr.rel (%p4928) target = $region56
        $region55: #{tpu_custom_call.1} parent=51 // pred_region
          %s4931 = sand.u32 %s103, 1
          %s4932 = scalar_lea.sflag [#allocation4], %s4931
          %s4933 = sand.u32 %s103, 1
          %s4934 = smul.addr %s4933, 768
          %s4935 = scalar_lea.vmem [#allocation8], %s4934
          %4936 = dma.done %s4932, 12288
        $region56: #{tpu_custom_call.1} parent=51 // pred_fallthru
          _
      $region52: #{tpu_custom_call.1} parent=5 // pred_fallthru
        _
    $region6: #{tpu_custom_call.1} parent=1 // loop_footer
      %s20 = sadd.s32 1, %s16
    $region7: #{tpu_custom_call.1} parent=1 // loop_footer_branch
      %15 = sbr.rel target = $region3
    $region8: #{tpu_custom_call.1} parent=1 // loop_exit
      _
    %4937 = vsyncpa [#allocation3], 1
    %s4938 = scalar_lea.sflag [#allocation3], 1
    %4939 = vsyncpa %s4938, 1
    %4940 = vsyncpa [#allocation6], 1
    %s4941 = scalar_lea.sflag [#allocation6], 1
    %4942 = vsyncpa %s4941, 1
    %4943 = vsyncpa [#allocation4], 1
    %s4944 = scalar_lea.sflag [#allocation4], 1
    %4945 = vsyncpa %s4944, 1

</llo_original>
